<compile_context>
chip_gen: v6e
topology: v6e:2x2x1
jax: 0.10.0
libtpu: 0.0.40
codegen_flags: <defaults>
</compile_context>

<pallas_src>
import jax
import jax.numpy as jnp
from jax.experimental import pallas as pl
from jax.experimental.pallas import tpu as pltpu

# ----- configuration (mirrors the args consumed by EgoRNNED.__init__) --------
B = 2          # batch_size
SEG = 8        # segment_len
EGO_DIM = 3    # ego_dim == pred_dim (ego motion is 3-dof)
EMBED = 32     # ego_embed_size  (-> input_embed_size)
ENC_H = 32     # ego_enc_size    (-> enc_hidden_size)
DEC_H = 32     # ego_dec_size    (-> dec_hidden_size); must equal ENC_H (h handoff)
PRED_IN = 32   # ego_pred_input_size (-> predictor_input_size)
PRED_T = 8     # pred_timesteps
REC_W = 3 * DEC_H + PRED_IN   # fused decoder recurrent RHS width = 128 (one lane tile)


# ----- the Pallas kernel: whole forward in one invocation ----------------------
def _ego_rnn_ed_kernel(
    x_ref,                          # (SEG*B, EGO_DIM)   row i*B+b = segment i, batch b
    w_emb_ref, b_emb_ref,           # (EGO_DIM, EMBED) bf16, (1, EMBED) f32
    enc_wih_ref, enc_whh_ref,       # (EMBED, 3H) bf16, (H, 3H) bf16   gates fused r|z|n
    enc_bi_ref, enc_bhn_ref,        # (1, 3H) f32 [bih+bhh for r,z | bih_n], (1, H)=bhh_n
    dec_rec_w_ref,                  # (H, 3H+PRED_IN) bf16 = [dec_Whh | W_h2pi]
    dec_wih_pad_ref,                # (3H+PRED_IN, 3H) bf16, rows 0:3H are exact zeros
    dec_bi_ref, dec_bhn_ref,        # (1, 3H) f32, (1, H) f32
    b_h2pi_pad_ref,                 # (1, 3H+PRED_IN) f32, b_h2pi in the last PRED_IN cols
    w_h2p_ref, b_h2p_ref,           # (H, EGO_DIM) bf16, (1, EGO_DIM) f32
    out_ref,                        # (SEG*B, PRED_T*EGO_DIM) f32
    h_scr,                          # VMEM scratch (SEG*B, H) f32
):
    H = ENC_H
    H2 = 2 * H
    H3 = 3 * H

    def dot16(a, b):
        # bf16 operands -> single MXU pass; accumulate in f32.
        return jnp.dot(a.astype(jnp.bfloat16), b.astype(jnp.bfloat16),
                       preferred_element_type=jnp.float32)

    def gru_gates(gi, gh, h, bhn):
        """PyTorch GRUCell gate math. gi already carries the fused r/z biases and bih_n;
        bhn (= bhh_n) stays inside r*(.)  r/z sigmoids merged into one EUP call."""
        rz = jax.nn.sigmoid(gi[:, :H2] + gh[:, :H2])
        r = rz[:, :H]
        z = rz[:, H:]
        n = jnp.tanh(gi[:, H2:H3] + r * (gh[:, H2:H3] + bhn))
        return (1.0 - z) * n + z * h

    # ---- ego_embed: Linear(3, EMBED) + ReLU, batched over every segment step ----
    emb_all = jnp.maximum(dot16(x_ref[...], w_emb_ref[...]) + b_emb_ref[...], 0.0)

    # ---- encoder GRU: x@Wih has no recurrence -> hoist it out of the loop --------
    gi_all = dot16(emb_all, enc_wih_ref[...]) + enc_bi_ref[...]      # (SEG*B, 3H)

    enc_whh = enc_whh_ref[...]
    enc_bhn = enc_bhn_ref[...]
    h = jnp.zeros((B, H), jnp.float32)
    for i in range(SEG):                                             # static unroll
        gh = dot16(h, enc_whh)                                       # only recurrent dot
        h = gru_gates(gi_all[i * B:(i + 1) * B, :], gh, h, enc_bhn)
        h_scr[i * B:(i + 1) * B, :] = h                              # no 8-way concat

    # ---- decoder GRU: rollout is independent per segment -> batch across them ----
    hd = h_scr[...]                                                  # (SEG*B, H)
    w_rec = dec_rec_w_ref[...]                                       # (H, 128) [Whh | W_h2pi]
    dec_wih_pad = dec_wih_pad_ref[...]                               # (128, 3H), top rows zero
    dec_bi = dec_bi_ref[...]
    dec_bhn = dec_bhn_ref[...]
    b_pi_pad = b_h2pi_pad_ref[...]
    w_h2p = w_h2p_ref[...]
    b_h2p = b_h2p_ref[...]

    for t in range(PRED_T):                                          # static unroll
        # One fused dot gives gate pre-acts (cols 0:3H) AND the pred-input
        # pre-activation of the previous hidden (cols 3H:).
        fused = dot16(hd, w_rec)                                     # (SEG*B, 128)
        if t == 0:
            gi = dec_bi                                              # pred_inputs == 0
        else:
            # relu over the full 128 lanes; the gate columns hit zero weight rows,
            # so no slice/rotate is needed before the gi dot.
            pred_full = jnp.maximum(fused + b_pi_pad, 0.0)
            gi = dot16(pred_full, dec_wih_pad) + dec_bi
        hd = gru_gates(gi, fused, hd, dec_bhn)
        # 3-wide output head: off the recurrent chain, stored directly per step.
        out_ref[:, t * EGO_DIM:(t + 1) * EGO_DIM] = dot16(hd, w_h2p) + b_h2p


# ----- wrapper: weight fusion + layout plumbing --------------------------------
def _fuse_gru_params(wih, whh, bih, bhh):
    """(3,in,H)/(3,H,H)/(3,1,H) -> (in,3H),(H,3H),(1,3H),(1,H); gate order r,z,n kept."""
    in_size, hidden = wih.shape[1], wih.shape[2]
    wih_f = jnp.transpose(wih, (1, 0, 2)).reshape(in_size, 3 * hidden)
    whh_f = jnp.transpose(whh, (1, 0, 2)).reshape(hidden, 3 * hidden)
    bi_f = jnp.concatenate([bih[0] + bhh[0], bih[1] + bhh[1], bih[2]], axis=1)  # (1, 3H)
    bhn = bhh[2]                                                                # (1, H)
    return wih_f, whh_f, bi_f, bhn


def ego_rnn_ed_forward(ego_x, params):
    """ego_x: (B, segment_len, 3) -> predictions: (B, segment_len, pred_timesteps, 3)."""
    (w_emb, b_emb, enc_wih, enc_whh, enc_bih, enc_bhh,
     dec_wih, dec_whh, dec_bih, dec_bhh,
     w_h2pi, b_h2pi, w_h2p, b_h2p) = params

    Bsz, T, D = ego_x.shape
    # (B, SEG, 3) -> (SEG*B, 3); row i*B + b = segment i, batch b
    x_flat = jnp.transpose(ego_x, (1, 0, 2)).reshape(T * Bsz, D).astype(jnp.float32)

    enc_wih_f, enc_whh_f, enc_bi, enc_bhn = _fuse_gru_params(enc_wih, enc_whh, enc_bih, enc_bhh)
    dec_wih_f, dec_whh_f, dec_bi, dec_bhn = _fuse_gru_params(dec_wih, dec_whh, dec_bih, dec_bhh)

    # Decoder recurrent fused RHS: [Whh (r|z|n) | W_h2pi] -> (H, 128), exactly one lane tile.
    w_dec_rec = jnp.concatenate([dec_whh_f, w_h2pi], axis=1)
    # Zero-padded dec Wih: rows [0:3H] are exact zeros (so relu'd gate columns can't
    # leak into the gate pre-activations); rows [3H:] hold the real Wih.
    dec_wih_pad = jnp.zeros((REC_W, 3 * DEC_H), jnp.float32).at[3 * DEC_H:, :].set(dec_wih_f)
    b_h2pi_pad = jnp.zeros((1, REC_W), jnp.float32).at[:, 3 * DEC_H:].set(b_h2pi)

    bf = lambda a: a.astype(jnp.bfloat16)   # matmul operands only; biases/acc stay f32
    kernel_args = (x_flat,
                   bf(w_emb), b_emb,
                   bf(enc_wih_f), bf(enc_whh_f), enc_bi, enc_bhn,
                   bf(w_dec_rec), bf(dec_wih_pad), dec_bi, dec_bhn, b_h2pi_pad,
                   bf(w_h2p), b_h2p)

    def full_spec(p):
        nd = p.ndim
        return pl.BlockSpec(p.shape, lambda i, _nd=nd: (0,) * _nd)

    out_flat = pl.pallas_call(
        _ego_rnn_ed_kernel,
        out_shape=jax.ShapeDtypeStruct((T * Bsz, PRED_T * EGO_DIM), jnp.float32),
        grid=(1,),
        in_specs=[full_spec(a) for a in kernel_args],
        out_specs=pl.BlockSpec((T * Bsz, PRED_T * EGO_DIM), lambda i: (0, 0)),
        scratch_shapes=[pltpu.VMEM((T * Bsz, ENC_H), jnp.float32)],
        compiler_params=pltpu.CompilerParams(dimension_semantics=("arbitrary",)),
    )(*kernel_args)

    out = out_flat.reshape(T, Bsz, PRED_T, EGO_DIM)
    return jnp.transpose(out, (1, 0, 2, 3))                     # (B, SEG, PRED_T, 3)


# ----- deterministic parameter initialization ----------------------------------
def init_params(key):
    ks = jax.random.split(key, 4)

    def linear(k, fan_in, fan_out):
        bound = 1.0 / jnp.sqrt(float(fan_in))
        kw, kb = jax.random.split(k)
        w = jax.random.uniform(kw, (fan_in, fan_out), jnp.float32, -bound, bound)
        b = jax.random.uniform(kb, (1, fan_out), jnp.float32, -bound, bound)
        return w, b

    def gru(k, in_size, hidden):
        bound = 1.0 / jnp.sqrt(float(hidden))
        k1, k2, k3, k4 = jax.random.split(k, 4)
        wih = jax.random.uniform(k1, (3, in_size, hidden), jnp.float32, -bound, bound)
        whh = jax.random.uniform(k2, (3, hidden, hidden), jnp.float32, -bound, bound)
        bih = jax.random.uniform(k3, (3, 1, hidden), jnp.float32, -bound, bound)
        bhh = jax.random.uniform(k4, (3, 1, hidden), jnp.float32, -bound, bound)
        return wih, whh, bih, bhh

    w_emb, b_emb = linear(ks[0], EGO_DIM, EMBED)                     # ego_embed
    enc_wih, enc_whh, enc_bih, enc_bhh = gru(ks[1], EMBED, ENC_H)    # encoder GRUCell
    dec_wih, dec_whh, dec_bih, dec_bhh = gru(ks[2], PRED_IN, DEC_H)  # decoder GRUCell
    k_h2pi, k_h2p = jax.random.split(ks[3])
    w_h2pi, b_h2pi = linear(k_h2pi, DEC_H, PRED_IN)                  # hidden_to_pred_input
    w_h2p, b_h2p = linear(k_h2p, DEC_H, EGO_DIM)                     # hidden_to_pred

    return (w_emb, b_emb, enc_wih, enc_whh, enc_bih, enc_bhh,
            dec_wih, dec_whh, dec_bih, dec_bhh,
            w_h2pi, b_h2pi, w_h2p, b_h2p)


# ----- pure-JAX reference (mirrors the PyTorch forward, full f32) ---------------
def reference_forward(ego_x, params):
    (w_emb, b_emb, enc_wih, enc_whh, enc_bih, enc_bhh,
     dec_wih, dec_whh, dec_bih, dec_bhh, w_h2pi, b_h2pi, w_h2p, b_h2p) = params

    def gru(x, h, wih, whh, bih, bhh):
        r = jax.nn.sigmoid(x @ wih[0] + bih[0] + h @ whh[0] + bhh[0])
        z = jax.nn.sigmoid(x @ wih[1] + bih[1] + h @ whh[1] + bhh[1])
        n = jnp.tanh(x @ wih[2] + bih[2] + r * (h @ whh[2] + bhh[2]))
        return (1.0 - z) * n + z * h

    Bsz, T, _ = ego_x.shape
    emb = jnp.maximum(ego_x @ w_emb + b_emb, 0.0)
    h = jnp.zeros((Bsz, ENC_H), jnp.float32)
    per_seg = []
    for i in range(T):
        h = gru(emb[:, i, :], h, enc_wih, enc_whh, enc_bih, enc_bhh)
        hd = h
        pi = jnp.zeros((Bsz, PRED_IN), jnp.float32)
        outs = []
        for t in range(PRED_T):
            hd = gru(pi, hd, dec_wih, dec_whh, dec_bih, dec_bhh)
            pi = jnp.maximum(hd @ w_h2pi + b_h2pi, 0.0)
            outs.append(hd @ w_h2p + b_h2p)
        per_seg.append(jnp.stack(outs, axis=1))
    return jnp.stack(per_seg, axis=1)


if __name__ == "__main__":
    key = jax.random.PRNGKey(0)
    kx, kp = jax.random.split(key)
    ego_x = jax.random.normal(kx, (B, SEG, EGO_DIM), jnp.float32)
    params = init_params(kp)

    out = jax.jit(ego_rnn_ed_forward)(ego_x, params)
    out = jax.block_until_ready(out)

    assert out.shape == (B, SEG, PRED_T, EGO_DIM), out.shape
    ref = reference_forward(ego_x, params)
    max_err = float(jnp.max(jnp.abs(out - ref)))
    # Tolerance accounts for bf16 MXU operands (f32 accumulation / gate math) vs. the
    # exact-f32 reference; observed drift is well below this bound at these scales.
    assert max_err < 2e-2, f"mismatch vs reference: {max_err}"

    print("KERNEL_OK")
</pallas_src>

<mosaic_0001>
module attributes {stable_mosaic.version = 11 : i64} {
  func.func @_ego_rnn_ed_kernel(%arg0: i32, %arg1: memref<16x3xf32, #tpu.memory_space<vmem>>, %arg2: memref<3x32xbf16, #tpu.memory_space<vmem>>, %arg3: memref<1x32xf32, #tpu.memory_space<vmem>>, %arg4: memref<32x96xbf16, #tpu.memory_space<vmem>>, %arg5: memref<32x96xbf16, #tpu.memory_space<vmem>>, %arg6: memref<1x96xf32, #tpu.memory_space<vmem>>, %arg7: memref<1x32xf32, #tpu.memory_space<vmem>>, %arg8: memref<32x128xbf16, #tpu.memory_space<vmem>>, %arg9: memref<128x96xbf16, #tpu.memory_space<vmem>>, %arg10: memref<1x96xf32, #tpu.memory_space<vmem>>, %arg11: memref<1x32xf32, #tpu.memory_space<vmem>>, %arg12: memref<1x128xf32, #tpu.memory_space<vmem>>, %arg13: memref<32x3xbf16, #tpu.memory_space<vmem>>, %arg14: memref<1x3xf32, #tpu.memory_space<vmem>>, %arg15: memref<16x24xf32, #tpu.memory_space<vmem>>, %arg16: memref<16x32xf32, #tpu.memory_space<vmem>>) attributes {dimension_semantics = [#tpu.dimension_semantics<arbitrary>], iteration_bounds = array<i64: 1>, scalar_prefetch = 0 : i64, scratch_operands = 1 : i64, tpu.core_type = #tpu.core_type<tc>, window_params = [{pipeline_mode = #tpu.pipeline_mode<synchronous>, transform_indices = @transform_0, window_bounds = array<i64: 16, 3>}, {pipeline_mode = #tpu.pipeline_mode<synchronous>, transform_indices = @transform_1, window_bounds = array<i64: 3, 32>}, {pipeline_mode = #tpu.pipeline_mode<synchronous>, transform_indices = @transform_2, window_bounds = array<i64: 1, 32>}, {pipeline_mode = #tpu.pipeline_mode<synchronous>, transform_indices = @transform_3, window_bounds = array<i64: 32, 96>}, {pipeline_mode = #tpu.pipeline_mode<synchronous>, transform_indices = @transform_4, window_bounds = array<i64: 32, 96>}, {pipeline_mode = #tpu.pipeline_mode<synchronous>, transform_indices = @transform_5, window_bounds = array<i64: 1, 96>}, {pipeline_mode = #tpu.pipeline_mode<synchronous>, transform_indices = @transform_6, window_bounds = array<i64: 1, 32>}, {pipeline_mode = #tpu.pipeline_mode<synchronous>, transform_indices = @transform_7, window_bounds = array<i64: 32, 128>}, {pipeline_mode = #tpu.pipeline_mode<synchronous>, transform_indices = @transform_8, window_bounds = array<i64: 128, 96>}, {pipeline_mode = #tpu.pipeline_mode<synchronous>, transform_indices = @transform_9, window_bounds = array<i64: 1, 96>}, {pipeline_mode = #tpu.pipeline_mode<synchronous>, transform_indices = @transform_10, window_bounds = array<i64: 1, 32>}, {pipeline_mode = #tpu.pipeline_mode<synchronous>, transform_indices = @transform_11, window_bounds = array<i64: 1, 128>}, {pipeline_mode = #tpu.pipeline_mode<synchronous>, transform_indices = @transform_12, window_bounds = array<i64: 32, 3>}, {pipeline_mode = #tpu.pipeline_mode<synchronous>, transform_indices = @transform_13, window_bounds = array<i64: 1, 3>}, {pipeline_mode = #tpu.pipeline_mode<synchronous>, transform_indices = @transform_14, window_bounds = array<i64: 16, 24>}]} {
    %c0 = arith.constant 0 : index
    %c0_0 = arith.constant 0 : index
    %0 = vector.load %arg1[%c0, %c0_0] : memref<16x3xf32, #tpu.memory_space<vmem>>, vector<16x3xf32>
    %c0_1 = arith.constant 0 : index
    %c0_2 = arith.constant 0 : index
    %1 = vector.load %arg2[%c0_1, %c0_2] : memref<3x32xbf16, #tpu.memory_space<vmem>>, vector<3x32xbf16>
    %2 = arith.truncf %0 : vector<16x3xf32> to vector<16x3xbf16>
    %cst = arith.constant dense<0.000000e+00> : vector<16x32xf32>
    %3 = tpu.matmul %2, %1, %cst {dimension_numbers = #tpu.dot_dimension_numbers<[1], [0], [0], [1], [0, 0, 1, 1], [], []>} : vector<16x3xbf16>, vector<3x32xbf16>, vector<16x32xf32> -> vector<16x32xf32>
    %c0_3 = arith.constant 0 : index
    %c0_4 = arith.constant 0 : index
    %4 = vector.load %arg3[%c0_3, %c0_4] : memref<1x32xf32, #tpu.memory_space<vmem>>, vector<1x32xf32>
    %5 = vector.broadcast %4 : vector<1x32xf32> to vector<16x32xf32>
    %6 = arith.addf %3, %5 : vector<16x32xf32>
    %cst_5 = arith.constant 0.000000e+00 : f32
    %7 = vector.broadcast %cst_5 : f32 to vector<16x32xf32>
    %8 = arith.maximumf %6, %7 : vector<16x32xf32>
    %c0_6 = arith.constant 0 : index
    %c0_7 = arith.constant 0 : index
    %9 = vector.load %arg4[%c0_6, %c0_7] : memref<32x96xbf16, #tpu.memory_space<vmem>>, vector<32x96xbf16>
    %10 = arith.truncf %8 : vector<16x32xf32> to vector<16x32xbf16>
    %cst_8 = arith.constant dense<0.000000e+00> : vector<16x96xf32>
    %11 = tpu.matmul %10, %9, %cst_8 {dimension_numbers = #tpu.dot_dimension_numbers<[1], [0], [0], [1], [0, 0, 1, 1], [], []>} : vector<16x32xbf16>, vector<32x96xbf16>, vector<16x96xf32> -> vector<16x96xf32>
    %c0_9 = arith.constant 0 : index
    %c0_10 = arith.constant 0 : index
    %12 = vector.load %arg6[%c0_9, %c0_10] : memref<1x96xf32, #tpu.memory_space<vmem>>, vector<1x96xf32>
    %13 = vector.broadcast %12 : vector<1x96xf32> to vector<16x96xf32>
    %14 = arith.addf %11, %13 : vector<16x96xf32>
    %c0_11 = arith.constant 0 : index
    %c0_12 = arith.constant 0 : index
    %15 = vector.load %arg5[%c0_11, %c0_12] : memref<32x96xbf16, #tpu.memory_space<vmem>>, vector<32x96xbf16>
    %c0_13 = arith.constant 0 : index
    %c0_14 = arith.constant 0 : index
    %16 = vector.load %arg7[%c0_13, %c0_14] : memref<1x32xf32, #tpu.memory_space<vmem>>, vector<1x32xf32>
    %cst_15 = arith.constant 0.000000e+00 : f32
    %17 = vector.broadcast %cst_15 : f32 to vector<2x32xf32>
    %18 = arith.truncf %17 : vector<2x32xf32> to vector<2x32xbf16>
    %cst_16 = arith.constant dense<0.000000e+00> : vector<2x96xf32>
    %19 = tpu.matmul %18, %15, %cst_16 {dimension_numbers = #tpu.dot_dimension_numbers<[1], [0], [0], [1], [0, 0, 1, 1], [], []>} : vector<2x32xbf16>, vector<32x96xbf16>, vector<2x96xf32> -> vector<2x96xf32>
    %20 = vector.extract_strided_slice %14 {offsets = [0, 0], sizes = [2, 96], strides = [1, 1]} : vector<16x96xf32> to vector<2x96xf32>
    %21 = vector.extract_strided_slice %20 {offsets = [0, 0], sizes = [2, 64], strides = [1, 1]} : vector<2x96xf32> to vector<2x64xf32>
    %22 = vector.extract_strided_slice %19 {offsets = [0, 0], sizes = [2, 64], strides = [1, 1]} : vector<2x96xf32> to vector<2x64xf32>
    %23 = arith.addf %21, %22 : vector<2x64xf32>
    %24 = arith.negf %23 : vector<2x64xf32>
    %25 = math.exp %24 : vector<2x64xf32>
    %cst_17 = arith.constant 1.000000e+00 : f32
    %26 = vector.broadcast %cst_17 : f32 to vector<2x64xf32>
    %27 = arith.addf %26, %25 : vector<2x64xf32>
    %28 = arith.divf %26, %27 : vector<2x64xf32>
    %29 = vector.extract_strided_slice %28 {offsets = [0, 0], sizes = [2, 32], strides = [1, 1]} : vector<2x64xf32> to vector<2x32xf32>
    %30 = vector.extract_strided_slice %28 {offsets = [0, 32], sizes = [2, 32], strides = [1, 1]} : vector<2x64xf32> to vector<2x32xf32>
    %31 = vector.extract_strided_slice %20 {offsets = [0, 64], sizes = [2, 32], strides = [1, 1]} : vector<2x96xf32> to vector<2x32xf32>
    %32 = vector.extract_strided_slice %19 {offsets = [0, 64], sizes = [2, 32], strides = [1, 1]} : vector<2x96xf32> to vector<2x32xf32>
    %33 = vector.broadcast %16 : vector<1x32xf32> to vector<2x32xf32>
    %34 = arith.addf %32, %33 : vector<2x32xf32>
    %35 = arith.mulf %29, %34 : vector<2x32xf32>
    %36 = arith.addf %31, %35 : vector<2x32xf32>
    %37 = math.tanh %36 : vector<2x32xf32>
    %cst_18 = arith.constant 1.000000e+00 : f32
    %38 = vector.broadcast %cst_18 : f32 to vector<2x32xf32>
    %39 = arith.subf %38, %30 : vector<2x32xf32>
    %40 = arith.mulf %39, %37 : vector<2x32xf32>
    %41 = arith.mulf %30, %17 : vector<2x32xf32>
    %42 = arith.addf %40, %41 : vector<2x32xf32>
    %c0_19 = arith.constant 0 : index
    %c0_20 = arith.constant 0 : index
    %43 = vector.load %arg16[%c0_19, %c0_20] : memref<16x32xf32, #tpu.memory_space<vmem>>, vector<2x32xf32>
    tpu.vector_store %arg16[%c0_19, %c0_20], %42 {strides = array<i32>} : memref<16x32xf32, #tpu.memory_space<vmem>>, vector<2x32xf32>,
    %44 = arith.truncf %42 : vector<2x32xf32> to vector<2x32xbf16>
    %cst_21 = arith.constant dense<0.000000e+00> : vector<2x96xf32>
    %45 = tpu.matmul %44, %15, %cst_21 {dimension_numbers = #tpu.dot_dimension_numbers<[1], [0], [0], [1], [0, 0, 1, 1], [], []>} : vector<2x32xbf16>, vector<32x96xbf16>, vector<2x96xf32> -> vector<2x96xf32>
    %46 = vector.extract_strided_slice %14 {offsets = [2, 0], sizes = [2, 96], strides = [1, 1]} : vector<16x96xf32> to vector<2x96xf32>
    %47 = vector.extract_strided_slice %46 {offsets = [0, 0], sizes = [2, 64], strides = [1, 1]} : vector<2x96xf32> to vector<2x64xf32>
    %48 = vector.extract_strided_slice %45 {offsets = [0, 0], sizes = [2, 64], strides = [1, 1]} : vector<2x96xf32> to vector<2x64xf32>
    %49 = arith.addf %47, %48 : vector<2x64xf32>
    %50 = arith.negf %49 : vector<2x64xf32>
    %51 = math.exp %50 : vector<2x64xf32>
    %cst_22 = arith.constant 1.000000e+00 : f32
    %52 = vector.broadcast %cst_22 : f32 to vector<2x64xf32>
    %53 = arith.addf %52, %51 : vector<2x64xf32>
    %54 = arith.divf %52, %53 : vector<2x64xf32>
    %55 = vector.extract_strided_slice %54 {offsets = [0, 0], sizes = [2, 32], strides = [1, 1]} : vector<2x64xf32> to vector<2x32xf32>
    %56 = vector.extract_strided_slice %54 {offsets = [0, 32], sizes = [2, 32], strides = [1, 1]} : vector<2x64xf32> to vector<2x32xf32>
    %57 = vector.extract_strided_slice %46 {offsets = [0, 64], sizes = [2, 32], strides = [1, 1]} : vector<2x96xf32> to vector<2x32xf32>
    %58 = vector.extract_strided_slice %45 {offsets = [0, 64], sizes = [2, 32], strides = [1, 1]} : vector<2x96xf32> to vector<2x32xf32>
    %59 = vector.broadcast %16 : vector<1x32xf32> to vector<2x32xf32>
    %60 = arith.addf %58, %59 : vector<2x32xf32>
    %61 = arith.mulf %55, %60 : vector<2x32xf32>
    %62 = arith.addf %57, %61 : vector<2x32xf32>
    %63 = math.tanh %62 : vector<2x32xf32>
    %cst_23 = arith.constant 1.000000e+00 : f32
    %64 = vector.broadcast %cst_23 : f32 to vector<2x32xf32>
    %65 = arith.subf %64, %56 : vector<2x32xf32>
    %66 = arith.mulf %65, %63 : vector<2x32xf32>
    %67 = arith.mulf %56, %42 : vector<2x32xf32>
    %68 = arith.addf %66, %67 : vector<2x32xf32>
    %c2 = arith.constant 2 : index
    %c0_24 = arith.constant 0 : index
    %69 = vector.load %arg16[%c2, %c0_24] : memref<16x32xf32, #tpu.memory_space<vmem>>, vector<2x32xf32>
    tpu.vector_store %arg16[%c2, %c0_24], %68 {strides = array<i32>} : memref<16x32xf32, #tpu.memory_space<vmem>>, vector<2x32xf32>,
    %70 = arith.truncf %68 : vector<2x32xf32> to vector<2x32xbf16>
    %cst_25 = arith.constant dense<0.000000e+00> : vector<2x96xf32>
    %71 = tpu.matmul %70, %15, %cst_25 {dimension_numbers = #tpu.dot_dimension_numbers<[1], [0], [0], [1], [0, 0, 1, 1], [], []>} : vector<2x32xbf16>, vector<32x96xbf16>, vector<2x96xf32> -> vector<2x96xf32>
    %72 = vector.extract_strided_slice %14 {offsets = [4, 0], sizes = [2, 96], strides = [1, 1]} : vector<16x96xf32> to vector<2x96xf32>
    %73 = vector.extract_strided_slice %72 {offsets = [0, 0], sizes = [2, 64], strides = [1, 1]} : vector<2x96xf32> to vector<2x64xf32>
    %74 = vector.extract_strided_slice %71 {offsets = [0, 0], sizes = [2, 64], strides = [1, 1]} : vector<2x96xf32> to vector<2x64xf32>
    %75 = arith.addf %73, %74 : vector<2x64xf32>
    %76 = arith.negf %75 : vector<2x64xf32>
    %77 = math.exp %76 : vector<2x64xf32>
    %cst_26 = arith.constant 1.000000e+00 : f32
    %78 = vector.broadcast %cst_26 : f32 to vector<2x64xf32>
    %79 = arith.addf %78, %77 : vector<2x64xf32>
    %80 = arith.divf %78, %79 : vector<2x64xf32>
    %81 = vector.extract_strided_slice %80 {offsets = [0, 0], sizes = [2, 32], strides = [1, 1]} : vector<2x64xf32> to vector<2x32xf32>
    %82 = vector.extract_strided_slice %80 {offsets = [0, 32], sizes = [2, 32], strides = [1, 1]} : vector<2x64xf32> to vector<2x32xf32>
    %83 = vector.extract_strided_slice %72 {offsets = [0, 64], sizes = [2, 32], strides = [1, 1]} : vector<2x96xf32> to vector<2x32xf32>
    %84 = vector.extract_strided_slice %71 {offsets = [0, 64], sizes = [2, 32], strides = [1, 1]} : vector<2x96xf32> to vector<2x32xf32>
    %85 = vector.broadcast %16 : vector<1x32xf32> to vector<2x32xf32>
    %86 = arith.addf %84, %85 : vector<2x32xf32>
    %87 = arith.mulf %81, %86 : vector<2x32xf32>
    %88 = arith.addf %83, %87 : vector<2x32xf32>
    %89 = math.tanh %88 : vector<2x32xf32>
    %cst_27 = arith.constant 1.000000e+00 : f32
    %90 = vector.broadcast %cst_27 : f32 to vector<2x32xf32>
    %91 = arith.subf %90, %82 : vector<2x32xf32>
    %92 = arith.mulf %91, %89 : vector<2x32xf32>
    %93 = arith.mulf %82, %68 : vector<2x32xf32>
    %94 = arith.addf %92, %93 : vector<2x32xf32>
    %c4 = arith.constant 4 : index
    %c0_28 = arith.constant 0 : index
    %95 = vector.load %arg16[%c4, %c0_28] : memref<16x32xf32, #tpu.memory_space<vmem>>, vector<2x32xf32>
    tpu.vector_store %arg16[%c4, %c0_28], %94 {strides = array<i32>} : memref<16x32xf32, #tpu.memory_space<vmem>>, vector<2x32xf32>,
    %96 = arith.truncf %94 : vector<2x32xf32> to vector<2x32xbf16>
    %cst_29 = arith.constant dense<0.000000e+00> : vector<2x96xf32>
    %97 = tpu.matmul %96, %15, %cst_29 {dimension_numbers = #tpu.dot_dimension_numbers<[1], [0], [0], [1], [0, 0, 1, 1], [], []>} : vector<2x32xbf16>, vector<32x96xbf16>, vector<2x96xf32> -> vector<2x96xf32>
    %98 = vector.extract_strided_slice %14 {offsets = [6, 0], sizes = [2, 96], strides = [1, 1]} : vector<16x96xf32> to vector<2x96xf32>
    %99 = vector.extract_strided_slice %98 {offsets = [0, 0], sizes = [2, 64], strides = [1, 1]} : vector<2x96xf32> to vector<2x64xf32>
    %100 = vector.extract_strided_slice %97 {offsets = [0, 0], sizes = [2, 64], strides = [1, 1]} : vector<2x96xf32> to vector<2x64xf32>
    %101 = arith.addf %99, %100 : vector<2x64xf32>
    %102 = arith.negf %101 : vector<2x64xf32>
    %103 = math.exp %102 : vector<2x64xf32>
    %cst_30 = arith.constant 1.000000e+00 : f32
    %104 = vector.broadcast %cst_30 : f32 to vector<2x64xf32>
    %105 = arith.addf %104, %103 : vector<2x64xf32>
    %106 = arith.divf %104, %105 : vector<2x64xf32>
    %107 = vector.extract_strided_slice %106 {offsets = [0, 0], sizes = [2, 32], strides = [1, 1]} : vector<2x64xf32> to vector<2x32xf32>
    %108 = vector.extract_strided_slice %106 {offsets = [0, 32], sizes = [2, 32], strides = [1, 1]} : vector<2x64xf32> to vector<2x32xf32>
    %109 = vector.extract_strided_slice %98 {offsets = [0, 64], sizes = [2, 32], strides = [1, 1]} : vector<2x96xf32> to vector<2x32xf32>
    %110 = vector.extract_strided_slice %97 {offsets = [0, 64], sizes = [2, 32], strides = [1, 1]} : vector<2x96xf32> to vector<2x32xf32>
    %111 = vector.broadcast %16 : vector<1x32xf32> to vector<2x32xf32>
    %112 = arith.addf %110, %111 : vector<2x32xf32>
    %113 = arith.mulf %107, %112 : vector<2x32xf32>
    %114 = arith.addf %109, %113 : vector<2x32xf32>
    %115 = math.tanh %114 : vector<2x32xf32>
    %cst_31 = arith.constant 1.000000e+00 : f32
    %116 = vector.broadcast %cst_31 : f32 to vector<2x32xf32>
    %117 = arith.subf %116, %108 : vector<2x32xf32>
    %118 = arith.mulf %117, %115 : vector<2x32xf32>
    %119 = arith.mulf %108, %94 : vector<2x32xf32>
    %120 = arith.addf %118, %119 : vector<2x32xf32>
    %c6 = arith.constant 6 : index
    %c0_32 = arith.constant 0 : index
    %121 = vector.load %arg16[%c6, %c0_32] : memref<16x32xf32, #tpu.memory_space<vmem>>, vector<2x32xf32>
    tpu.vector_store %arg16[%c6, %c0_32], %120 {strides = array<i32>} : memref<16x32xf32, #tpu.memory_space<vmem>>, vector<2x32xf32>,
    %122 = arith.truncf %120 : vector<2x32xf32> to vector<2x32xbf16>
    %cst_33 = arith.constant dense<0.000000e+00> : vector<2x96xf32>
    %123 = tpu.matmul %122, %15, %cst_33 {dimension_numbers = #tpu.dot_dimension_numbers<[1], [0], [0], [1], [0, 0, 1, 1], [], []>} : vector<2x32xbf16>, vector<32x96xbf16>, vector<2x96xf32> -> vector<2x96xf32>
    %124 = vector.extract_strided_slice %14 {offsets = [8, 0], sizes = [2, 96], strides = [1, 1]} : vector<16x96xf32> to vector<2x96xf32>
    %125 = vector.extract_strided_slice %124 {offsets = [0, 0], sizes = [2, 64], strides = [1, 1]} : vector<2x96xf32> to vector<2x64xf32>
    %126 = vector.extract_strided_slice %123 {offsets = [0, 0], sizes = [2, 64], strides = [1, 1]} : vector<2x96xf32> to vector<2x64xf32>
    %127 = arith.addf %125, %126 : vector<2x64xf32>
    %128 = arith.negf %127 : vector<2x64xf32>
    %129 = math.exp %128 : vector<2x64xf32>
    %cst_34 = arith.constant 1.000000e+00 : f32
    %130 = vector.broadcast %cst_34 : f32 to vector<2x64xf32>
    %131 = arith.addf %130, %129 : vector<2x64xf32>
    %132 = arith.divf %130, %131 : vector<2x64xf32>
    %133 = vector.extract_strided_slice %132 {offsets = [0, 0], sizes = [2, 32], strides = [1, 1]} : vector<2x64xf32> to vector<2x32xf32>
    %134 = vector.extract_strided_slice %132 {offsets = [0, 32], sizes = [2, 32], strides = [1, 1]} : vector<2x64xf32> to vector<2x32xf32>
    %135 = vector.extract_strided_slice %124 {offsets = [0, 64], sizes = [2, 32], strides = [1, 1]} : vector<2x96xf32> to vector<2x32xf32>
    %136 = vector.extract_strided_slice %123 {offsets = [0, 64], sizes = [2, 32], strides = [1, 1]} : vector<2x96xf32> to vector<2x32xf32>
    %137 = vector.broadcast %16 : vector<1x32xf32> to vector<2x32xf32>
    %138 = arith.addf %136, %137 : vector<2x32xf32>
    %139 = arith.mulf %133, %138 : vector<2x32xf32>
    %140 = arith.addf %135, %139 : vector<2x32xf32>
    %141 = math.tanh %140 : vector<2x32xf32>
    %cst_35 = arith.constant 1.000000e+00 : f32
    %142 = vector.broadcast %cst_35 : f32 to vector<2x32xf32>
    %143 = arith.subf %142, %134 : vector<2x32xf32>
    %144 = arith.mulf %143, %141 : vector<2x32xf32>
    %145 = arith.mulf %134, %120 : vector<2x32xf32>
    %146 = arith.addf %144, %145 : vector<2x32xf32>
    %c8 = arith.constant 8 : index
    %c0_36 = arith.constant 0 : index
    %147 = vector.load %arg16[%c8, %c0_36] : memref<16x32xf32, #tpu.memory_space<vmem>>, vector<2x32xf32>
    tpu.vector_store %arg16[%c8, %c0_36], %146 {strides = array<i32>} : memref<16x32xf32, #tpu.memory_space<vmem>>, vector<2x32xf32>,
    %148 = arith.truncf %146 : vector<2x32xf32> to vector<2x32xbf16>
    %cst_37 = arith.constant dense<0.000000e+00> : vector<2x96xf32>
    %149 = tpu.matmul %148, %15, %cst_37 {dimension_numbers = #tpu.dot_dimension_numbers<[1], [0], [0], [1], [0, 0, 1, 1], [], []>} : vector<2x32xbf16>, vector<32x96xbf16>, vector<2x96xf32> -> vector<2x96xf32>
    %150 = vector.extract_strided_slice %14 {offsets = [10, 0], sizes = [2, 96], strides = [1, 1]} : vector<16x96xf32> to vector<2x96xf32>
    %151 = vector.extract_strided_slice %150 {offsets = [0, 0], sizes = [2, 64], strides = [1, 1]} : vector<2x96xf32> to vector<2x64xf32>
    %152 = vector.extract_strided_slice %149 {offsets = [0, 0], sizes = [2, 64], strides = [1, 1]} : vector<2x96xf32> to vector<2x64xf32>
    %153 = arith.addf %151, %152 : vector<2x64xf32>
    %154 = arith.negf %153 : vector<2x64xf32>
    %155 = math.exp %154 : vector<2x64xf32>
    %cst_38 = arith.constant 1.000000e+00 : f32
    %156 = vector.broadcast %cst_38 : f32 to vector<2x64xf32>
    %157 = arith.addf %156, %155 : vector<2x64xf32>
    %158 = arith.divf %156, %157 : vector<2x64xf32>
    %159 = vector.extract_strided_slice %158 {offsets = [0, 0], sizes = [2, 32], strides = [1, 1]} : vector<2x64xf32> to vector<2x32xf32>
    %160 = vector.extract_strided_slice %158 {offsets = [0, 32], sizes = [2, 32], strides = [1, 1]} : vector<2x64xf32> to vector<2x32xf32>
    %161 = vector.extract_strided_slice %150 {offsets = [0, 64], sizes = [2, 32], strides = [1, 1]} : vector<2x96xf32> to vector<2x32xf32>
    %162 = vector.extract_strided_slice %149 {offsets = [0, 64], sizes = [2, 32], strides = [1, 1]} : vector<2x96xf32> to vector<2x32xf32>
    %163 = vector.broadcast %16 : vector<1x32xf32> to vector<2x32xf32>
    %164 = arith.addf %162, %163 : vector<2x32xf32>
    %165 = arith.mulf %159, %164 : vector<2x32xf32>
    %166 = arith.addf %161, %165 : vector<2x32xf32>
    %167 = math.tanh %166 : vector<2x32xf32>
    %cst_39 = arith.constant 1.000000e+00 : f32
    %168 = vector.broadcast %cst_39 : f32 to vector<2x32xf32>
    %169 = arith.subf %168, %160 : vector<2x32xf32>
    %170 = arith.mulf %169, %167 : vector<2x32xf32>
    %171 = arith.mulf %160, %146 : vector<2x32xf32>
    %172 = arith.addf %170, %171 : vector<2x32xf32>
    %c10 = arith.constant 10 : index
    %c0_40 = arith.constant 0 : index
    %173 = vector.load %arg16[%c10, %c0_40] : memref<16x32xf32, #tpu.memory_space<vmem>>, vector<2x32xf32>
    tpu.vector_store %arg16[%c10, %c0_40], %172 {strides = array<i32>} : memref<16x32xf32, #tpu.memory_space<vmem>>, vector<2x32xf32>,
    %174 = arith.truncf %172 : vector<2x32xf32> to vector<2x32xbf16>
    %cst_41 = arith.constant dense<0.000000e+00> : vector<2x96xf32>
    %175 = tpu.matmul %174, %15, %cst_41 {dimension_numbers = #tpu.dot_dimension_numbers<[1], [0], [0], [1], [0, 0, 1, 1], [], []>} : vector<2x32xbf16>, vector<32x96xbf16>, vector<2x96xf32> -> vector<2x96xf32>
    %176 = vector.extract_strided_slice %14 {offsets = [12, 0], sizes = [2, 96], strides = [1, 1]} : vector<16x96xf32> to vector<2x96xf32>
    %177 = vector.extract_strided_slice %176 {offsets = [0, 0], sizes = [2, 64], strides = [1, 1]} : vector<2x96xf32> to vector<2x64xf32>
    %178 = vector.extract_strided_slice %175 {offsets = [0, 0], sizes = [2, 64], strides = [1, 1]} : vector<2x96xf32> to vector<2x64xf32>
    %179 = arith.addf %177, %178 : vector<2x64xf32>
    %180 = arith.negf %179 : vector<2x64xf32>
    %181 = math.exp %180 : vector<2x64xf32>
    %cst_42 = arith.constant 1.000000e+00 : f32
    %182 = vector.broadcast %cst_42 : f32 to vector<2x64xf32>
    %183 = arith.addf %182, %181 : vector<2x64xf32>
    %184 = arith.divf %182, %183 : vector<2x64xf32>
    %185 = vector.extract_strided_slice %184 {offsets = [0, 0], sizes = [2, 32], strides = [1, 1]} : vector<2x64xf32> to vector<2x32xf32>
    %186 = vector.extract_strided_slice %184 {offsets = [0, 32], sizes = [2, 32], strides = [1, 1]} : vector<2x64xf32> to vector<2x32xf32>
    %187 = vector.extract_strided_slice %176 {offsets = [0, 64], sizes = [2, 32], strides = [1, 1]} : vector<2x96xf32> to vector<2x32xf32>
    %188 = vector.extract_strided_slice %175 {offsets = [0, 64], sizes = [2, 32], strides = [1, 1]} : vector<2x96xf32> to vector<2x32xf32>
    %189 = vector.broadcast %16 : vector<1x32xf32> to vector<2x32xf32>
    %190 = arith.addf %188, %189 : vector<2x32xf32>
    %191 = arith.mulf %185, %190 : vector<2x32xf32>
    %192 = arith.addf %187, %191 : vector<2x32xf32>
    %193 = math.tanh %192 : vector<2x32xf32>
    %cst_43 = arith.constant 1.000000e+00 : f32
    %194 = vector.broadcast %cst_43 : f32 to vector<2x32xf32>
    %195 = arith.subf %194, %186 : vector<2x32xf32>
    %196 = arith.mulf %195, %193 : vector<2x32xf32>
    %197 = arith.mulf %186, %172 : vector<2x32xf32>
    %198 = arith.addf %196, %197 : vector<2x32xf32>
    %c12 = arith.constant 12 : index
    %c0_44 = arith.constant 0 : index
    %199 = vector.load %arg16[%c12, %c0_44] : memref<16x32xf32, #tpu.memory_space<vmem>>, vector<2x32xf32>
    tpu.vector_store %arg16[%c12, %c0_44], %198 {strides = array<i32>} : memref<16x32xf32, #tpu.memory_space<vmem>>, vector<2x32xf32>,
    %200 = arith.truncf %198 : vector<2x32xf32> to vector<2x32xbf16>
    %cst_45 = arith.constant dense<0.000000e+00> : vector<2x96xf32>
    %201 = tpu.matmul %200, %15, %cst_45 {dimension_numbers = #tpu.dot_dimension_numbers<[1], [0], [0], [1], [0, 0, 1, 1], [], []>} : vector<2x32xbf16>, vector<32x96xbf16>, vector<2x96xf32> -> vector<2x96xf32>
    %202 = vector.extract_strided_slice %14 {offsets = [14, 0], sizes = [2, 96], strides = [1, 1]} : vector<16x96xf32> to vector<2x96xf32>
    %203 = vector.extract_strided_slice %202 {offsets = [0, 0], sizes = [2, 64], strides = [1, 1]} : vector<2x96xf32> to vector<2x64xf32>
    %204 = vector.extract_strided_slice %201 {offsets = [0, 0], sizes = [2, 64], strides = [1, 1]} : vector<2x96xf32> to vector<2x64xf32>
    %205 = arith.addf %203, %204 : vector<2x64xf32>
    %206 = arith.negf %205 : vector<2x64xf32>
    %207 = math.exp %206 : vector<2x64xf32>
    %cst_46 = arith.constant 1.000000e+00 : f32
    %208 = vector.broadcast %cst_46 : f32 to vector<2x64xf32>
    %209 = arith.addf %208, %207 : vector<2x64xf32>
    %210 = arith.divf %208, %209 : vector<2x64xf32>
    %211 = vector.extract_strided_slice %210 {offsets = [0, 0], sizes = [2, 32], strides = [1, 1]} : vector<2x64xf32> to vector<2x32xf32>
    %212 = vector.extract_strided_slice %210 {offsets = [0, 32], sizes = [2, 32], strides = [1, 1]} : vector<2x64xf32> to vector<2x32xf32>
    %213 = vector.extract_strided_slice %202 {offsets = [0, 64], sizes = [2, 32], strides = [1, 1]} : vector<2x96xf32> to vector<2x32xf32>
    %214 = vector.extract_strided_slice %201 {offsets = [0, 64], sizes = [2, 32], strides = [1, 1]} : vector<2x96xf32> to vector<2x32xf32>
    %215 = vector.broadcast %16 : vector<1x32xf32> to vector<2x32xf32>
    %216 = arith.addf %214, %215 : vector<2x32xf32>
    %217 = arith.mulf %211, %216 : vector<2x32xf32>
    %218 = arith.addf %213, %217 : vector<2x32xf32>
    %219 = math.tanh %218 : vector<2x32xf32>
    %cst_47 = arith.constant 1.000000e+00 : f32
    %220 = vector.broadcast %cst_47 : f32 to vector<2x32xf32>
    %221 = arith.subf %220, %212 : vector<2x32xf32>
    %222 = arith.mulf %221, %219 : vector<2x32xf32>
    %223 = arith.mulf %212, %198 : vector<2x32xf32>
    %224 = arith.addf %222, %223 : vector<2x32xf32>
    %c14 = arith.constant 14 : index
    %c0_48 = arith.constant 0 : index
    %225 = vector.load %arg16[%c14, %c0_48] : memref<16x32xf32, #tpu.memory_space<vmem>>, vector<2x32xf32>
    tpu.vector_store %arg16[%c14, %c0_48], %224 {strides = array<i32>} : memref<16x32xf32, #tpu.memory_space<vmem>>, vector<2x32xf32>,
    %c0_49 = arith.constant 0 : index
    %c0_50 = arith.constant 0 : index
    %226 = vector.load %arg16[%c0_49, %c0_50] : memref<16x32xf32, #tpu.memory_space<vmem>>, vector<16x32xf32>
    %c0_51 = arith.constant 0 : index
    %c0_52 = arith.constant 0 : index
    %227 = vector.load %arg8[%c0_51, %c0_52] : memref<32x128xbf16, #tpu.memory_space<vmem>>, vector<32x128xbf16>
    %c0_53 = arith.constant 0 : index
    %c0_54 = arith.constant 0 : index
    %228 = vector.load %arg9[%c0_53, %c0_54] : memref<128x96xbf16, #tpu.memory_space<vmem>>, vector<128x96xbf16>
    %c0_55 = arith.constant 0 : index
    %c0_56 = arith.constant 0 : index
    %229 = vector.load %arg10[%c0_55, %c0_56] : memref<1x96xf32, #tpu.memory_space<vmem>>, vector<1x96xf32>
    %c0_57 = arith.constant 0 : index
    %c0_58 = arith.constant 0 : index
    %230 = vector.load %arg11[%c0_57, %c0_58] : memref<1x32xf32, #tpu.memory_space<vmem>>, vector<1x32xf32>
    %c0_59 = arith.constant 0 : index
    %c0_60 = arith.constant 0 : index
    %231 = vector.load %arg12[%c0_59, %c0_60] : memref<1x128xf32, #tpu.memory_space<vmem>>, vector<1x128xf32>
    %c0_61 = arith.constant 0 : index
    %c0_62 = arith.constant 0 : index
    %232 = vector.load %arg13[%c0_61, %c0_62] : memref<32x3xbf16, #tpu.memory_space<vmem>>, vector<32x3xbf16>
    %c0_63 = arith.constant 0 : index
    %c0_64 = arith.constant 0 : index
    %233 = vector.load %arg14[%c0_63, %c0_64] : memref<1x3xf32, #tpu.memory_space<vmem>>, vector<1x3xf32>
    %234 = arith.truncf %226 : vector<16x32xf32> to vector<16x32xbf16>
    %cst_65 = arith.constant dense<0.000000e+00> : vector<16x128xf32>
    %235 = tpu.matmul %234, %227, %cst_65 {dimension_numbers = #tpu.dot_dimension_numbers<[1], [0], [0], [1], [0, 0, 1, 1], [], []>} : vector<16x32xbf16>, vector<32x128xbf16>, vector<16x128xf32> -> vector<16x128xf32>
    %236 = vector.extract_strided_slice %229 {offsets = [0, 0], sizes = [1, 64], strides = [1, 1]} : vector<1x96xf32> to vector<1x64xf32>
    %237 = vector.extract_strided_slice %235 {offsets = [0, 0], sizes = [16, 64], strides = [1, 1]} : vector<16x128xf32> to vector<16x64xf32>
    %238 = vector.broadcast %236 : vector<1x64xf32> to vector<16x64xf32>
    %239 = arith.addf %238, %237 : vector<16x64xf32>
    %240 = arith.negf %239 : vector<16x64xf32>
    %241 = math.exp %240 : vector<16x64xf32>
    %cst_66 = arith.constant 1.000000e+00 : f32
    %242 = vector.broadcast %cst_66 : f32 to vector<16x64xf32>
    %243 = arith.addf %242, %241 : vector<16x64xf32>
    %244 = arith.divf %242, %243 : vector<16x64xf32>
    %245 = vector.extract_strided_slice %244 {offsets = [0, 0], sizes = [16, 32], strides = [1, 1]} : vector<16x64xf32> to vector<16x32xf32>
    %246 = vector.extract_strided_slice %244 {offsets = [0, 32], sizes = [16, 32], strides = [1, 1]} : vector<16x64xf32> to vector<16x32xf32>
    %247 = vector.extract_strided_slice %229 {offsets = [0, 64], sizes = [1, 32], strides = [1, 1]} : vector<1x96xf32> to vector<1x32xf32>
    %248 = vector.extract_strided_slice %235 {offsets = [0, 64], sizes = [16, 32], strides = [1, 1]} : vector<16x128xf32> to vector<16x32xf32>
    %249 = vector.broadcast %230 : vector<1x32xf32> to vector<16x32xf32>
    %250 = arith.addf %248, %249 : vector<16x32xf32>
    %251 = arith.mulf %245, %250 : vector<16x32xf32>
    %252 = vector.broadcast %247 : vector<1x32xf32> to vector<16x32xf32>
    %253 = arith.addf %252, %251 : vector<16x32xf32>
    %254 = math.tanh %253 : vector<16x32xf32>
    %cst_67 = arith.constant 1.000000e+00 : f32
    %255 = vector.broadcast %cst_67 : f32 to vector<16x32xf32>
    %256 = arith.subf %255, %246 : vector<16x32xf32>
    %257 = arith.mulf %256, %254 : vector<16x32xf32>
    %258 = arith.mulf %246, %226 : vector<16x32xf32>
    %259 = arith.addf %257, %258 : vector<16x32xf32>
    %260 = arith.truncf %259 : vector<16x32xf32> to vector<16x32xbf16>
    %cst_68 = arith.constant dense<0.000000e+00> : vector<16x3xf32>
    %261 = tpu.matmul %260, %232, %cst_68 {dimension_numbers = #tpu.dot_dimension_numbers<[1], [0], [0], [1], [0, 0, 1, 1], [], []>} : vector<16x32xbf16>, vector<32x3xbf16>, vector<16x3xf32> -> vector<16x3xf32>
    %262 = vector.broadcast %233 : vector<1x3xf32> to vector<16x3xf32>
    %263 = arith.addf %261, %262 : vector<16x3xf32>
    %c0_69 = arith.constant 0 : index
    %c0_70 = arith.constant 0 : index
    %264 = vector.load %arg15[%c0_69, %c0_70] : memref<16x24xf32, #tpu.memory_space<vmem>>, vector<16x3xf32>
    tpu.vector_store %arg15[%c0_69, %c0_70], %263 {strides = array<i32>} : memref<16x24xf32, #tpu.memory_space<vmem>>, vector<16x3xf32>,
    %265 = arith.truncf %259 : vector<16x32xf32> to vector<16x32xbf16>
    %cst_71 = arith.constant dense<0.000000e+00> : vector<16x128xf32>
    %266 = tpu.matmul %265, %227, %cst_71 {dimension_numbers = #tpu.dot_dimension_numbers<[1], [0], [0], [1], [0, 0, 1, 1], [], []>} : vector<16x32xbf16>, vector<32x128xbf16>, vector<16x128xf32> -> vector<16x128xf32>
    %267 = vector.broadcast %231 : vector<1x128xf32> to vector<16x128xf32>
    %268 = arith.addf %266, %267 : vector<16x128xf32>
    %cst_72 = arith.constant 0.000000e+00 : f32
    %269 = vector.broadcast %cst_72 : f32 to vector<16x128xf32>
    %270 = arith.maximumf %268, %269 : vector<16x128xf32>
    %271 = arith.truncf %270 : vector<16x128xf32> to vector<16x128xbf16>
    %cst_73 = arith.constant dense<0.000000e+00> : vector<16x96xf32>
    %272 = tpu.matmul %271, %228, %cst_73 {dimension_numbers = #tpu.dot_dimension_numbers<[1], [0], [0], [1], [0, 0, 1, 1], [], []>} : vector<16x128xbf16>, vector<128x96xbf16>, vector<16x96xf32> -> vector<16x96xf32>
    %273 = vector.broadcast %229 : vector<1x96xf32> to vector<16x96xf32>
    %274 = arith.addf %272, %273 : vector<16x96xf32>
    %275 = vector.extract_strided_slice %274 {offsets = [0, 0], sizes = [16, 64], strides = [1, 1]} : vector<16x96xf32> to vector<16x64xf32>
    %276 = vector.extract_strided_slice %266 {offsets = [0, 0], sizes = [16, 64], strides = [1, 1]} : vector<16x128xf32> to vector<16x64xf32>
    %277 = arith.addf %275, %276 : vector<16x64xf32>
    %278 = arith.negf %277 : vector<16x64xf32>
    %279 = math.exp %278 : vector<16x64xf32>
    %cst_74 = arith.constant 1.000000e+00 : f32
    %280 = vector.broadcast %cst_74 : f32 to vector<16x64xf32>
    %281 = arith.addf %280, %279 : vector<16x64xf32>
    %282 = arith.divf %280, %281 : vector<16x64xf32>
    %283 = vector.extract_strided_slice %282 {offsets = [0, 0], sizes = [16, 32], strides = [1, 1]} : vector<16x64xf32> to vector<16x32xf32>
    %284 = vector.extract_strided_slice %282 {offsets = [0, 32], sizes = [16, 32], strides = [1, 1]} : vector<16x64xf32> to vector<16x32xf32>
    %285 = vector.extract_strided_slice %274 {offsets = [0, 64], sizes = [16, 32], strides = [1, 1]} : vector<16x96xf32> to vector<16x32xf32>
    %286 = vector.extract_strided_slice %266 {offsets = [0, 64], sizes = [16, 32], strides = [1, 1]} : vector<16x128xf32> to vector<16x32xf32>
    %287 = vector.broadcast %230 : vector<1x32xf32> to vector<16x32xf32>
    %288 = arith.addf %286, %287 : vector<16x32xf32>
    %289 = arith.mulf %283, %288 : vector<16x32xf32>
    %290 = arith.addf %285, %289 : vector<16x32xf32>
    %291 = math.tanh %290 : vector<16x32xf32>
    %cst_75 = arith.constant 1.000000e+00 : f32
    %292 = vector.broadcast %cst_75 : f32 to vector<16x32xf32>
    %293 = arith.subf %292, %284 : vector<16x32xf32>
    %294 = arith.mulf %293, %291 : vector<16x32xf32>
    %295 = arith.mulf %284, %259 : vector<16x32xf32>
    %296 = arith.addf %294, %295 : vector<16x32xf32>
    %297 = arith.truncf %296 : vector<16x32xf32> to vector<16x32xbf16>
    %cst_76 = arith.constant dense<0.000000e+00> : vector<16x3xf32>
    %298 = tpu.matmul %297, %232, %cst_76 {dimension_numbers = #tpu.dot_dimension_numbers<[1], [0], [0], [1], [0, 0, 1, 1], [], []>} : vector<16x32xbf16>, vector<32x3xbf16>, vector<16x3xf32> -> vector<16x3xf32>
    %299 = vector.broadcast %233 : vector<1x3xf32> to vector<16x3xf32>
    %300 = arith.addf %298, %299 : vector<16x3xf32>
    %c0_77 = arith.constant 0 : index
    %c3 = arith.constant 3 : index
    %301 = vector.load %arg15[%c0_77, %c3] : memref<16x24xf32, #tpu.memory_space<vmem>>, vector<16x3xf32>
    tpu.vector_store %arg15[%c0_77, %c3], %300 {strides = array<i32>} : memref<16x24xf32, #tpu.memory_space<vmem>>, vector<16x3xf32>,
    %302 = arith.truncf %296 : vector<16x32xf32> to vector<16x32xbf16>
    %cst_78 = arith.constant dense<0.000000e+00> : vector<16x128xf32>
    %303 = tpu.matmul %302, %227, %cst_78 {dimension_numbers = #tpu.dot_dimension_numbers<[1], [0], [0], [1], [0, 0, 1, 1], [], []>} : vector<16x32xbf16>, vector<32x128xbf16>, vector<16x128xf32> -> vector<16x128xf32>
    %304 = vector.broadcast %231 : vector<1x128xf32> to vector<16x128xf32>
    %305 = arith.addf %303, %304 : vector<16x128xf32>
    %cst_79 = arith.constant 0.000000e+00 : f32
    %306 = vector.broadcast %cst_79 : f32 to vector<16x128xf32>
    %307 = arith.maximumf %305, %306 : vector<16x128xf32>
    %308 = arith.truncf %307 : vector<16x128xf32> to vector<16x128xbf16>
    %cst_80 = arith.constant dense<0.000000e+00> : vector<16x96xf32>
    %309 = tpu.matmul %308, %228, %cst_80 {dimension_numbers = #tpu.dot_dimension_numbers<[1], [0], [0], [1], [0, 0, 1, 1], [], []>} : vector<16x128xbf16>, vector<128x96xbf16>, vector<16x96xf32> -> vector<16x96xf32>
    %310 = vector.broadcast %229 : vector<1x96xf32> to vector<16x96xf32>
    %311 = arith.addf %309, %310 : vector<16x96xf32>
    %312 = vector.extract_strided_slice %311 {offsets = [0, 0], sizes = [16, 64], strides = [1, 1]} : vector<16x96xf32> to vector<16x64xf32>
    %313 = vector.extract_strided_slice %303 {offsets = [0, 0], sizes = [16, 64], strides = [1, 1]} : vector<16x128xf32> to vector<16x64xf32>
    %314 = arith.addf %312, %313 : vector<16x64xf32>
    %315 = arith.negf %314 : vector<16x64xf32>
    %316 = math.exp %315 : vector<16x64xf32>
    %cst_81 = arith.constant 1.000000e+00 : f32
    %317 = vector.broadcast %cst_81 : f32 to vector<16x64xf32>
    %318 = arith.addf %317, %316 : vector<16x64xf32>
    %319 = arith.divf %317, %318 : vector<16x64xf32>
    %320 = vector.extract_strided_slice %319 {offsets = [0, 0], sizes = [16, 32], strides = [1, 1]} : vector<16x64xf32> to vector<16x32xf32>
    %321 = vector.extract_strided_slice %319 {offsets = [0, 32], sizes = [16, 32], strides = [1, 1]} : vector<16x64xf32> to vector<16x32xf32>
    %322 = vector.extract_strided_slice %311 {offsets = [0, 64], sizes = [16, 32], strides = [1, 1]} : vector<16x96xf32> to vector<16x32xf32>
    %323 = vector.extract_strided_slice %303 {offsets = [0, 64], sizes = [16, 32], strides = [1, 1]} : vector<16x128xf32> to vector<16x32xf32>
    %324 = vector.broadcast %230 : vector<1x32xf32> to vector<16x32xf32>
    %325 = arith.addf %323, %324 : vector<16x32xf32>
    %326 = arith.mulf %320, %325 : vector<16x32xf32>
    %327 = arith.addf %322, %326 : vector<16x32xf32>
    %328 = math.tanh %327 : vector<16x32xf32>
    %cst_82 = arith.constant 1.000000e+00 : f32
    %329 = vector.broadcast %cst_82 : f32 to vector<16x32xf32>
    %330 = arith.subf %329, %321 : vector<16x32xf32>
    %331 = arith.mulf %330, %328 : vector<16x32xf32>
    %332 = arith.mulf %321, %296 : vector<16x32xf32>
    %333 = arith.addf %331, %332 : vector<16x32xf32>
    %334 = arith.truncf %333 : vector<16x32xf32> to vector<16x32xbf16>
    %cst_83 = arith.constant dense<0.000000e+00> : vector<16x3xf32>
    %335 = tpu.matmul %334, %232, %cst_83 {dimension_numbers = #tpu.dot_dimension_numbers<[1], [0], [0], [1], [0, 0, 1, 1], [], []>} : vector<16x32xbf16>, vector<32x3xbf16>, vector<16x3xf32> -> vector<16x3xf32>
    %336 = vector.broadcast %233 : vector<1x3xf32> to vector<16x3xf32>
    %337 = arith.addf %335, %336 : vector<16x3xf32>
    %c0_84 = arith.constant 0 : index
    %c6_85 = arith.constant 6 : index
    %338 = vector.load %arg15[%c0_84, %c6_85] : memref<16x24xf32, #tpu.memory_space<vmem>>, vector<16x3xf32>
    tpu.vector_store %arg15[%c0_84, %c6_85], %337 {strides = array<i32>} : memref<16x24xf32, #tpu.memory_space<vmem>>, vector<16x3xf32>,
    %339 = arith.truncf %333 : vector<16x32xf32> to vector<16x32xbf16>
    %cst_86 = arith.constant dense<0.000000e+00> : vector<16x128xf32>
    %340 = tpu.matmul %339, %227, %cst_86 {dimension_numbers = #tpu.dot_dimension_numbers<[1], [0], [0], [1], [0, 0, 1, 1], [], []>} : vector<16x32xbf16>, vector<32x128xbf16>, vector<16x128xf32> -> vector<16x128xf32>
    %341 = vector.broadcast %231 : vector<1x128xf32> to vector<16x128xf32>
    %342 = arith.addf %340, %341 : vector<16x128xf32>
    %cst_87 = arith.constant 0.000000e+00 : f32
    %343 = vector.broadcast %cst_87 : f32 to vector<16x128xf32>
    %344 = arith.maximumf %342, %343 : vector<16x128xf32>
    %345 = arith.truncf %344 : vector<16x128xf32> to vector<16x128xbf16>
    %cst_88 = arith.constant dense<0.000000e+00> : vector<16x96xf32>
    %346 = tpu.matmul %345, %228, %cst_88 {dimension_numbers = #tpu.dot_dimension_numbers<[1], [0], [0], [1], [0, 0, 1, 1], [], []>} : vector<16x128xbf16>, vector<128x96xbf16>, vector<16x96xf32> -> vector<16x96xf32>
    %347 = vector.broadcast %229 : vector<1x96xf32> to vector<16x96xf32>
    %348 = arith.addf %346, %347 : vector<16x96xf32>
    %349 = vector.extract_strided_slice %348 {offsets = [0, 0], sizes = [16, 64], strides = [1, 1]} : vector<16x96xf32> to vector<16x64xf32>
    %350 = vector.extract_strided_slice %340 {offsets = [0, 0], sizes = [16, 64], strides = [1, 1]} : vector<16x128xf32> to vector<16x64xf32>
    %351 = arith.addf %349, %350 : vector<16x64xf32>
    %352 = arith.negf %351 : vector<16x64xf32>
    %353 = math.exp %352 : vector<16x64xf32>
    %cst_89 = arith.constant 1.000000e+00 : f32
    %354 = vector.broadcast %cst_89 : f32 to vector<16x64xf32>
    %355 = arith.addf %354, %353 : vector<16x64xf32>
    %356 = arith.divf %354, %355 : vector<16x64xf32>
    %357 = vector.extract_strided_slice %356 {offsets = [0, 0], sizes = [16, 32], strides = [1, 1]} : vector<16x64xf32> to vector<16x32xf32>
    %358 = vector.extract_strided_slice %356 {offsets = [0, 32], sizes = [16, 32], strides = [1, 1]} : vector<16x64xf32> to vector<16x32xf32>
    %359 = vector.extract_strided_slice %348 {offsets = [0, 64], sizes = [16, 32], strides = [1, 1]} : vector<16x96xf32> to vector<16x32xf32>
    %360 = vector.extract_strided_slice %340 {offsets = [0, 64], sizes = [16, 32], strides = [1, 1]} : vector<16x128xf32> to vector<16x32xf32>
    %361 = vector.broadcast %230 : vector<1x32xf32> to vector<16x32xf32>
    %362 = arith.addf %360, %361 : vector<16x32xf32>
    %363 = arith.mulf %357, %362 : vector<16x32xf32>
    %364 = arith.addf %359, %363 : vector<16x32xf32>
    %365 = math.tanh %364 : vector<16x32xf32>
    %cst_90 = arith.constant 1.000000e+00 : f32
    %366 = vector.broadcast %cst_90 : f32 to vector<16x32xf32>
    %367 = arith.subf %366, %358 : vector<16x32xf32>
    %368 = arith.mulf %367, %365 : vector<16x32xf32>
    %369 = arith.mulf %358, %333 : vector<16x32xf32>
    %370 = arith.addf %368, %369 : vector<16x32xf32>
    %371 = arith.truncf %370 : vector<16x32xf32> to vector<16x32xbf16>
    %cst_91 = arith.constant dense<0.000000e+00> : vector<16x3xf32>
    %372 = tpu.matmul %371, %232, %cst_91 {dimension_numbers = #tpu.dot_dimension_numbers<[1], [0], [0], [1], [0, 0, 1, 1], [], []>} : vector<16x32xbf16>, vector<32x3xbf16>, vector<16x3xf32> -> vector<16x3xf32>
    %373 = vector.broadcast %233 : vector<1x3xf32> to vector<16x3xf32>
    %374 = arith.addf %372, %373 : vector<16x3xf32>
    %c0_92 = arith.constant 0 : index
    %c9 = arith.constant 9 : index
    %375 = vector.load %arg15[%c0_92, %c9] : memref<16x24xf32, #tpu.memory_space<vmem>>, vector<16x3xf32>
    tpu.vector_store %arg15[%c0_92, %c9], %374 {strides = array<i32>} : memref<16x24xf32, #tpu.memory_space<vmem>>, vector<16x3xf32>,
    %376 = arith.truncf %370 : vector<16x32xf32> to vector<16x32xbf16>
    %cst_93 = arith.constant dense<0.000000e+00> : vector<16x128xf32>
    %377 = tpu.matmul %376, %227, %cst_93 {dimension_numbers = #tpu.dot_dimension_numbers<[1], [0], [0], [1], [0, 0, 1, 1], [], []>} : vector<16x32xbf16>, vector<32x128xbf16>, vector<16x128xf32> -> vector<16x128xf32>
    %378 = vector.broadcast %231 : vector<1x128xf32> to vector<16x128xf32>
    %379 = arith.addf %377, %378 : vector<16x128xf32>
    %cst_94 = arith.constant 0.000000e+00 : f32
    %380 = vector.broadcast %cst_94 : f32 to vector<16x128xf32>
    %381 = arith.maximumf %379, %380 : vector<16x128xf32>
    %382 = arith.truncf %381 : vector<16x128xf32> to vector<16x128xbf16>
    %cst_95 = arith.constant dense<0.000000e+00> : vector<16x96xf32>
    %383 = tpu.matmul %382, %228, %cst_95 {dimension_numbers = #tpu.dot_dimension_numbers<[1], [0], [0], [1], [0, 0, 1, 1], [], []>} : vector<16x128xbf16>, vector<128x96xbf16>, vector<16x96xf32> -> vector<16x96xf32>
    %384 = vector.broadcast %229 : vector<1x96xf32> to vector<16x96xf32>
    %385 = arith.addf %383, %384 : vector<16x96xf32>
    %386 = vector.extract_strided_slice %385 {offsets = [0, 0], sizes = [16, 64], strides = [1, 1]} : vector<16x96xf32> to vector<16x64xf32>
    %387 = vector.extract_strided_slice %377 {offsets = [0, 0], sizes = [16, 64], strides = [1, 1]} : vector<16x128xf32> to vector<16x64xf32>
    %388 = arith.addf %386, %387 : vector<16x64xf32>
    %389 = arith.negf %388 : vector<16x64xf32>
    %390 = math.exp %389 : vector<16x64xf32>
    %cst_96 = arith.constant 1.000000e+00 : f32
    %391 = vector.broadcast %cst_96 : f32 to vector<16x64xf32>
    %392 = arith.addf %391, %390 : vector<16x64xf32>
    %393 = arith.divf %391, %392 : vector<16x64xf32>
    %394 = vector.extract_strided_slice %393 {offsets = [0, 0], sizes = [16, 32], strides = [1, 1]} : vector<16x64xf32> to vector<16x32xf32>
    %395 = vector.extract_strided_slice %393 {offsets = [0, 32], sizes = [16, 32], strides = [1, 1]} : vector<16x64xf32> to vector<16x32xf32>
    %396 = vector.extract_strided_slice %385 {offsets = [0, 64], sizes = [16, 32], strides = [1, 1]} : vector<16x96xf32> to vector<16x32xf32>
    %397 = vector.extract_strided_slice %377 {offsets = [0, 64], sizes = [16, 32], strides = [1, 1]} : vector<16x128xf32> to vector<16x32xf32>
    %398 = vector.broadcast %230 : vector<1x32xf32> to vector<16x32xf32>
    %399 = arith.addf %397, %398 : vector<16x32xf32>
    %400 = arith.mulf %394, %399 : vector<16x32xf32>
    %401 = arith.addf %396, %400 : vector<16x32xf32>
    %402 = math.tanh %401 : vector<16x32xf32>
    %cst_97 = arith.constant 1.000000e+00 : f32
    %403 = vector.broadcast %cst_97 : f32 to vector<16x32xf32>
    %404 = arith.subf %403, %395 : vector<16x32xf32>
    %405 = arith.mulf %404, %402 : vector<16x32xf32>
    %406 = arith.mulf %395, %370 : vector<16x32xf32>
    %407 = arith.addf %405, %406 : vector<16x32xf32>
    %408 = arith.truncf %407 : vector<16x32xf32> to vector<16x32xbf16>
    %cst_98 = arith.constant dense<0.000000e+00> : vector<16x3xf32>
    %409 = tpu.matmul %408, %232, %cst_98 {dimension_numbers = #tpu.dot_dimension_numbers<[1], [0], [0], [1], [0, 0, 1, 1], [], []>} : vector<16x32xbf16>, vector<32x3xbf16>, vector<16x3xf32> -> vector<16x3xf32>
    %410 = vector.broadcast %233 : vector<1x3xf32> to vector<16x3xf32>
    %411 = arith.addf %409, %410 : vector<16x3xf32>
    %c0_99 = arith.constant 0 : index
    %c12_100 = arith.constant 12 : index
    %412 = vector.load %arg15[%c0_99, %c12_100] : memref<16x24xf32, #tpu.memory_space<vmem>>, vector<16x3xf32>
    tpu.vector_store %arg15[%c0_99, %c12_100], %411 {strides = array<i32>} : memref<16x24xf32, #tpu.memory_space<vmem>>, vector<16x3xf32>,
    %413 = arith.truncf %407 : vector<16x32xf32> to vector<16x32xbf16>
    %cst_101 = arith.constant dense<0.000000e+00> : vector<16x128xf32>
    %414 = tpu.matmul %413, %227, %cst_101 {dimension_numbers = #tpu.dot_dimension_numbers<[1], [0], [0], [1], [0, 0, 1, 1], [], []>} : vector<16x32xbf16>, vector<32x128xbf16>, vector<16x128xf32> -> vector<16x128xf32>
    %415 = vector.broadcast %231 : vector<1x128xf32> to vector<16x128xf32>
    %416 = arith.addf %414, %415 : vector<16x128xf32>
    %cst_102 = arith.constant 0.000000e+00 : f32
    %417 = vector.broadcast %cst_102 : f32 to vector<16x128xf32>
    %418 = arith.maximumf %416, %417 : vector<16x128xf32>
    %419 = arith.truncf %418 : vector<16x128xf32> to vector<16x128xbf16>
    %cst_103 = arith.constant dense<0.000000e+00> : vector<16x96xf32>
    %420 = tpu.matmul %419, %228, %cst_103 {dimension_numbers = #tpu.dot_dimension_numbers<[1], [0], [0], [1], [0, 0, 1, 1], [], []>} : vector<16x128xbf16>, vector<128x96xbf16>, vector<16x96xf32> -> vector<16x96xf32>
    %421 = vector.broadcast %229 : vector<1x96xf32> to vector<16x96xf32>
    %422 = arith.addf %420, %421 : vector<16x96xf32>
    %423 = vector.extract_strided_slice %422 {offsets = [0, 0], sizes = [16, 64], strides = [1, 1]} : vector<16x96xf32> to vector<16x64xf32>
    %424 = vector.extract_strided_slice %414 {offsets = [0, 0], sizes = [16, 64], strides = [1, 1]} : vector<16x128xf32> to vector<16x64xf32>
    %425 = arith.addf %423, %424 : vector<16x64xf32>
    %426 = arith.negf %425 : vector<16x64xf32>
    %427 = math.exp %426 : vector<16x64xf32>
    %cst_104 = arith.constant 1.000000e+00 : f32
    %428 = vector.broadcast %cst_104 : f32 to vector<16x64xf32>
    %429 = arith.addf %428, %427 : vector<16x64xf32>
    %430 = arith.divf %428, %429 : vector<16x64xf32>
    %431 = vector.extract_strided_slice %430 {offsets = [0, 0], sizes = [16, 32], strides = [1, 1]} : vector<16x64xf32> to vector<16x32xf32>
    %432 = vector.extract_strided_slice %430 {offsets = [0, 32], sizes = [16, 32], strides = [1, 1]} : vector<16x64xf32> to vector<16x32xf32>
    %433 = vector.extract_strided_slice %422 {offsets = [0, 64], sizes = [16, 32], strides = [1, 1]} : vector<16x96xf32> to vector<16x32xf32>
    %434 = vector.extract_strided_slice %414 {offsets = [0, 64], sizes = [16, 32], strides = [1, 1]} : vector<16x128xf32> to vector<16x32xf32>
    %435 = vector.broadcast %230 : vector<1x32xf32> to vector<16x32xf32>
    %436 = arith.addf %434, %435 : vector<16x32xf32>
    %437 = arith.mulf %431, %436 : vector<16x32xf32>
    %438 = arith.addf %433, %437 : vector<16x32xf32>
    %439 = math.tanh %438 : vector<16x32xf32>
    %cst_105 = arith.constant 1.000000e+00 : f32
    %440 = vector.broadcast %cst_105 : f32 to vector<16x32xf32>
    %441 = arith.subf %440, %432 : vector<16x32xf32>
    %442 = arith.mulf %441, %439 : vector<16x32xf32>
    %443 = arith.mulf %432, %407 : vector<16x32xf32>
    %444 = arith.addf %442, %443 : vector<16x32xf32>
    %445 = arith.truncf %444 : vector<16x32xf32> to vector<16x32xbf16>
    %cst_106 = arith.constant dense<0.000000e+00> : vector<16x3xf32>
    %446 = tpu.matmul %445, %232, %cst_106 {dimension_numbers = #tpu.dot_dimension_numbers<[1], [0], [0], [1], [0, 0, 1, 1], [], []>} : vector<16x32xbf16>, vector<32x3xbf16>, vector<16x3xf32> -> vector<16x3xf32>
    %447 = vector.broadcast %233 : vector<1x3xf32> to vector<16x3xf32>
    %448 = arith.addf %446, %447 : vector<16x3xf32>
    %c0_107 = arith.constant 0 : index
    %c15 = arith.constant 15 : index
    %449 = vector.load %arg15[%c0_107, %c15] : memref<16x24xf32, #tpu.memory_space<vmem>>, vector<16x3xf32>
    tpu.vector_store %arg15[%c0_107, %c15], %448 {strides = array<i32>} : memref<16x24xf32, #tpu.memory_space<vmem>>, vector<16x3xf32>,
    %450 = arith.truncf %444 : vector<16x32xf32> to vector<16x32xbf16>
    %cst_108 = arith.constant dense<0.000000e+00> : vector<16x128xf32>
    %451 = tpu.matmul %450, %227, %cst_108 {dimension_numbers = #tpu.dot_dimension_numbers<[1], [0], [0], [1], [0, 0, 1, 1], [], []>} : vector<16x32xbf16>, vector<32x128xbf16>, vector<16x128xf32> -> vector<16x128xf32>
    %452 = vector.broadcast %231 : vector<1x128xf32> to vector<16x128xf32>
    %453 = arith.addf %451, %452 : vector<16x128xf32>
    %cst_109 = arith.constant 0.000000e+00 : f32
    %454 = vector.broadcast %cst_109 : f32 to vector<16x128xf32>
    %455 = arith.maximumf %453, %454 : vector<16x128xf32>
    %456 = arith.truncf %455 : vector<16x128xf32> to vector<16x128xbf16>
    %cst_110 = arith.constant dense<0.000000e+00> : vector<16x96xf32>
    %457 = tpu.matmul %456, %228, %cst_110 {dimension_numbers = #tpu.dot_dimension_numbers<[1], [0], [0], [1], [0, 0, 1, 1], [], []>} : vector<16x128xbf16>, vector<128x96xbf16>, vector<16x96xf32> -> vector<16x96xf32>
    %458 = vector.broadcast %229 : vector<1x96xf32> to vector<16x96xf32>
    %459 = arith.addf %457, %458 : vector<16x96xf32>
    %460 = vector.extract_strided_slice %459 {offsets = [0, 0], sizes = [16, 64], strides = [1, 1]} : vector<16x96xf32> to vector<16x64xf32>
    %461 = vector.extract_strided_slice %451 {offsets = [0, 0], sizes = [16, 64], strides = [1, 1]} : vector<16x128xf32> to vector<16x64xf32>
    %462 = arith.addf %460, %461 : vector<16x64xf32>
    %463 = arith.negf %462 : vector<16x64xf32>
    %464 = math.exp %463 : vector<16x64xf32>
    %cst_111 = arith.constant 1.000000e+00 : f32
    %465 = vector.broadcast %cst_111 : f32 to vector<16x64xf32>
    %466 = arith.addf %465, %464 : vector<16x64xf32>
    %467 = arith.divf %465, %466 : vector<16x64xf32>
    %468 = vector.extract_strided_slice %467 {offsets = [0, 0], sizes = [16, 32], strides = [1, 1]} : vector<16x64xf32> to vector<16x32xf32>
    %469 = vector.extract_strided_slice %467 {offsets = [0, 32], sizes = [16, 32], strides = [1, 1]} : vector<16x64xf32> to vector<16x32xf32>
    %470 = vector.extract_strided_slice %459 {offsets = [0, 64], sizes = [16, 32], strides = [1, 1]} : vector<16x96xf32> to vector<16x32xf32>
    %471 = vector.extract_strided_slice %451 {offsets = [0, 64], sizes = [16, 32], strides = [1, 1]} : vector<16x128xf32> to vector<16x32xf32>
    %472 = vector.broadcast %230 : vector<1x32xf32> to vector<16x32xf32>
    %473 = arith.addf %471, %472 : vector<16x32xf32>
    %474 = arith.mulf %468, %473 : vector<16x32xf32>
    %475 = arith.addf %470, %474 : vector<16x32xf32>
    %476 = math.tanh %475 : vector<16x32xf32>
    %cst_112 = arith.constant 1.000000e+00 : f32
    %477 = vector.broadcast %cst_112 : f32 to vector<16x32xf32>
    %478 = arith.subf %477, %469 : vector<16x32xf32>
    %479 = arith.mulf %478, %476 : vector<16x32xf32>
    %480 = arith.mulf %469, %444 : vector<16x32xf32>
    %481 = arith.addf %479, %480 : vector<16x32xf32>
    %482 = arith.truncf %481 : vector<16x32xf32> to vector<16x32xbf16>
    %cst_113 = arith.constant dense<0.000000e+00> : vector<16x3xf32>
    %483 = tpu.matmul %482, %232, %cst_113 {dimension_numbers = #tpu.dot_dimension_numbers<[1], [0], [0], [1], [0, 0, 1, 1], [], []>} : vector<16x32xbf16>, vector<32x3xbf16>, vector<16x3xf32> -> vector<16x3xf32>
    %484 = vector.broadcast %233 : vector<1x3xf32> to vector<16x3xf32>
    %485 = arith.addf %483, %484 : vector<16x3xf32>
    %c0_114 = arith.constant 0 : index
    %c18 = arith.constant 18 : index
    %486 = vector.load %arg15[%c0_114, %c18] : memref<16x24xf32, #tpu.memory_space<vmem>>, vector<16x3xf32>
    tpu.vector_store %arg15[%c0_114, %c18], %485 {strides = array<i32>} : memref<16x24xf32, #tpu.memory_space<vmem>>, vector<16x3xf32>,
    %487 = arith.truncf %481 : vector<16x32xf32> to vector<16x32xbf16>
    %cst_115 = arith.constant dense<0.000000e+00> : vector<16x128xf32>
    %488 = tpu.matmul %487, %227, %cst_115 {dimension_numbers = #tpu.dot_dimension_numbers<[1], [0], [0], [1], [0, 0, 1, 1], [], []>} : vector<16x32xbf16>, vector<32x128xbf16>, vector<16x128xf32> -> vector<16x128xf32>
    %489 = vector.broadcast %231 : vector<1x128xf32> to vector<16x128xf32>
    %490 = arith.addf %488, %489 : vector<16x128xf32>
    %cst_116 = arith.constant 0.000000e+00 : f32
    %491 = vector.broadcast %cst_116 : f32 to vector<16x128xf32>
    %492 = arith.maximumf %490, %491 : vector<16x128xf32>
    %493 = arith.truncf %492 : vector<16x128xf32> to vector<16x128xbf16>
    %cst_117 = arith.constant dense<0.000000e+00> : vector<16x96xf32>
    %494 = tpu.matmul %493, %228, %cst_117 {dimension_numbers = #tpu.dot_dimension_numbers<[1], [0], [0], [1], [0, 0, 1, 1], [], []>} : vector<16x128xbf16>, vector<128x96xbf16>, vector<16x96xf32> -> vector<16x96xf32>
    %495 = vector.broadcast %229 : vector<1x96xf32> to vector<16x96xf32>
    %496 = arith.addf %494, %495 : vector<16x96xf32>
    %497 = vector.extract_strided_slice %496 {offsets = [0, 0], sizes = [16, 64], strides = [1, 1]} : vector<16x96xf32> to vector<16x64xf32>
    %498 = vector.extract_strided_slice %488 {offsets = [0, 0], sizes = [16, 64], strides = [1, 1]} : vector<16x128xf32> to vector<16x64xf32>
    %499 = arith.addf %497, %498 : vector<16x64xf32>
    %500 = arith.negf %499 : vector<16x64xf32>
    %501 = math.exp %500 : vector<16x64xf32>
    %cst_118 = arith.constant 1.000000e+00 : f32
    %502 = vector.broadcast %cst_118 : f32 to vector<16x64xf32>
    %503 = arith.addf %502, %501 : vector<16x64xf32>
    %504 = arith.divf %502, %503 : vector<16x64xf32>
    %505 = vector.extract_strided_slice %504 {offsets = [0, 0], sizes = [16, 32], strides = [1, 1]} : vector<16x64xf32> to vector<16x32xf32>
    %506 = vector.extract_strided_slice %504 {offsets = [0, 32], sizes = [16, 32], strides = [1, 1]} : vector<16x64xf32> to vector<16x32xf32>
    %507 = vector.extract_strided_slice %496 {offsets = [0, 64], sizes = [16, 32], strides = [1, 1]} : vector<16x96xf32> to vector<16x32xf32>
    %508 = vector.extract_strided_slice %488 {offsets = [0, 64], sizes = [16, 32], strides = [1, 1]} : vector<16x128xf32> to vector<16x32xf32>
    %509 = vector.broadcast %230 : vector<1x32xf32> to vector<16x32xf32>
    %510 = arith.addf %508, %509 : vector<16x32xf32>
    %511 = arith.mulf %505, %510 : vector<16x32xf32>
    %512 = arith.addf %507, %511 : vector<16x32xf32>
    %513 = math.tanh %512 : vector<16x32xf32>
    %cst_119 = arith.constant 1.000000e+00 : f32
    %514 = vector.broadcast %cst_119 : f32 to vector<16x32xf32>
    %515 = arith.subf %514, %506 : vector<16x32xf32>
    %516 = arith.mulf %515, %513 : vector<16x32xf32>
    %517 = arith.mulf %506, %481 : vector<16x32xf32>
    %518 = arith.addf %516, %517 : vector<16x32xf32>
    %519 = arith.truncf %518 : vector<16x32xf32> to vector<16x32xbf16>
    %cst_120 = arith.constant dense<0.000000e+00> : vector<16x3xf32>
    %520 = tpu.matmul %519, %232, %cst_120 {dimension_numbers = #tpu.dot_dimension_numbers<[1], [0], [0], [1], [0, 0, 1, 1], [], []>} : vector<16x32xbf16>, vector<32x3xbf16>, vector<16x3xf32> -> vector<16x3xf32>
    %521 = vector.broadcast %233 : vector<1x3xf32> to vector<16x3xf32>
    %522 = arith.addf %520, %521 : vector<16x3xf32>
    %c0_121 = arith.constant 0 : index
    %c21 = arith.constant 21 : index
    %523 = vector.load %arg15[%c0_121, %c21] : memref<16x24xf32, #tpu.memory_space<vmem>>, vector<16x3xf32>
    tpu.vector_store %arg15[%c0_121, %c21], %522 {strides = array<i32>} : memref<16x24xf32, #tpu.memory_space<vmem>>, vector<16x3xf32>,
    return
  }
  func.func @transform_0(%arg0: i32) -> (i32, i32) {
    %c0_i32 = arith.constant 0 : i32
    %c0_i32_0 = arith.constant 0 : i32
    %c0_i32_1 = arith.constant 0 : i32
    return %c0_i32, %c0_i32_0 : i32, i32
  }
  func.func @transform_1(%arg0: i32) -> (i32, i32) {
    %c0_i32 = arith.constant 0 : i32
    %c0_i32_0 = arith.constant 0 : i32
    %c0_i32_1 = arith.constant 0 : i32
    return %c0_i32, %c0_i32_0 : i32, i32
  }
  func.func @transform_2(%arg0: i32) -> (i32, i32) {
    %c0_i32 = arith.constant 0 : i32
    %c0_i32_0 = arith.constant 0 : i32
    %c0_i32_1 = arith.constant 0 : i32
    return %c0_i32, %c0_i32_0 : i32, i32
  }
  func.func @transform_3(%arg0: i32) -> (i32, i32) {
    %c0_i32 = arith.constant 0 : i32
    %c0_i32_0 = arith.constant 0 : i32
    %c0_i32_1 = arith.constant 0 : i32
    return %c0_i32, %c0_i32_0 : i32, i32
  }
  func.func @transform_4(%arg0: i32) -> (i32, i32) {
    %c0_i32 = arith.constant 0 : i32
    %c0_i32_0 = arith.constant 0 : i32
    %c0_i32_1 = arith.constant 0 : i32
    return %c0_i32, %c0_i32_0 : i32, i32
  }
  func.func @transform_5(%arg0: i32) -> (i32, i32) {
    %c0_i32 = arith.constant 0 : i32
    %c0_i32_0 = arith.constant 0 : i32
    %c0_i32_1 = arith.constant 0 : i32
    return %c0_i32, %c0_i32_0 : i32, i32
  }
  func.func @transform_6(%arg0: i32) -> (i32, i32) {
    %c0_i32 = arith.constant 0 : i32
    %c0_i32_0 = arith.constant 0 : i32
    %c0_i32_1 = arith.constant 0 : i32
    return %c0_i32, %c0_i32_0 : i32, i32
  }
  func.func @transform_7(%arg0: i32) -> (i32, i32) {
    %c0_i32 = arith.constant 0 : i32
    %c0_i32_0 = arith.constant 0 : i32
    %c0_i32_1 = arith.constant 0 : i32
    return %c0_i32, %c0_i32_0 : i32, i32
  }
  func.func @transform_8(%arg0: i32) -> (i32, i32) {
    %c0_i32 = arith.constant 0 : i32
    %c0_i32_0 = arith.constant 0 : i32
    %c0_i32_1 = arith.constant 0 : i32
    return %c0_i32, %c0_i32_0 : i32, i32
  }
  func.func @transform_9(%arg0: i32) -> (i32, i32) {
    %c0_i32 = arith.constant 0 : i32
    %c0_i32_0 = arith.constant 0 : i32
    %c0_i32_1 = arith.constant 0 : i32
    return %c0_i32, %c0_i32_0 : i32, i32
  }
  func.func @transform_10(%arg0: i32) -> (i32, i32) {
    %c0_i32 = arith.constant 0 : i32
    %c0_i32_0 = arith.constant 0 : i32
    %c0_i32_1 = arith.constant 0 : i32
    return %c0_i32, %c0_i32_0 : i32, i32
  }
  func.func @transform_11(%arg0: i32) -> (i32, i32) {
    %c0_i32 = arith.constant 0 : i32
    %c0_i32_0 = arith.constant 0 : i32
    %c0_i32_1 = arith.constant 0 : i32
    return %c0_i32, %c0_i32_0 : i32, i32
  }
  func.func @transform_12(%arg0: i32) -> (i32, i32) {
    %c0_i32 = arith.constant 0 : i32
    %c0_i32_0 = arith.constant 0 : i32
    %c0_i32_1 = arith.constant 0 : i32
    return %c0_i32, %c0_i32_0 : i32, i32
  }
  func.func @transform_13(%arg0: i32) -> (i32, i32) {
    %c0_i32 = arith.constant 0 : i32
    %c0_i32_0 = arith.constant 0 : i32
    %c0_i32_1 = arith.constant 0 : i32
    return %c0_i32, %c0_i32_0 : i32, i32
  }
  func.func @transform_14(%arg0: i32) -> (i32, i32) {
    %c0_i32 = arith.constant 0 : i32
    %c0_i32_0 = arith.constant 0 : i32
    %c0_i32_1 = arith.constant 0 : i32
    return %c0_i32, %c0_i32_0 : i32, i32
  }
}

</mosaic_0001>

<llo_original>
// kernel: ego_rnn_ed_forward.1
$region0: #{ego_rnn_ed_forward.1}
  #allocation0 [shape = 'u32[]', space=smem, size = 0x4, offset = 0x4, fixed_abs, tag = 'smem constant byte address 0x4 - core index']
  #allocation1 [shape = 'u32[144,128]{1,0:T(1,128)}', space=vmem, size = 0x12000, scoped, tag = 'internal scratch']
  #allocation2 [shape = 'f32[16,32]{1,0:T(8,128)}', space=vmem, size = 0x2000, scoped, tag = 'scratch operand']
  %s0 = inlined_call_operand.vmem [shape: f32[16,3], index: 0, kind: input, shape index: {}]
  %s1 = inlined_call_operand.vmem [shape: bf16[3,32], index: 1, kind: input, shape index: {}]
  %s2 = inlined_call_operand.vmem [shape: f32[1,32], index: 2, kind: input, shape index: {}]
  %s3 = inlined_call_operand.vmem [shape: bf16[32,96], index: 3, kind: input, shape index: {}]
  %s4 = inlined_call_operand.vmem [shape: bf16[32,96], index: 4, kind: input, shape index: {}]
  %s5 = inlined_call_operand.vmem [shape: f32[1,96], index: 5, kind: input, shape index: {}]
  %s6 = inlined_call_operand.vmem [shape: f32[1,32], index: 6, kind: input, shape index: {}]
  %s7 = inlined_call_operand.vmem [shape: bf16[32,128], index: 7, kind: input, shape index: {}]
  %s8 = inlined_call_operand.vmem [shape: bf16[128,96], index: 8, kind: input, shape index: {}]
  %s9 = inlined_call_operand.vmem [shape: f32[1,96], index: 9, kind: input, shape index: {}]
  %s10 = inlined_call_operand.vmem [shape: f32[1,32], index: 10, kind: input, shape index: {}]
  %s11 = inlined_call_operand.vmem [shape: f32[1,128], index: 11, kind: input, shape index: {}]
  %s12 = inlined_call_operand.vmem [shape: bf16[32,3], index: 12, kind: input, shape index: {}]
  %s13 = inlined_call_operand.vmem [shape: f32[1,3], index: 13, kind: input, shape index: {}]
  %s14 = inlined_call_operand.vmem [shape: f32[16,24], index: 14, kind: output, shape index: {}]
  %s15 = sld [smem:[#allocation0]]
  $region66: #{ego_rnn_ed_forward.1} parent=0
    _
  %s17 = ssub.s32 1, %s15
  %s18 = scalar_select 0, %s17, %s15
  // Predicated region
  $region2: #{ego_rnn_ed_forward.1} parent=0 // pred_check
    _
  $region3: #{ego_rnn_ed_forward.1} parent=0 // pred_check_branch
    %20 = sbr.rel (0) target = $region5
  $region4: #{ego_rnn_ed_forward.1} parent=0 // pred_region
    _
  $region5: #{ego_rnn_ed_forward.1} parent=0 // pred_fallthru
    _
  // Predicated region
  $region6: #{ego_rnn_ed_forward.1} parent=0 // pred_check
    _
  $region7: #{ego_rnn_ed_forward.1} parent=0 // pred_check_branch
    %22 = sbr.rel (0) target = $region9
  $region8: #{ego_rnn_ed_forward.1} parent=0 // pred_region
    _
  $region9: #{ego_rnn_ed_forward.1} parent=0 // pred_fallthru
    _
  // Predicated region
  $region10: #{ego_rnn_ed_forward.1} parent=0 // pred_check
    _
  $region11: #{ego_rnn_ed_forward.1} parent=0 // pred_check_branch
    %24 = sbr.rel (0) target = $region13
  $region12: #{ego_rnn_ed_forward.1} parent=0 // pred_region
    _
  $region13: #{ego_rnn_ed_forward.1} parent=0 // pred_fallthru
    _
  // Predicated region
  $region14: #{ego_rnn_ed_forward.1} parent=0 // pred_check
    _
  $region15: #{ego_rnn_ed_forward.1} parent=0 // pred_check_branch
    %26 = sbr.rel (0) target = $region17
  $region16: #{ego_rnn_ed_forward.1} parent=0 // pred_region
    _
  $region17: #{ego_rnn_ed_forward.1} parent=0 // pred_fallthru
    _
  // Predicated region
  $region18: #{ego_rnn_ed_forward.1} parent=0 // pred_check
    _
  $region19: #{ego_rnn_ed_forward.1} parent=0 // pred_check_branch
    %28 = sbr.rel (0) target = $region21
  $region20: #{ego_rnn_ed_forward.1} parent=0 // pred_region
    _
  $region21: #{ego_rnn_ed_forward.1} parent=0 // pred_fallthru
    _
  // Predicated region
  $region22: #{ego_rnn_ed_forward.1} parent=0 // pred_check
    _
  $region23: #{ego_rnn_ed_forward.1} parent=0 // pred_check_branch
    %30 = sbr.rel (0) target = $region25
  $region24: #{ego_rnn_ed_forward.1} parent=0 // pred_region
    _
  $region25: #{ego_rnn_ed_forward.1} parent=0 // pred_fallthru
    _
  // Predicated region
  $region26: #{ego_rnn_ed_forward.1} parent=0 // pred_check
    _
  $region27: #{ego_rnn_ed_forward.1} parent=0 // pred_check_branch
    %32 = sbr.rel (0) target = $region29
  $region28: #{ego_rnn_ed_forward.1} parent=0 // pred_region
    _
  $region29: #{ego_rnn_ed_forward.1} parent=0 // pred_fallthru
    _
  // Predicated region
  $region30: #{ego_rnn_ed_forward.1} parent=0 // pred_check
    _
  $region31: #{ego_rnn_ed_forward.1} parent=0 // pred_check_branch
    %34 = sbr.rel (0) target = $region33
  $region32: #{ego_rnn_ed_forward.1} parent=0 // pred_region
    _
  $region33: #{ego_rnn_ed_forward.1} parent=0 // pred_fallthru
    _
  // Predicated region
  $region34: #{ego_rnn_ed_forward.1} parent=0 // pred_check
    _
  $region35: #{ego_rnn_ed_forward.1} parent=0 // pred_check_branch
    %36 = sbr.rel (0) target = $region37
  $region36: #{ego_rnn_ed_forward.1} parent=0 // pred_region
    _
  $region37: #{ego_rnn_ed_forward.1} parent=0 // pred_fallthru
    _
  // Predicated region
  $region38: #{ego_rnn_ed_forward.1} parent=0 // pred_check
    _
  $region39: #{ego_rnn_ed_forward.1} parent=0 // pred_check_branch
    %38 = sbr.rel (0) target = $region41
  $region40: #{ego_rnn_ed_forward.1} parent=0 // pred_region
    _
  $region41: #{ego_rnn_ed_forward.1} parent=0 // pred_fallthru
    _
  // Predicated region
  $region42: #{ego_rnn_ed_forward.1} parent=0 // pred_check
    _
  $region43: #{ego_rnn_ed_forward.1} parent=0 // pred_check_branch
    %40 = sbr.rel (0) target = $region45
  $region44: #{ego_rnn_ed_forward.1} parent=0 // pred_region
    _
  $region45: #{ego_rnn_ed_forward.1} parent=0 // pred_fallthru
    _
  // Predicated region
  $region46: #{ego_rnn_ed_forward.1} parent=0 // pred_check
    _
  $region47: #{ego_rnn_ed_forward.1} parent=0 // pred_check_branch
    %42 = sbr.rel (0) target = $region49
  $region48: #{ego_rnn_ed_forward.1} parent=0 // pred_region
    _
  $region49: #{ego_rnn_ed_forward.1} parent=0 // pred_fallthru
    _
  // Predicated region
  $region50: #{ego_rnn_ed_forward.1} parent=0 // pred_check
    _
  $region51: #{ego_rnn_ed_forward.1} parent=0 // pred_check_branch
    %44 = sbr.rel (0) target = $region53
  $region52: #{ego_rnn_ed_forward.1} parent=0 // pred_region
    _
  $region53: #{ego_rnn_ed_forward.1} parent=0 // pred_fallthru
    _
  // Predicated region
  $region54: #{ego_rnn_ed_forward.1} parent=0 // pred_check
    _
  $region55: #{ego_rnn_ed_forward.1} parent=0 // pred_check_branch
    %46 = sbr.rel (0) target = $region57
  $region56: #{ego_rnn_ed_forward.1} parent=0 // pred_region
    _
  $region57: #{ego_rnn_ed_forward.1} parent=0 // pred_fallthru
    _
  %v48 = vld [vmem:[%s0] sm:$0xff]
  %v49 = vld [vmem:[%s0 + $0x8] sm:$0xff]
  %v50 = vld [vmem:[%s1] sm:$0x3]
  %v51 = vpack.c.bf16 %v49, %v48
  %v52 = vld [vmem:[%s2] sm:$0x1]
  %v54 = vlaneseq
  %v55 = vshrl.u32 %v54, 7
  %v56 = vsub.s32 0, %v55
  %v57 = vrot.slane %v52, %v56
  %vm59 = vcmask 23552
  %v61 = vsel %vm59, %v51, 0
  %vm63 = vcmask 1040384
  %vm64 = vcmask 1041408
  %v65 = vsel %vm63, 4294967295, 65535
  %v66 = vsel %vm64, %v65, 0
  %v68 = vand.u32 %v50, %v66
  %70 = vmatprep.subr.bf16.mxu0 0
  %71 = vmatpush1.bf16.msra.mxu0 0
  %72 = vmatprep.subr.bf16.mxu0 0
  %73 = vmatpush1.bf16.msra.mxu0 0
  %74 = vmatprep.subr.bf16.mxu0 0
  %75 = vmatpush1.bf16.msra.mxu0 0
  %76 = vmatprep.subr.bf16.mxu0 0
  %77 = vmatpush1.bf16.msra.mxu0 0
  %78 = vmatprep.subr.bf16.mxu0 0
  %79 = vmatpush1.bf16.msra.mxu0 0
  %80 = vmatprep.subr.bf16.mxu0 0
  %81 = vmatpush1.bf16.msra.mxu0 0
  %82 = vmatprep.subr.bf16.mxu0 0
  %83 = vmatpush1.bf16.msra.mxu0 0
  %84 = vmatprep.subr.bf16.mxu0 0
  %85 = vmatpush1.bf16.msra.mxu0 %v68
  %86 = vmatprep.subr.bf16.mxu0 0
  %87 = vmatpush2.bf16.msra.mxu0 0
  %88 = vmatprep.subr.bf16.mxu0 0
  %89 = vmatpush2.bf16.msra.mxu0 0
  %90 = vmatprep.subr.bf16.mxu0 0
  %91 = vmatpush2.bf16.msra.mxu0 0
  %92 = vmatprep.subr.bf16.mxu0 0
  %93 = vmatpush2.bf16.msra.mxu0 0
  %94 = vmatprep.subr.bf16.mxu0 0
  %95 = vmatpush2.bf16.msra.mxu0 0
  %96 = vmatprep.subr.bf16.mxu0 0
  %97 = vmatpush2.bf16.msra.mxu0 0
  %98 = vmatprep.subr.bf16.mxu0 0
  %99 = vmatpush2.bf16.msra.mxu0 0
  %100 = vmatprep.subr.bf16.mxu0 0
  %101 = vmatpush2.bf16.msra.mxu0 0
  %102 = vmatprep.mubr.bf16.mxu0 0
  %103 = vmatmul.mubr.bf16.gmra.mxu0 %v61
  %v104 = vpop.f32.mrf.mxu0
  %v105 = vadd.f32 %v57, %v104
  %v106 = vpop.f32.mrf.mxu0
  %v107 = vpop.f32.mrf.mxu0
  %v108 = vadd.f32 %v57, %v107
  %v109 = vpop.f32.mrf.mxu0
  %110 = vdwg.mxu0
  %v111 = vmax.f32 %v105, 0.0
  %v112 = vmax.f32 %v108, 0.0
  %v113 = vld [vmem:[%s3] sm:$0xf]
  %v114 = vld [vmem:[%s3 + $0x4] sm:$0xf]
  %v115 = vld [vmem:[%s3 + $0x8] sm:$0xf]
  %v116 = vld [vmem:[%s3 + $0xc] sm:$0xf]
  %v117 = vpack.c.bf16 %v112, %v111
  %v118 = vld [vmem:[%s5] sm:$0x1]
  %v120 = vlaneseq
  %v121 = vshrl.u32 %v120, 7
  %v122 = vsub.s32 0, %v121
  %v123 = vrot.slane %v118, %v122
  %v129 = vunpack.c.l.b16 %v113
  %v130 = vunpack.c.l.b16 %v114
  %v131 = vunpack.c.l.b16 %v115
  %v132 = vunpack.c.l.b16 %v116
  %v133 = vpack.c.b16 %v130, %v129
  %v134 = vpack.c.b16 %v132, %v131
  %vm137 = vcmask 261120
  %v139 = vsel %vm137, %v117, 0
  %141 = vmatprep.subr.bf16.mxu0 0
  %142 = vmatpush1.bf16.msra.mxu0 0
  %143 = vmatprep.subr.bf16.mxu0 0
  %144 = vmatpush1.bf16.msra.mxu0 0
  %145 = vmatprep.subr.bf16.mxu0 0
  %146 = vmatpush1.bf16.msra.mxu0 0
  %147 = vmatprep.subr.bf16.mxu0 0
  %148 = vmatpush1.bf16.msra.mxu0 0
  %149 = vmatprep.subr.bf16.mxu0 0
  %150 = vmatpush1.bf16.msra.mxu0 0
  %151 = vmatprep.subr.bf16.mxu0 0
  %152 = vmatpush1.bf16.msra.mxu0 0
  %153 = vmatprep.subr.bf16.mxu0 0
  %154 = vmatpush1.bf16.msra.mxu0 %v134
  %155 = vmatprep.subr.bf16.mxu0 0
  %156 = vmatpush1.bf16.msra.mxu0 %v133
  %157 = vmatprep.subr.bf16.mxu0 0
  %158 = vmatpush2.bf16.msra.mxu0 0
  %159 = vmatprep.subr.bf16.mxu0 0
  %160 = vmatpush2.bf16.msra.mxu0 0
  %161 = vmatprep.subr.bf16.mxu0 0
  %162 = vmatpush2.bf16.msra.mxu0 0
  %163 = vmatprep.subr.bf16.mxu0 0
  %164 = vmatpush2.bf16.msra.mxu0 0
  %165 = vmatprep.subr.bf16.mxu0 0
  %166 = vmatpush2.bf16.msra.mxu0 0
  %167 = vmatprep.subr.bf16.mxu0 0
  %168 = vmatpush2.bf16.msra.mxu0 0
  %169 = vmatprep.subr.bf16.mxu0 0
  %170 = vmatpush2.bf16.msra.mxu0 0
  %171 = vmatprep.subr.bf16.mxu0 0
  %172 = vmatpush2.bf16.msra.mxu0 0
  %173 = vmatprep.mubr.bf16.mxu0 0
  %174 = vmatmul.mubr.bf16.gmra.mxu0 %v139
  %v175 = vpop.f32.mrf.mxu0
  %v176 = vadd.f32 %v123, %v175
  %v177 = vpop.f32.mrf.mxu0
  %v178 = vpop.f32.mrf.mxu0
  %v179 = vadd.f32 %v123, %v178
  %v180 = vpop.f32.mrf.mxu0
  %181 = vdwg.mxu0
  %v182 = vld [vmem:[%s4] sm:$0xf]
  %v183 = vld [vmem:[%s4 + $0x4] sm:$0xf]
  %v184 = vld [vmem:[%s4 + $0x8] sm:$0xf]
  %v185 = vld [vmem:[%s4 + $0xc] sm:$0xf]
  %v186 = vld [vmem:[%s6] sm:$0x1]
  %v191 = vunpack.c.l.b16 %v182
  %v192 = vunpack.c.l.b16 %v183
  %v193 = vunpack.c.l.b16 %v184
  %v194 = vunpack.c.l.b16 %v185
  %v195 = vpack.c.b16 %v192, %v191
  %v196 = vpack.c.b16 %v194, %v193
  %v200 = vsel %vm137, 0, 0
  %202 = vmatprep.subr.bf16.mxu0 0
  %203 = vmatpush1.bf16.msra.mxu0 0
  %204 = vmatprep.subr.bf16.mxu0 0
  %205 = vmatpush1.bf16.msra.mxu0 0
  %206 = vmatprep.subr.bf16.mxu0 0
  %207 = vmatpush1.bf16.msra.mxu0 0
  %208 = vmatprep.subr.bf16.mxu0 0
  %209 = vmatpush1.bf16.msra.mxu0 0
  %210 = vmatprep.subr.bf16.mxu0 0
  %211 = vmatpush1.bf16.msra.mxu0 0
  %212 = vmatprep.subr.bf16.mxu0 0
  %213 = vmatpush1.bf16.msra.mxu0 0
  %214 = vmatprep.subr.bf16.mxu0 0
  %215 = vmatpush1.bf16.msra.mxu0 %v196
  %216 = vmatprep.subr.bf16.mxu0 0
  %217 = vmatpush1.bf16.msra.mxu0 %v195
  %218 = vmatprep.subr.bf16.mxu0 0
  %219 = vmatpush2.bf16.msra.mxu0 0
  %220 = vmatprep.subr.bf16.mxu0 0
  %221 = vmatpush2.bf16.msra.mxu0 0
  %222 = vmatprep.subr.bf16.mxu0 0
  %223 = vmatpush2.bf16.msra.mxu0 0
  %224 = vmatprep.subr.bf16.mxu0 0
  %225 = vmatpush2.bf16.msra.mxu0 0
  %226 = vmatprep.subr.bf16.mxu0 0
  %227 = vmatpush2.bf16.msra.mxu0 0
  %228 = vmatprep.subr.bf16.mxu0 0
  %229 = vmatpush2.bf16.msra.mxu0 0
  %230 = vmatprep.subr.bf16.mxu0 0
  %231 = vmatpush2.bf16.msra.mxu0 0
  %232 = vmatprep.subr.bf16.mxu0 0
  %233 = vmatpush2.bf16.msra.mxu0 0
  %234 = vmatprep.mubr.bf16.mxu0 0
  %235 = vmatmul.mubr.bf16.gmra.mxu0 %v200
  %v236 = vpop.f32.mrf.mxu0
  %v237 = vadd.f32 0.0, %v236
  %v238 = vpop.f32.mrf.mxu0
  %v239 = vpop.f32.mrf.mxu0
  %v240 = vpop.f32.mrf.mxu0
  %241 = vdwg.mxu0
  %v242 = vadd.f32 %v176, %v237
  %v243 = vxor.u32 %v242, 2147483648
  %v244 = vmul.f32 %v243, 1.442695
  %v245 = vpow.pop %v244
  %v246 = vadd.f32 %v245, 1.0
  %v247 = vrcp.pop %v246
  %v248 = vmul.f32 1.0, %v247
  %v250 = vlaneseq
  %v251 = vshrl.u32 %v250, 7
  %v252 = vsub.s32 0, %v251
  %v253 = vrot.slane %v186, %v252
  %254 = vrot.lane.b32.xlu0 %v253, 64
  %v255 = vpop.permute.xlu0 %254
  %v257 = vadd.f32 %v237, %v255
  %259 = vrot.lane.b32.xlu0 %v257, 64
  %v260 = vpop.permute.xlu0 %259
  %v262 = vmul.f32 %v248, %v260
  %264 = vrot.lane.b32.xlu0 %v262, 64
  %v265 = vpop.permute.xlu0 %264
  %v267 = vadd.f32 %v176, %v265
  %v268 = vtanh.pop %v267
  %v269 = vsub.f32 1.0, %v248
  %271 = vrot.lane.b32.xlu0 %v268, 96
  %v272 = vpop.permute.xlu0 %271
  %v274 = vmul.f32 %v269, %v272
  %v275 = vmul.f32 %v248, 0.0
  %v276 = vadd.f32 %v274, %v275
  %278 = vrot.lane.b32.xlu0 %v276, 96
  %v279 = vpop.permute.xlu0 %278
  %vm281 = vcmask 254976
  %282 = vst.msk [vmem:[#allocation2] sm:$0x3] %vm281, %v279
  %v283 = vpack.c.bf16 %v276, %v276
  %285 = vrot.lane.b32.xlu0 %v283, 96
  %v286 = vpop.permute.xlu0 %285
  %v288 = vsel %vm137, %v286, 0
  %290 = vmatprep.subr.bf16.mxu0 0
  %291 = vmatpush1.bf16.msra.mxu0 0
  %292 = vmatprep.subr.bf16.mxu0 0
  %293 = vmatpush1.bf16.msra.mxu0 0
  %294 = vmatprep.subr.bf16.mxu0 0
  %295 = vmatpush1.bf16.msra.mxu0 0
  %296 = vmatprep.subr.bf16.mxu0 0
  %297 = vmatpush1.bf16.msra.mxu0 0
  %298 = vmatprep.subr.bf16.mxu0 0
  %299 = vmatpush1.bf16.msra.mxu0 0
  %300 = vmatprep.subr.bf16.mxu0 0
  %301 = vmatpush1.bf16.msra.mxu0 0
  %302 = vmatprep.subr.bf16.mxu0 0
  %303 = vmatpush1.bf16.msra.mxu0 %v196
  %304 = vmatprep.subr.bf16.mxu0 0
  %305 = vmatpush1.bf16.msra.mxu0 %v195
  %306 = vmatprep.subr.bf16.mxu0 0
  %307 = vmatpush2.bf16.msra.mxu0 0
  %308 = vmatprep.subr.bf16.mxu0 0
  %309 = vmatpush2.bf16.msra.mxu0 0
  %310 = vmatprep.subr.bf16.mxu0 0
  %311 = vmatpush2.bf16.msra.mxu0 0
  %312 = vmatprep.subr.bf16.mxu0 0
  %313 = vmatpush2.bf16.msra.mxu0 0
  %314 = vmatprep.subr.bf16.mxu0 0
  %315 = vmatpush2.bf16.msra.mxu0 0
  %316 = vmatprep.subr.bf16.mxu0 0
  %317 = vmatpush2.bf16.msra.mxu0 0
  %318 = vmatprep.subr.bf16.mxu0 0
  %319 = vmatpush2.bf16.msra.mxu0 0
  %320 = vmatprep.subr.bf16.mxu0 0
  %321 = vmatpush2.bf16.msra.mxu0 0
  %322 = vmatprep.mubr.bf16.mxu0 0
  %323 = vmatmul.mubr.bf16.gmra.mxu0 %v288
  %v324 = vpop.f32.mrf.mxu0
  %v325 = vadd.f32 0.0, %v324
  %v326 = vpop.f32.mrf.mxu0
  %v327 = vpop.f32.mrf.mxu0
  %v328 = vpop.f32.mrf.mxu0
  %329 = vdwg.mxu0
  %v331 = vrot.slane %v325, 6
  %v333 = vadd.f32 %v176, %v331
  %v334 = vxor.u32 %v333, 2147483648
  %v335 = vmul.f32 %v334, 1.442695
  %v336 = vpow.pop %v335
  %v337 = vadd.f32 %v336, 1.0
  %v338 = vrcp.pop %v337
  %v339 = vmul.f32 1.0, %v338
  %v340 = vadd.f32 %v325, %v255
  %v342 = vrot.slane %v340, 6
  %343 = vrot.lane.b32.xlu0 %v342, 64
  %v344 = vpop.permute.xlu0 %343
  %v346 = vmul.f32 %v339, %v344
  %348 = vrot.lane.b32.xlu0 %v346, 64
  %v349 = vpop.permute.xlu0 %348
  %v351 = vadd.f32 %v176, %v349
  %v352 = vtanh.pop %v351
  %v353 = vsub.f32 1.0, %v339
  %355 = vrot.lane.b32.xlu0 %v352, 96
  %v356 = vpop.permute.xlu0 %355
  %v358 = vmul.f32 %v353, %v356
  %v359 = vrot.slane %v276, 6
  %v361 = vmul.f32 %v339, %v359
  %v362 = vadd.f32 %v358, %v361
  %364 = vrot.lane.b32.xlu0 %v362, 96
  %v365 = vpop.permute.xlu0 %364
  %vm367 = vcmask 257026
  %368 = vst.msk [vmem:[#allocation2] sm:$0xc] %vm367, %v365
  %v369 = vpack.c.bf16 %v362, %v362
  %v371 = vrot.slane %v369, 1
  %372 = vrot.lane.b32.xlu0 %v371, 96
  %v373 = vpop.permute.xlu0 %372
  %v375 = vsel %vm137, %v373, 0
  %377 = vmatprep.subr.bf16.mxu0 0
  %378 = vmatpush1.bf16.msra.mxu0 0
  %379 = vmatprep.subr.bf16.mxu0 0
  %380 = vmatpush1.bf16.msra.mxu0 0
  %381 = vmatprep.subr.bf16.mxu0 0
  %382 = vmatpush1.bf16.msra.mxu0 0
  %383 = vmatprep.subr.bf16.mxu0 0
  %384 = vmatpush1.bf16.msra.mxu0 0
  %385 = vmatprep.subr.bf16.mxu0 0
  %386 = vmatpush1.bf16.msra.mxu0 0
  %387 = vmatprep.subr.bf16.mxu0 0
  %388 = vmatpush1.bf16.msra.mxu0 0
  %389 = vmatprep.subr.bf16.mxu0 0
  %390 = vmatpush1.bf16.msra.mxu0 %v196
  %391 = vmatprep.subr.bf16.mxu0 0
  %392 = vmatpush1.bf16.msra.mxu0 %v195
  %393 = vmatprep.subr.bf16.mxu0 0
  %394 = vmatpush2.bf16.msra.mxu0 0
  %395 = vmatprep.subr.bf16.mxu0 0
  %396 = vmatpush2.bf16.msra.mxu0 0
  %397 = vmatprep.subr.bf16.mxu0 0
  %398 = vmatpush2.bf16.msra.mxu0 0
  %399 = vmatprep.subr.bf16.mxu0 0
  %400 = vmatpush2.bf16.msra.mxu0 0
  %401 = vmatprep.subr.bf16.mxu0 0
  %402 = vmatpush2.bf16.msra.mxu0 0
  %403 = vmatprep.subr.bf16.mxu0 0
  %404 = vmatpush2.bf16.msra.mxu0 0
  %405 = vmatprep.subr.bf16.mxu0 0
  %406 = vmatpush2.bf16.msra.mxu0 0
  %407 = vmatprep.subr.bf16.mxu0 0
  %408 = vmatpush2.bf16.msra.mxu0 0
  %409 = vmatprep.mubr.bf16.mxu0 0
  %410 = vmatmul.mubr.bf16.gmra.mxu0 %v375
  %v411 = vpop.f32.mrf.mxu0
  %v412 = vadd.f32 0.0, %v411
  %v413 = vpop.f32.mrf.mxu0
  %v414 = vpop.f32.mrf.mxu0
  %v415 = vpop.f32.mrf.mxu0
  %416 = vdwg.mxu0
  %v418 = vrot.slane %v412, 4
  %v420 = vadd.f32 %v176, %v418
  %v421 = vxor.u32 %v420, 2147483648
  %v422 = vmul.f32 %v421, 1.442695
  %v423 = vpow.pop %v422
  %v424 = vadd.f32 %v423, 1.0
  %v425 = vrcp.pop %v424
  %v426 = vmul.f32 1.0, %v425
  %v427 = vadd.f32 %v412, %v255
  %v429 = vrot.slane %v427, 4
  %430 = vrot.lane.b32.xlu0 %v429, 64
  %v431 = vpop.permute.xlu0 %430
  %v433 = vmul.f32 %v426, %v431
  %435 = vrot.lane.b32.xlu0 %v433, 64
  %v436 = vpop.permute.xlu0 %435
  %v438 = vadd.f32 %v176, %v436
  %v439 = vtanh.pop %v438
  %v440 = vsub.f32 1.0, %v426
  %442 = vrot.lane.b32.xlu0 %v439, 96
  %v443 = vpop.permute.xlu0 %442
  %v445 = vmul.f32 %v440, %v443
  %v446 = vrot.slane %v362, 6
  %v448 = vmul.f32 %v426, %v446
  %v449 = vadd.f32 %v445, %v448
  %451 = vrot.lane.b32.xlu0 %v449, 96
  %v452 = vpop.permute.xlu0 %451
  %vm454 = vcmask 259076
  %455 = vst.msk [vmem:[#allocation2] sm:$0x30] %vm454, %v452
  %v456 = vpack.c.bf16 %v449, %v449
  %v458 = vrot.slane %v456, 2
  %459 = vrot.lane.b32.xlu0 %v458, 96
  %v460 = vpop.permute.xlu0 %459
  %v462 = vsel %vm137, %v460, 0
  %464 = vmatprep.subr.bf16.mxu0 0
  %465 = vmatpush1.bf16.msra.mxu0 0
  %466 = vmatprep.subr.bf16.mxu0 0
  %467 = vmatpush1.bf16.msra.mxu0 0
  %468 = vmatprep.subr.bf16.mxu0 0
  %469 = vmatpush1.bf16.msra.mxu0 0
  %470 = vmatprep.subr.bf16.mxu0 0
  %471 = vmatpush1.bf16.msra.mxu0 0
  %472 = vmatprep.subr.bf16.mxu0 0
  %473 = vmatpush1.bf16.msra.mxu0 0
  %474 = vmatprep.subr.bf16.mxu0 0
  %475 = vmatpush1.bf16.msra.mxu0 0
  %476 = vmatprep.subr.bf16.mxu0 0
  %477 = vmatpush1.bf16.msra.mxu0 %v196
  %478 = vmatprep.subr.bf16.mxu0 0
  %479 = vmatpush1.bf16.msra.mxu0 %v195
  %480 = vmatprep.subr.bf16.mxu0 0
  %481 = vmatpush2.bf16.msra.mxu0 0
  %482 = vmatprep.subr.bf16.mxu0 0
  %483 = vmatpush2.bf16.msra.mxu0 0
  %484 = vmatprep.subr.bf16.mxu0 0
  %485 = vmatpush2.bf16.msra.mxu0 0
  %486 = vmatprep.subr.bf16.mxu0 0
  %487 = vmatpush2.bf16.msra.mxu0 0
  %488 = vmatprep.subr.bf16.mxu0 0
  %489 = vmatpush2.bf16.msra.mxu0 0
  %490 = vmatprep.subr.bf16.mxu0 0
  %491 = vmatpush2.bf16.msra.mxu0 0
  %492 = vmatprep.subr.bf16.mxu0 0
  %493 = vmatpush2.bf16.msra.mxu0 0
  %494 = vmatprep.subr.bf16.mxu0 0
  %495 = vmatpush2.bf16.msra.mxu0 0
  %496 = vmatprep.mubr.bf16.mxu0 0
  %497 = vmatmul.mubr.bf16.gmra.mxu0 %v462
  %v498 = vpop.f32.mrf.mxu0
  %v499 = vadd.f32 0.0, %v498
  %v500 = vpop.f32.mrf.mxu0
  %v501 = vpop.f32.mrf.mxu0
  %v502 = vpop.f32.mrf.mxu0
  %503 = vdwg.mxu0
  %v505 = vrot.slane %v499, 2
  %v507 = vadd.f32 %v176, %v505
  %v508 = vxor.u32 %v507, 2147483648
  %v509 = vmul.f32 %v508, 1.442695
  %v510 = vpow.pop %v509
  %v511 = vadd.f32 %v510, 1.0
  %v512 = vrcp.pop %v511
  %v513 = vmul.f32 1.0, %v512
  %v514 = vadd.f32 %v499, %v255
  %v516 = vrot.slane %v514, 2
  %517 = vrot.lane.b32.xlu0 %v516, 64
  %v518 = vpop.permute.xlu0 %517
  %v520 = vmul.f32 %v513, %v518
  %522 = vrot.lane.b32.xlu0 %v520, 64
  %v523 = vpop.permute.xlu0 %522
  %v525 = vadd.f32 %v176, %v523
  %v526 = vtanh.pop %v525
  %v527 = vsub.f32 1.0, %v513
  %529 = vrot.lane.b32.xlu0 %v526, 96
  %v530 = vpop.permute.xlu0 %529
  %v532 = vmul.f32 %v527, %v530
  %v533 = vrot.slane %v449, 6
  %v535 = vmul.f32 %v513, %v533
  %v536 = vadd.f32 %v532, %v535
  %538 = vrot.lane.b32.xlu0 %v536, 96
  %v539 = vpop.permute.xlu0 %538
  %vm541 = vcmask 261126
  %542 = vst.msk [vmem:[#allocation2] sm:$0xc0] %vm541, %v539
  %v543 = vpack.c.bf16 %v536, %v536
  %v545 = vrot.slane %v543, 3
  %546 = vrot.lane.b32.xlu0 %v545, 96
  %v547 = vpop.permute.xlu0 %546
  %v549 = vsel %vm137, %v547, 0
  %551 = vmatprep.subr.bf16.mxu0 0
  %552 = vmatpush1.bf16.msra.mxu0 0
  %553 = vmatprep.subr.bf16.mxu0 0
  %554 = vmatpush1.bf16.msra.mxu0 0
  %555 = vmatprep.subr.bf16.mxu0 0
  %556 = vmatpush1.bf16.msra.mxu0 0
  %557 = vmatprep.subr.bf16.mxu0 0
  %558 = vmatpush1.bf16.msra.mxu0 0
  %559 = vmatprep.subr.bf16.mxu0 0
  %560 = vmatpush1.bf16.msra.mxu0 0
  %561 = vmatprep.subr.bf16.mxu0 0
  %562 = vmatpush1.bf16.msra.mxu0 0
  %563 = vmatprep.subr.bf16.mxu0 0
  %564 = vmatpush1.bf16.msra.mxu0 %v196
  %565 = vmatprep.subr.bf16.mxu0 0
  %566 = vmatpush1.bf16.msra.mxu0 %v195
  %567 = vmatprep.subr.bf16.mxu0 0
  %568 = vmatpush2.bf16.msra.mxu0 0
  %569 = vmatprep.subr.bf16.mxu0 0
  %570 = vmatpush2.bf16.msra.mxu0 0
  %571 = vmatprep.subr.bf16.mxu0 0
  %572 = vmatpush2.bf16.msra.mxu0 0
  %573 = vmatprep.subr.bf16.mxu0 0
  %574 = vmatpush2.bf16.msra.mxu0 0
  %575 = vmatprep.subr.bf16.mxu0 0
  %576 = vmatpush2.bf16.msra.mxu0 0
  %577 = vmatprep.subr.bf16.mxu0 0
  %578 = vmatpush2.bf16.msra.mxu0 0
  %579 = vmatprep.subr.bf16.mxu0 0
  %580 = vmatpush2.bf16.msra.mxu0 0
  %581 = vmatprep.subr.bf16.mxu0 0
  %582 = vmatpush2.bf16.msra.mxu0 0
  %583 = vmatprep.mubr.bf16.mxu0 0
  %584 = vmatmul.mubr.bf16.gmra.mxu0 %v549
  %v585 = vpop.f32.mrf.mxu0
  %v586 = vadd.f32 0.0, %v585
  %v587 = vpop.f32.mrf.mxu0
  %v588 = vpop.f32.mrf.mxu0
  %v589 = vpop.f32.mrf.mxu0
  %590 = vdwg.mxu0
  %v591 = vadd.f32 %v179, %v586
  %v592 = vxor.u32 %v591, 2147483648
  %v593 = vmul.f32 %v592, 1.442695
  %v594 = vpow.pop %v593
  %v595 = vadd.f32 %v594, 1.0
  %v596 = vrcp.pop %v595
  %v597 = vmul.f32 1.0, %v596
  %v598 = vadd.f32 %v586, %v255
  %600 = vrot.lane.b32.xlu0 %v598, 64
  %v601 = vpop.permute.xlu0 %600
  %v603 = vmul.f32 %v597, %v601
  %605 = vrot.lane.b32.xlu0 %v603, 64
  %v606 = vpop.permute.xlu0 %605
  %v608 = vadd.f32 %v179, %v606
  %v609 = vtanh.pop %v608
  %v610 = vsub.f32 1.0, %v597
  %612 = vrot.lane.b32.xlu0 %v609, 96
  %v613 = vpop.permute.xlu0 %612
  %v615 = vmul.f32 %v610, %v613
  %v616 = vrot.slane %v536, 6
  %v618 = vmul.f32 %v597, %v616
  %v619 = vadd.f32 %v615, %v618
  %621 = vrot.lane.b32.xlu0 %v619, 96
  %v622 = vpop.permute.xlu0 %621
  %624 = vst.msk [vmem:[#allocation2 + $0x8] sm:$0x3] %vm281, %v622
  %v625 = vpack.c.bf16 %v619, %v619
  %627 = vrot.lane.b32.xlu0 %v625, 96
  %v628 = vpop.permute.xlu0 %627
  %v630 = vsel %vm137, %v628, 0
  %632 = vmatprep.subr.bf16.mxu0 0
  %633 = vmatpush1.bf16.msra.mxu0 0
  %634 = vmatprep.subr.bf16.mxu0 0
  %635 = vmatpush1.bf16.msra.mxu0 0
  %636 = vmatprep.subr.bf16.mxu0 0
  %637 = vmatpush1.bf16.msra.mxu0 0
  %638 = vmatprep.subr.bf16.mxu0 0
  %639 = vmatpush1.bf16.msra.mxu0 0
  %640 = vmatprep.subr.bf16.mxu0 0
  %641 = vmatpush1.bf16.msra.mxu0 0
  %642 = vmatprep.subr.bf16.mxu0 0
  %643 = vmatpush1.bf16.msra.mxu0 0
  %644 = vmatprep.subr.bf16.mxu0 0
  %645 = vmatpush1.bf16.msra.mxu0 %v196
  %646 = vmatprep.subr.bf16.mxu0 0
  %647 = vmatpush1.bf16.msra.mxu0 %v195
  %648 = vmatprep.subr.bf16.mxu0 0
  %649 = vmatpush2.bf16.msra.mxu0 0
  %650 = vmatprep.subr.bf16.mxu0 0
  %651 = vmatpush2.bf16.msra.mxu0 0
  %652 = vmatprep.subr.bf16.mxu0 0
  %653 = vmatpush2.bf16.msra.mxu0 0
  %654 = vmatprep.subr.bf16.mxu0 0
  %655 = vmatpush2.bf16.msra.mxu0 0
  %656 = vmatprep.subr.bf16.mxu0 0
  %657 = vmatpush2.bf16.msra.mxu0 0
  %658 = vmatprep.subr.bf16.mxu0 0
  %659 = vmatpush2.bf16.msra.mxu0 0
  %660 = vmatprep.subr.bf16.mxu0 0
  %661 = vmatpush2.bf16.msra.mxu0 0
  %662 = vmatprep.subr.bf16.mxu0 0
  %663 = vmatpush2.bf16.msra.mxu0 0
  %664 = vmatprep.mubr.bf16.mxu0 0
  %665 = vmatmul.mubr.bf16.gmra.mxu0 %v630
  %v666 = vpop.f32.mrf.mxu0
  %v667 = vadd.f32 0.0, %v666
  %v668 = vpop.f32.mrf.mxu0
  %v669 = vpop.f32.mrf.mxu0
  %v670 = vpop.f32.mrf.mxu0
  %671 = vdwg.mxu0
  %v673 = vrot.slane %v667, 6
  %v675 = vadd.f32 %v179, %v673
  %v676 = vxor.u32 %v675, 2147483648
  %v677 = vmul.f32 %v676, 1.442695
  %v678 = vpow.pop %v677
  %v679 = vadd.f32 %v678, 1.0
  %v680 = vrcp.pop %v679
  %v681 = vmul.f32 1.0, %v680
  %v682 = vadd.f32 %v667, %v255
  %v684 = vrot.slane %v682, 6
  %685 = vrot.lane.b32.xlu0 %v684, 64
  %v686 = vpop.permute.xlu0 %685
  %v688 = vmul.f32 %v681, %v686
  %690 = vrot.lane.b32.xlu0 %v688, 64
  %v691 = vpop.permute.xlu0 %690
  %v693 = vadd.f32 %v179, %v691
  %v694 = vtanh.pop %v693
  %v695 = vsub.f32 1.0, %v681
  %697 = vrot.lane.b32.xlu0 %v694, 96
  %v698 = vpop.permute.xlu0 %697
  %v700 = vmul.f32 %v695, %v698
  %v701 = vrot.slane %v619, 6
  %v703 = vmul.f32 %v681, %v701
  %v704 = vadd.f32 %v700, %v703
  %706 = vrot.lane.b32.xlu0 %v704, 96
  %v707 = vpop.permute.xlu0 %706
  %709 = vst.msk [vmem:[#allocation2 + $0x8] sm:$0xc] %vm367, %v707
  %v710 = vpack.c.bf16 %v704, %v704
  %v712 = vrot.slane %v710, 1
  %713 = vrot.lane.b32.xlu0 %v712, 96
  %v714 = vpop.permute.xlu0 %713
  %v716 = vsel %vm137, %v714, 0
  %718 = vmatprep.subr.bf16.mxu0 0
  %719 = vmatpush1.bf16.msra.mxu0 0
  %720 = vmatprep.subr.bf16.mxu0 0
  %721 = vmatpush1.bf16.msra.mxu0 0
  %722 = vmatprep.subr.bf16.mxu0 0
  %723 = vmatpush1.bf16.msra.mxu0 0
  %724 = vmatprep.subr.bf16.mxu0 0
  %725 = vmatpush1.bf16.msra.mxu0 0
  %726 = vmatprep.subr.bf16.mxu0 0
  %727 = vmatpush1.bf16.msra.mxu0 0
  %728 = vmatprep.subr.bf16.mxu0 0
  %729 = vmatpush1.bf16.msra.mxu0 0
  %730 = vmatprep.subr.bf16.mxu0 0
  %731 = vmatpush1.bf16.msra.mxu0 %v196
  %732 = vmatprep.subr.bf16.mxu0 0
  %733 = vmatpush1.bf16.msra.mxu0 %v195
  %734 = vmatprep.subr.bf16.mxu0 0
  %735 = vmatpush2.bf16.msra.mxu0 0
  %736 = vmatprep.subr.bf16.mxu0 0
  %737 = vmatpush2.bf16.msra.mxu0 0
  %738 = vmatprep.subr.bf16.mxu0 0
  %739 = vmatpush2.bf16.msra.mxu0 0
  %740 = vmatprep.subr.bf16.mxu0 0
  %741 = vmatpush2.bf16.msra.mxu0 0
  %742 = vmatprep.subr.bf16.mxu0 0
  %743 = vmatpush2.bf16.msra.mxu0 0
  %744 = vmatprep.subr.bf16.mxu0 0
  %745 = vmatpush2.bf16.msra.mxu0 0
  %746 = vmatprep.subr.bf16.mxu0 0
  %747 = vmatpush2.bf16.msra.mxu0 0
  %748 = vmatprep.subr.bf16.mxu0 0
  %749 = vmatpush2.bf16.msra.mxu0 0
  %750 = vmatprep.mubr.bf16.mxu0 0
  %751 = vmatmul.mubr.bf16.gmra.mxu0 %v716
  %v752 = vpop.f32.mrf.mxu0
  %v753 = vadd.f32 0.0, %v752
  %v754 = vpop.f32.mrf.mxu0
  %v755 = vpop.f32.mrf.mxu0
  %v756 = vpop.f32.mrf.mxu0
  %757 = vdwg.mxu0
  %v759 = vrot.slane %v753, 4
  %v761 = vadd.f32 %v179, %v759
  %v762 = vxor.u32 %v761, 2147483648
  %v763 = vmul.f32 %v762, 1.442695
  %v764 = vpow.pop %v763
  %v765 = vadd.f32 %v764, 1.0
  %v766 = vrcp.pop %v765
  %v767 = vmul.f32 1.0, %v766
  %v768 = vadd.f32 %v753, %v255
  %v770 = vrot.slane %v768, 4
  %771 = vrot.lane.b32.xlu0 %v770, 64
  %v772 = vpop.permute.xlu0 %771
  %v774 = vmul.f32 %v767, %v772
  %776 = vrot.lane.b32.xlu0 %v774, 64
  %v777 = vpop.permute.xlu0 %776
  %v779 = vadd.f32 %v179, %v777
  %v780 = vtanh.pop %v779
  %v781 = vsub.f32 1.0, %v767
  %783 = vrot.lane.b32.xlu0 %v780, 96
  %v784 = vpop.permute.xlu0 %783
  %v786 = vmul.f32 %v781, %v784
  %v787 = vrot.slane %v704, 6
  %v789 = vmul.f32 %v767, %v787
  %v790 = vadd.f32 %v786, %v789
  %792 = vrot.lane.b32.xlu0 %v790, 96
  %v793 = vpop.permute.xlu0 %792
  %795 = vst.msk [vmem:[#allocation2 + $0x8] sm:$0x30] %vm454, %v793
  %v796 = vpack.c.bf16 %v790, %v790
  %v798 = vrot.slane %v796, 2
  %799 = vrot.lane.b32.xlu0 %v798, 96
  %v800 = vpop.permute.xlu0 %799
  %v802 = vsel %vm137, %v800, 0
  %804 = vmatprep.subr.bf16.mxu0 0
  %805 = vmatpush1.bf16.msra.mxu0 0
  %806 = vmatprep.subr.bf16.mxu0 0
  %807 = vmatpush1.bf16.msra.mxu0 0
  %808 = vmatprep.subr.bf16.mxu0 0
  %809 = vmatpush1.bf16.msra.mxu0 0
  %810 = vmatprep.subr.bf16.mxu0 0
  %811 = vmatpush1.bf16.msra.mxu0 0
  %812 = vmatprep.subr.bf16.mxu0 0
  %813 = vmatpush1.bf16.msra.mxu0 0
  %814 = vmatprep.subr.bf16.mxu0 0
  %815 = vmatpush1.bf16.msra.mxu0 0
  %816 = vmatprep.subr.bf16.mxu0 0
  %817 = vmatpush1.bf16.msra.mxu0 %v196
  %818 = vmatprep.subr.bf16.mxu0 0
  %819 = vmatpush1.bf16.msra.mxu0 %v195
  %820 = vmatprep.subr.bf16.mxu0 0
  %821 = vmatpush2.bf16.msra.mxu0 0
  %822 = vmatprep.subr.bf16.mxu0 0
  %823 = vmatpush2.bf16.msra.mxu0 0
  %824 = vmatprep.subr.bf16.mxu0 0
  %825 = vmatpush2.bf16.msra.mxu0 0
  %826 = vmatprep.subr.bf16.mxu0 0
  %827 = vmatpush2.bf16.msra.mxu0 0
  %828 = vmatprep.subr.bf16.mxu0 0
  %829 = vmatpush2.bf16.msra.mxu0 0
  %830 = vmatprep.subr.bf16.mxu0 0
  %831 = vmatpush2.bf16.msra.mxu0 0
  %832 = vmatprep.subr.bf16.mxu0 0
  %833 = vmatpush2.bf16.msra.mxu0 0
  %834 = vmatprep.subr.bf16.mxu0 0
  %835 = vmatpush2.bf16.msra.mxu0 0
  %836 = vmatprep.mubr.bf16.mxu0 0
  %837 = vmatmul.mubr.bf16.gmra.mxu0 %v802
  %v838 = vpop.f32.mrf.mxu0
  %v839 = vadd.f32 0.0, %v838
  %v840 = vpop.f32.mrf.mxu0
  %v841 = vpop.f32.mrf.mxu0
  %v842 = vpop.f32.mrf.mxu0
  %843 = vdwg.mxu0
  %v845 = vrot.slane %v839, 2
  %v847 = vadd.f32 %v179, %v845
  %v848 = vxor.u32 %v847, 2147483648
  %v849 = vmul.f32 %v848, 1.442695
  %v850 = vpow.pop %v849
  %v851 = vadd.f32 %v850, 1.0
  %v852 = vrcp.pop %v851
  %v853 = vmul.f32 1.0, %v852
  %v854 = vadd.f32 %v839, %v255
  %v856 = vrot.slane %v854, 2
  %857 = vrot.lane.b32.xlu0 %v856, 64
  %v858 = vpop.permute.xlu0 %857
  %v860 = vmul.f32 %v853, %v858
  %862 = vrot.lane.b32.xlu0 %v860, 64
  %v863 = vpop.permute.xlu0 %862
  %v865 = vadd.f32 %v179, %v863
  %v866 = vtanh.pop %v865
  %v867 = vsub.f32 1.0, %v853
  %869 = vrot.lane.b32.xlu0 %v866, 96
  %v870 = vpop.permute.xlu0 %869
  %v872 = vmul.f32 %v867, %v870
  %v873 = vrot.slane %v790, 6
  %v875 = vmul.f32 %v853, %v873
  %v876 = vadd.f32 %v872, %v875
  %878 = vrot.lane.b32.xlu0 %v876, 96
  %v879 = vpop.permute.xlu0 %878
  %881 = vst.msk [vmem:[#allocation2 + $0x8] sm:$0xc0] %vm541, %v879
  %v882 = vld [vmem:[#allocation2] sm:$0xff]
  %v883 = vld [vmem:[#allocation2 + $0x8] sm:$0xff]
  %v884 = vld [vmem:[%s7] sm:$0xf]
  %v885 = vld [vmem:[%s7 + $0x4] sm:$0xf]
  %v886 = vld [vmem:[%s7 + $0x8] sm:$0xf]
  %v887 = vld [vmem:[%s7 + $0xc] sm:$0xf]
  %v888 = vld [vmem:[%s8] sm:$0xf]
  %v889 = vld [vmem:[%s8 + $0x4] sm:$0xf]
  %v890 = vld [vmem:[%s8 + $0x8] sm:$0xf]
  %v891 = vld [vmem:[%s8 + $0xc] sm:$0xf]
  %v892 = vld [vmem:[%s8 + $0x10] sm:$0xf]
  %v893 = vld [vmem:[%s8 + $0x14] sm:$0xf]
  %v894 = vld [vmem:[%s8 + $0x18] sm:$0xf]
  %v895 = vld [vmem:[%s8 + $0x1c] sm:$0xf]
  %v896 = vld [vmem:[%s8 + $0x20] sm:$0xf]
  %v897 = vld [vmem:[%s8 + $0x24] sm:$0xf]
  %v898 = vld [vmem:[%s8 + $0x28] sm:$0xf]
  %v899 = vld [vmem:[%s8 + $0x2c] sm:$0xf]
  %v900 = vld [vmem:[%s8 + $0x30] sm:$0xf]
  %v901 = vld [vmem:[%s8 + $0x34] sm:$0xf]
  %v902 = vld [vmem:[%s8 + $0x38] sm:$0xf]
  %v903 = vld [vmem:[%s8 + $0x3c] sm:$0xf]
  %v904 = vld [vmem:[%s9] sm:$0x1]
  %v905 = vld [vmem:[%s10] sm:$0x1]
  %v906 = vld [vmem:[%s11] sm:$0x1]
  %v907 = vld [vmem:[%s12] sm:$0xf]
  %v908 = vld [vmem:[%s12 + $0x4] sm:$0xf]
  %v909 = vld [vmem:[%s12 + $0x8] sm:$0xf]
  %v910 = vld [vmem:[%s12 + $0xc] sm:$0xf]
  %v911 = vld [vmem:[%s13] sm:$0x1]
  %v912 = vpack.c.bf16 %v883, %v882
  %v917 = vunpack.c.l.b16 %v884
  %v918 = vunpack.c.l.b16 %v885
  %v919 = vunpack.c.l.b16 %v886
  %v920 = vunpack.c.l.b16 %v887
  %v921 = vpack.c.b16 %v918, %v917
  %v922 = vpack.c.b16 %v920, %v919
  %v926 = vsel %vm137, %v912, 0
  %928 = vmatprep.subr.bf16.mxu0 0
  %929 = vmatpush1.bf16.msra.mxu0 0
  %930 = vmatprep.subr.bf16.mxu0 0
  %931 = vmatpush1.bf16.msra.mxu0 0
  %932 = vmatprep.subr.bf16.mxu0 0
  %933 = vmatpush1.bf16.msra.mxu0 0
  %934 = vmatprep.subr.bf16.mxu0 0
  %935 = vmatpush1.bf16.msra.mxu0 0
  %936 = vmatprep.subr.bf16.mxu0 0
  %937 = vmatpush1.bf16.msra.mxu0 0
  %938 = vmatprep.subr.bf16.mxu0 0
  %939 = vmatpush1.bf16.msra.mxu0 0
  %940 = vmatprep.subr.bf16.mxu0 0
  %941 = vmatpush1.bf16.msra.mxu0 %v922
  %942 = vmatprep.subr.bf16.mxu0 0
  %943 = vmatpush1.bf16.msra.mxu0 %v921
  %944 = vmatprep.subr.bf16.mxu0 0
  %945 = vmatpush2.bf16.msra.mxu0 0
  %946 = vmatprep.subr.bf16.mxu0 0
  %947 = vmatpush2.bf16.msra.mxu0 0
  %948 = vmatprep.subr.bf16.mxu0 0
  %949 = vmatpush2.bf16.msra.mxu0 0
  %950 = vmatprep.subr.bf16.mxu0 0
  %951 = vmatpush2.bf16.msra.mxu0 0
  %952 = vmatprep.subr.bf16.mxu0 0
  %953 = vmatpush2.bf16.msra.mxu0 0
  %954 = vmatprep.subr.bf16.mxu0 0
  %955 = vmatpush2.bf16.msra.mxu0 0
  %956 = vmatprep.subr.bf16.mxu0 0
  %957 = vmatpush2.bf16.msra.mxu0 0
  %958 = vmatprep.subr.bf16.mxu0 0
  %959 = vmatpush2.bf16.msra.mxu0 0
  %960 = vmatprep.mubr.bf16.mxu0 0
  %961 = vmatmul.mubr.bf16.gmra.mxu0 %v926
  %v962 = vpop.f32.mrf.mxu0
  %v963 = vadd.f32 0.0, %v962
  %v964 = vpop.f32.mrf.mxu0
  %v965 = vpop.f32.mrf.mxu0
  %v966 = vadd.f32 0.0, %v965
  %v967 = vpop.f32.mrf.mxu0
  %968 = vdwg.mxu0
  %v970 = vlaneseq
  %v971 = vshrl.u32 %v970, 7
  %v972 = vsub.s32 0, %v971
  %v973 = vrot.slane %v904, %v972
  %v975 = vadd.f32 %v973, %v963
  %v976 = vadd.f32 %v973, %v966
  %v977 = vxor.u32 %v975, 2147483648
  %v978 = vxor.u32 %v976, 2147483648
  %v979 = vmul.f32 %v977, 1.442695
  %v980 = vpow.pop %v979
  %v981 = vmul.f32 %v978, 1.442695
  %v982 = vpow.pop %v981
  %v983 = vadd.f32 %v980, 1.0
  %v984 = vadd.f32 %v982, 1.0
  %v985 = vrcp.pop %v983
  %v986 = vmul.f32 1.0, %v985
  %v987 = vrcp.pop %v984
  %v988 = vmul.f32 1.0, %v987
  %v990 = vlaneseq
  %v991 = vshrl.u32 %v990, 7
  %v992 = vsub.s32 0, %v991
  %v993 = vrot.slane %v905, %v992
  %994 = vrot.lane.b32.xlu0 %v993, 64
  %v995 = vpop.permute.xlu0 %994
  %v997 = vadd.f32 %v963, %v995
  %v998 = vadd.f32 %v966, %v995
  %1001 = vrot.lane.b32.xlu0 %v997, 64
  %v1002 = vpop.permute.xlu0 %1001
  %1003 = vrot.lane.b32.xlu0 %v998, 64
  %v1004 = vpop.permute.xlu0 %1003
  %v1007 = vmul.f32 %v986, %v1002
  %v1008 = vmul.f32 %v988, %v1004
  %1011 = vrot.lane.b32.xlu0 %v1007, 64
  %v1012 = vpop.permute.xlu0 %1011
  %1013 = vrot.lane.b32.xlu0 %v1008, 64
  %v1014 = vpop.permute.xlu0 %1013
  %v1017 = vadd.f32 %v973, %v1012
  %v1018 = vadd.f32 %v973, %v1014
  %v1019 = vtanh.pop %v1017
  %v1020 = vtanh.pop %v1018
  %v1021 = vsub.f32 1.0, %v986
  %v1022 = vsub.f32 1.0, %v988
  %1025 = vrot.lane.b32.xlu0 %v1019, 96
  %v1026 = vpop.permute.xlu0 %1025
  %1027 = vrot.lane.b32.xlu0 %v1020, 96
  %v1028 = vpop.permute.xlu0 %1027
  %v1031 = vmul.f32 %v1021, %v1026
  %v1032 = vmul.f32 %v1022, %v1028
  %1035 = vrot.lane.b32.xlu0 %v882, 32
  %v1036 = vpop.permute.xlu0 %1035
  %1037 = vrot.lane.b32.xlu0 %v883, 32
  %v1038 = vpop.permute.xlu0 %1037
  %v1041 = vmul.f32 %v986, %v1036
  %v1042 = vmul.f32 %v988, %v1038
  %v1043 = vadd.f32 %v1031, %v1041
  %v1044 = vadd.f32 %v1032, %v1042
  %v1045 = vpack.c.bf16 %v1044, %v1043
  %v1047 = vlaneseq
  %v1048 = vshrl.u32 %v1047, 7
  %v1049 = vsub.s32 0, %v1048
  %v1050 = vrot.slane %v911, %v1049
  %1053 = vrot.lane.b32.xlu0 %v1045, 96
  %v1054 = vpop.permute.xlu0 %1053
  %v1059 = vunpack.c.l.b16 %v907
  %v1060 = vunpack.c.l.b16 %v908
  %v1061 = vunpack.c.l.b16 %v909
  %v1062 = vunpack.c.l.b16 %v910
  %v1063 = vpack.c.b16 %v1060, %v1059
  %v1064 = vpack.c.b16 %v1062, %v1061
  %v1068 = vsel %vm137, %v1054, 0
  %1070 = vmatprep.subr.bf16.mxu0 0
  %1071 = vmatpush1.bf16.msra.mxu0 0
  %1072 = vmatprep.subr.bf16.mxu0 0
  %1073 = vmatpush1.bf16.msra.mxu0 0
  %1074 = vmatprep.subr.bf16.mxu0 0
  %1075 = vmatpush1.bf16.msra.mxu0 0
  %1076 = vmatprep.subr.bf16.mxu0 0
  %1077 = vmatpush1.bf16.msra.mxu0 0
  %1078 = vmatprep.subr.bf16.mxu0 0
  %1079 = vmatpush1.bf16.msra.mxu0 0
  %1080 = vmatprep.subr.bf16.mxu0 0
  %1081 = vmatpush1.bf16.msra.mxu0 0
  %1082 = vmatprep.subr.bf16.mxu0 0
  %1083 = vmatpush1.bf16.msra.mxu0 %v1064
  %1084 = vmatprep.subr.bf16.mxu0 0
  %1085 = vmatpush1.bf16.msra.mxu0 %v1063
  %1086 = vmatprep.subr.bf16.mxu0 0
  %1087 = vmatpush2.bf16.msra.mxu0 0
  %1088 = vmatprep.subr.bf16.mxu0 0
  %1089 = vmatpush2.bf16.msra.mxu0 0
  %1090 = vmatprep.subr.bf16.mxu0 0
  %1091 = vmatpush2.bf16.msra.mxu0 0
  %1092 = vmatprep.subr.bf16.mxu0 0
  %1093 = vmatpush2.bf16.msra.mxu0 0
  %1094 = vmatprep.subr.bf16.mxu0 0
  %1095 = vmatpush2.bf16.msra.mxu0 0
  %1096 = vmatprep.subr.bf16.mxu0 0
  %1097 = vmatpush2.bf16.msra.mxu0 0
  %1098 = vmatprep.subr.bf16.mxu0 0
  %1099 = vmatpush2.bf16.msra.mxu0 0
  %1100 = vmatprep.subr.bf16.mxu0 0
  %1101 = vmatpush2.bf16.msra.mxu0 0
  %1102 = vmatprep.mubr.bf16.mxu0 0
  %1103 = vmatmul.mubr.bf16.gmra.mxu0 %v1068
  %v1104 = vpop.f32.mrf.mxu0
  %v1105 = vadd.f32 %v1050, %v1104
  %v1106 = vpop.f32.mrf.mxu0
  %v1107 = vpop.f32.mrf.mxu0
  %v1108 = vadd.f32 %v1050, %v1107
  %v1109 = vpop.f32.mrf.mxu0
  %1110 = vdwg.mxu0
  %1111 = vst.msk [vmem:[%s14] sm:$0xff] %vm59, %v1105
  %1112 = vst.msk [vmem:[%s14 + $0x8] sm:$0xff] %vm59, %v1108
  %1113 = vmatprep.subr.bf16.mxu0 0
  %1114 = vmatpush1.bf16.msra.mxu0 0
  %1115 = vmatprep.subr.bf16.mxu0 0
  %1116 = vmatpush1.bf16.msra.mxu0 0
  %1117 = vmatprep.subr.bf16.mxu0 0
  %1118 = vmatpush1.bf16.msra.mxu0 0
  %1119 = vmatprep.subr.bf16.mxu0 0
  %1120 = vmatpush1.bf16.msra.mxu0 0
  %1121 = vmatprep.subr.bf16.mxu0 0
  %1122 = vmatpush1.bf16.msra.mxu0 0
  %1123 = vmatprep.subr.bf16.mxu0 0
  %1124 = vmatpush1.bf16.msra.mxu0 0
  %1125 = vmatprep.subr.bf16.mxu0 0
  %1126 = vmatpush1.bf16.msra.mxu0 %v922
  %1127 = vmatprep.subr.bf16.mxu0 0
  %1128 = vmatpush1.bf16.msra.mxu0 %v921
  %1129 = vmatprep.subr.bf16.mxu0 0
  %1130 = vmatpush2.bf16.msra.mxu0 0
  %1131 = vmatprep.subr.bf16.mxu0 0
  %1132 = vmatpush2.bf16.msra.mxu0 0
  %1133 = vmatprep.subr.bf16.mxu0 0
  %1134 = vmatpush2.bf16.msra.mxu0 0
  %1135 = vmatprep.subr.bf16.mxu0 0
  %1136 = vmatpush2.bf16.msra.mxu0 0
  %1137 = vmatprep.subr.bf16.mxu0 0
  %1138 = vmatpush2.bf16.msra.mxu0 0
  %1139 = vmatprep.subr.bf16.mxu0 0
  %1140 = vmatpush2.bf16.msra.mxu0 0
  %1141 = vmatprep.subr.bf16.mxu0 0
  %1142 = vmatpush2.bf16.msra.mxu0 0
  %1143 = vmatprep.subr.bf16.mxu0 0
  %1144 = vmatpush2.bf16.msra.mxu0 0
  %1145 = vmatprep.mubr.bf16.mxu0 0
  %1146 = vmatmul.mubr.bf16.gmra.mxu0 %v1068
  %v1147 = vpop.f32.mrf.mxu0
  %v1148 = vadd.f32 0.0, %v1147
  %v1149 = vpop.f32.mrf.mxu0
  %v1150 = vpop.f32.mrf.mxu0
  %v1151 = vadd.f32 0.0, %v1150
  %v1152 = vpop.f32.mrf.mxu0
  %1153 = vdwg.mxu0
  %v1155 = vlaneseq
  %v1156 = vshrl.u32 %v1155, 7
  %v1157 = vsub.s32 0, %v1156
  %v1158 = vrot.slane %v906, %v1157
  %v1160 = vadd.f32 %v1148, %v1158
  %v1161 = vadd.f32 %v1151, %v1158
  %v1162 = vmax.f32 %v1160, 0.0
  %v1163 = vmax.f32 %v1161, 0.0
  %v1164 = vpack.c.bf16 %v1163, %v1162
  %v1181 = vunpack.c.l.b16 %v888
  %v1182 = vunpack.c.l.b16 %v889
  %v1183 = vunpack.c.l.b16 %v890
  %v1184 = vunpack.c.l.b16 %v891
  %v1185 = vunpack.c.l.b16 %v892
  %v1186 = vunpack.c.l.b16 %v893
  %v1187 = vunpack.c.l.b16 %v894
  %v1188 = vunpack.c.l.b16 %v895
  %v1189 = vunpack.c.l.b16 %v896
  %v1190 = vunpack.c.l.b16 %v897
  %v1191 = vunpack.c.l.b16 %v898
  %v1192 = vunpack.c.l.b16 %v899
  %v1193 = vunpack.c.l.b16 %v900
  %v1194 = vunpack.c.l.b16 %v901
  %v1195 = vunpack.c.l.b16 %v902
  %v1196 = vunpack.c.l.b16 %v903
  %v1197 = vpack.c.b16 %v1182, %v1181
  %v1198 = vpack.c.b16 %v1184, %v1183
  %v1199 = vpack.c.b16 %v1186, %v1185
  %v1200 = vpack.c.b16 %v1188, %v1187
  %v1201 = vpack.c.b16 %v1190, %v1189
  %v1202 = vpack.c.b16 %v1192, %v1191
  %v1203 = vpack.c.b16 %v1194, %v1193
  %v1204 = vpack.c.b16 %v1196, %v1195
  %1213 = vmatprep.subr.bf16.mxu0 0
  %1214 = vmatpush1.bf16.msra.mxu0 %v1204
  %1215 = vmatprep.subr.bf16.mxu0 0
  %1216 = vmatpush1.bf16.msra.mxu0 %v1203
  %1217 = vmatprep.subr.bf16.mxu0 0
  %1218 = vmatpush1.bf16.msra.mxu0 %v1202
  %1219 = vmatprep.subr.bf16.mxu0 0
  %1220 = vmatpush1.bf16.msra.mxu0 %v1201
  %1221 = vmatprep.subr.bf16.mxu0 0
  %1222 = vmatpush1.bf16.msra.mxu0 %v1200
  %1223 = vmatprep.subr.bf16.mxu0 0
  %1224 = vmatpush1.bf16.msra.mxu0 %v1199
  %1225 = vmatprep.subr.bf16.mxu0 0
  %1226 = vmatpush1.bf16.msra.mxu0 %v1198
  %1227 = vmatprep.subr.bf16.mxu0 0
  %1228 = vmatpush1.bf16.msra.mxu0 %v1197
  %1229 = vmatprep.subr.bf16.mxu0 0
  %1230 = vmatpush2.bf16.msra.mxu0 0
  %1231 = vmatprep.subr.bf16.mxu0 0
  %1232 = vmatpush2.bf16.msra.mxu0 0
  %1233 = vmatprep.subr.bf16.mxu0 0
  %1234 = vmatpush2.bf16.msra.mxu0 0
  %1235 = vmatprep.subr.bf16.mxu0 0
  %1236 = vmatpush2.bf16.msra.mxu0 0
  %1237 = vmatprep.subr.bf16.mxu0 0
  %1238 = vmatpush2.bf16.msra.mxu0 0
  %1239 = vmatprep.subr.bf16.mxu0 0
  %1240 = vmatpush2.bf16.msra.mxu0 0
  %1241 = vmatprep.subr.bf16.mxu0 0
  %1242 = vmatpush2.bf16.msra.mxu0 0
  %1243 = vmatprep.subr.bf16.mxu0 0
  %1244 = vmatpush2.bf16.msra.mxu0 0
  %1245 = vmatprep.mubr.bf16.mxu0 0
  %1246 = vmatmul.mubr.bf16.gmra.mxu0 %v1164
  %v1247 = vpop.f32.mrf.mxu0
  %v1248 = vadd.f32 %v973, %v1247
  %v1249 = vpop.f32.mrf.mxu0
  %v1250 = vpop.f32.mrf.mxu0
  %v1251 = vadd.f32 %v973, %v1250
  %v1252 = vpop.f32.mrf.mxu0
  %1253 = vdwg.mxu0
  %v1254 = vadd.f32 %v1248, %v1148
  %v1255 = vadd.f32 %v1251, %v1151
  %v1256 = vxor.u32 %v1254, 2147483648
  %v1257 = vxor.u32 %v1255, 2147483648
  %v1258 = vmul.f32 %v1256, 1.442695
  %v1259 = vpow.pop %v1258
  %v1260 = vmul.f32 %v1257, 1.442695
  %v1261 = vpow.pop %v1260
  %v1262 = vadd.f32 %v1259, 1.0
  %v1263 = vadd.f32 %v1261, 1.0
  %v1264 = vrcp.pop %v1262
  %v1265 = vmul.f32 1.0, %v1264
  %v1266 = vrcp.pop %v1263
  %v1267 = vmul.f32 1.0, %v1266
  %v1268 = vadd.f32 %v1148, %v995
  %v1269 = vadd.f32 %v1151, %v995
  %1272 = vrot.lane.b32.xlu0 %v1268, 64
  %v1273 = vpop.permute.xlu0 %1272
  %1274 = vrot.lane.b32.xlu0 %v1269, 64
  %v1275 = vpop.permute.xlu0 %1274
  %v1278 = vmul.f32 %v1265, %v1273
  %v1279 = vmul.f32 %v1267, %v1275
  %1282 = vrot.lane.b32.xlu0 %v1278, 64
  %v1283 = vpop.permute.xlu0 %1282
  %1284 = vrot.lane.b32.xlu0 %v1279, 64
  %v1285 = vpop.permute.xlu0 %1284
  %v1288 = vadd.f32 %v1248, %v1283
  %v1289 = vadd.f32 %v1251, %v1285
  %v1290 = vtanh.pop %v1288
  %v1291 = vtanh.pop %v1289
  %v1292 = vsub.f32 1.0, %v1265
  %v1293 = vsub.f32 1.0, %v1267
  %1296 = vrot.lane.b32.xlu0 %v1290, 96
  %v1297 = vpop.permute.xlu0 %1296
  %1298 = vrot.lane.b32.xlu0 %v1291, 96
  %v1299 = vpop.permute.xlu0 %1298
  %v1302 = vmul.f32 %v1292, %v1297
  %v1303 = vmul.f32 %v1293, %v1299
  %v1304 = vmul.f32 %v1265, %v1043
  %v1305 = vmul.f32 %v1267, %v1044
  %v1306 = vadd.f32 %v1302, %v1304
  %v1307 = vadd.f32 %v1303, %v1305
  %v1308 = vpack.c.bf16 %v1307, %v1306
  %1310 = vrot.lane.b32.xlu0 %v1308, 96
  %v1311 = vpop.permute.xlu0 %1310
  %v1313 = vsel %vm137, %v1311, 0
  %1315 = vmatprep.subr.bf16.mxu0 0
  %1316 = vmatpush1.bf16.msra.mxu0 0
  %1317 = vmatprep.subr.bf16.mxu0 0
  %1318 = vmatpush1.bf16.msra.mxu0 0
  %1319 = vmatprep.subr.bf16.mxu0 0
  %1320 = vmatpush1.bf16.msra.mxu0 0
  %1321 = vmatprep.subr.bf16.mxu0 0
  %1322 = vmatpush1.bf16.msra.mxu0 0
  %1323 = vmatprep.subr.bf16.mxu0 0
  %1324 = vmatpush1.bf16.msra.mxu0 0
  %1325 = vmatprep.subr.bf16.mxu0 0
  %1326 = vmatpush1.bf16.msra.mxu0 0
  %1327 = vmatprep.subr.bf16.mxu0 0
  %1328 = vmatpush1.bf16.msra.mxu0 %v1064
  %1329 = vmatprep.subr.bf16.mxu0 0
  %1330 = vmatpush1.bf16.msra.mxu0 %v1063
  %1331 = vmatprep.subr.bf16.mxu0 0
  %1332 = vmatpush2.bf16.msra.mxu0 0
  %1333 = vmatprep.subr.bf16.mxu0 0
  %1334 = vmatpush2.bf16.msra.mxu0 0
  %1335 = vmatprep.subr.bf16.mxu0 0
  %1336 = vmatpush2.bf16.msra.mxu0 0
  %1337 = vmatprep.subr.bf16.mxu0 0
  %1338 = vmatpush2.bf16.msra.mxu0 0
  %1339 = vmatprep.subr.bf16.mxu0 0
  %1340 = vmatpush2.bf16.msra.mxu0 0
  %1341 = vmatprep.subr.bf16.mxu0 0
  %1342 = vmatpush2.bf16.msra.mxu0 0
  %1343 = vmatprep.subr.bf16.mxu0 0
  %1344 = vmatpush2.bf16.msra.mxu0 0
  %1345 = vmatprep.subr.bf16.mxu0 0
  %1346 = vmatpush2.bf16.msra.mxu0 0
  %1347 = vmatprep.mubr.bf16.mxu0 0
  %1348 = vmatmul.mubr.bf16.gmra.mxu0 %v1313
  %v1349 = vpop.f32.mrf.mxu0
  %v1350 = vadd.f32 %v1050, %v1349
  %v1351 = vpop.f32.mrf.mxu0
  %v1352 = vpop.f32.mrf.mxu0
  %v1353 = vadd.f32 %v1050, %v1352
  %v1354 = vpop.f32.mrf.mxu0
  %1355 = vdwg.mxu0
  %1358 = vrot.lane.b32.xlu0 %v1350, 3
  %v1359 = vpop.permute.xlu0 %1358
  %1360 = vrot.lane.b32.xlu0 %v1353, 3
  %v1361 = vpop.permute.xlu0 %1360
  %vm1364 = vcmask 48152
  %1365 = vst.msk [vmem:[%s14] sm:$0xff] %vm1364, %v1359
  %1366 = vst.msk [vmem:[%s14 + $0x8] sm:$0xff] %vm1364, %v1361
  %1367 = vmatprep.subr.bf16.mxu0 0
  %1368 = vmatpush1.bf16.msra.mxu0 0
  %1369 = vmatprep.subr.bf16.mxu0 0
  %1370 = vmatpush1.bf16.msra.mxu0 0
  %1371 = vmatprep.subr.bf16.mxu0 0
  %1372 = vmatpush1.bf16.msra.mxu0 0
  %1373 = vmatprep.subr.bf16.mxu0 0
  %1374 = vmatpush1.bf16.msra.mxu0 0
  %1375 = vmatprep.subr.bf16.mxu0 0
  %1376 = vmatpush1.bf16.msra.mxu0 0
  %1377 = vmatprep.subr.bf16.mxu0 0
  %1378 = vmatpush1.bf16.msra.mxu0 0
  %1379 = vmatprep.subr.bf16.mxu0 0
  %1380 = vmatpush1.bf16.msra.mxu0 %v922
  %1381 = vmatprep.subr.bf16.mxu0 0
  %1382 = vmatpush1.bf16.msra.mxu0 %v921
  %1383 = vmatprep.subr.bf16.mxu0 0
  %1384 = vmatpush2.bf16.msra.mxu0 0
  %1385 = vmatprep.subr.bf16.mxu0 0
  %1386 = vmatpush2.bf16.msra.mxu0 0
  %1387 = vmatprep.subr.bf16.mxu0 0
  %1388 = vmatpush2.bf16.msra.mxu0 0
  %1389 = vmatprep.subr.bf16.mxu0 0
  %1390 = vmatpush2.bf16.msra.mxu0 0
  %1391 = vmatprep.subr.bf16.mxu0 0
  %1392 = vmatpush2.bf16.msra.mxu0 0
  %1393 = vmatprep.subr.bf16.mxu0 0
  %1394 = vmatpush2.bf16.msra.mxu0 0
  %1395 = vmatprep.subr.bf16.mxu0 0
  %1396 = vmatpush2.bf16.msra.mxu0 0
  %1397 = vmatprep.subr.bf16.mxu0 0
  %1398 = vmatpush2.bf16.msra.mxu0 0
  %1399 = vmatprep.mubr.bf16.mxu0 0
  %1400 = vmatmul.mubr.bf16.gmra.mxu0 %v1313
  %v1401 = vpop.f32.mrf.mxu0
  %v1402 = vadd.f32 0.0, %v1401
  %v1403 = vpop.f32.mrf.mxu0
  %v1404 = vpop.f32.mrf.mxu0
  %v1405 = vadd.f32 0.0, %v1404
  %v1406 = vpop.f32.mrf.mxu0
  %1407 = vdwg.mxu0
  %v1408 = vadd.f32 %v1402, %v1158
  %v1409 = vadd.f32 %v1405, %v1158
  %v1410 = vmax.f32 %v1408, 0.0
  %v1411 = vmax.f32 %v1409, 0.0
  %v1412 = vpack.c.bf16 %v1411, %v1410
  %1413 = vmatprep.subr.bf16.mxu0 0
  %1414 = vmatpush1.bf16.msra.mxu0 %v1204
  %1415 = vmatprep.subr.bf16.mxu0 0
  %1416 = vmatpush1.bf16.msra.mxu0 %v1203
  %1417 = vmatprep.subr.bf16.mxu0 0
  %1418 = vmatpush1.bf16.msra.mxu0 %v1202
  %1419 = vmatprep.subr.bf16.mxu0 0
  %1420 = vmatpush1.bf16.msra.mxu0 %v1201
  %1421 = vmatprep.subr.bf16.mxu0 0
  %1422 = vmatpush1.bf16.msra.mxu0 %v1200
  %1423 = vmatprep.subr.bf16.mxu0 0
  %1424 = vmatpush1.bf16.msra.mxu0 %v1199
  %1425 = vmatprep.subr.bf16.mxu0 0
  %1426 = vmatpush1.bf16.msra.mxu0 %v1198
  %1427 = vmatprep.subr.bf16.mxu0 0
  %1428 = vmatpush1.bf16.msra.mxu0 %v1197
  %1429 = vmatprep.subr.bf16.mxu0 0
  %1430 = vmatpush2.bf16.msra.mxu0 0
  %1431 = vmatprep.subr.bf16.mxu0 0
  %1432 = vmatpush2.bf16.msra.mxu0 0
  %1433 = vmatprep.subr.bf16.mxu0 0
  %1434 = vmatpush2.bf16.msra.mxu0 0
  %1435 = vmatprep.subr.bf16.mxu0 0
  %1436 = vmatpush2.bf16.msra.mxu0 0
  %1437 = vmatprep.subr.bf16.mxu0 0
  %1438 = vmatpush2.bf16.msra.mxu0 0
  %1439 = vmatprep.subr.bf16.mxu0 0
  %1440 = vmatpush2.bf16.msra.mxu0 0
  %1441 = vmatprep.subr.bf16.mxu0 0
  %1442 = vmatpush2.bf16.msra.mxu0 0
  %1443 = vmatprep.subr.bf16.mxu0 0
  %1444 = vmatpush2.bf16.msra.mxu0 0
  %1445 = vmatprep.mubr.bf16.mxu0 0
  %1446 = vmatmul.mubr.bf16.gmra.mxu0 %v1412
  %v1447 = vpop.f32.mrf.mxu0
  %v1448 = vadd.f32 %v973, %v1447
  %v1449 = vpop.f32.mrf.mxu0
  %v1450 = vpop.f32.mrf.mxu0
  %v1451 = vadd.f32 %v973, %v1450
  %v1452 = vpop.f32.mrf.mxu0
  %1453 = vdwg.mxu0
  %v1454 = vadd.f32 %v1448, %v1402
  %v1455 = vadd.f32 %v1451, %v1405
  %v1456 = vxor.u32 %v1454, 2147483648
  %v1457 = vxor.u32 %v1455, 2147483648
  %v1458 = vmul.f32 %v1456, 1.442695
  %v1459 = vpow.pop %v1458
  %v1460 = vmul.f32 %v1457, 1.442695
  %v1461 = vpow.pop %v1460
  %v1462 = vadd.f32 %v1459, 1.0
  %v1463 = vadd.f32 %v1461, 1.0
  %v1464 = vrcp.pop %v1462
  %v1465 = vmul.f32 1.0, %v1464
  %v1466 = vrcp.pop %v1463
  %v1467 = vmul.f32 1.0, %v1466
  %v1468 = vadd.f32 %v1402, %v995
  %v1469 = vadd.f32 %v1405, %v995
  %1472 = vrot.lane.b32.xlu0 %v1468, 64
  %v1473 = vpop.permute.xlu0 %1472
  %1474 = vrot.lane.b32.xlu0 %v1469, 64
  %v1475 = vpop.permute.xlu0 %1474
  %v1478 = vmul.f32 %v1465, %v1473
  %v1479 = vmul.f32 %v1467, %v1475
  %1482 = vrot.lane.b32.xlu0 %v1478, 64
  %v1483 = vpop.permute.xlu0 %1482
  %1484 = vrot.lane.b32.xlu0 %v1479, 64
  %v1485 = vpop.permute.xlu0 %1484
  %v1488 = vadd.f32 %v1448, %v1483
  %v1489 = vadd.f32 %v1451, %v1485
  %v1490 = vtanh.pop %v1488
  %v1491 = vtanh.pop %v1489
  %v1492 = vsub.f32 1.0, %v1465
  %v1493 = vsub.f32 1.0, %v1467
  %1496 = vrot.lane.b32.xlu0 %v1490, 96
  %v1497 = vpop.permute.xlu0 %1496
  %1498 = vrot.lane.b32.xlu0 %v1491, 96
  %v1499 = vpop.permute.xlu0 %1498
  %v1502 = vmul.f32 %v1492, %v1497
  %v1503 = vmul.f32 %v1493, %v1499
  %v1504 = vmul.f32 %v1465, %v1306
  %v1505 = vmul.f32 %v1467, %v1307
  %v1506 = vadd.f32 %v1502, %v1504
  %v1507 = vadd.f32 %v1503, %v1505
  %v1508 = vpack.c.bf16 %v1507, %v1506
  %1510 = vrot.lane.b32.xlu0 %v1508, 96
  %v1511 = vpop.permute.xlu0 %1510
  %v1513 = vsel %vm137, %v1511, 0
  %1515 = vmatprep.subr.bf16.mxu0 0
  %1516 = vmatpush1.bf16.msra.mxu0 0
  %1517 = vmatprep.subr.bf16.mxu0 0
  %1518 = vmatpush1.bf16.msra.mxu0 0
  %1519 = vmatprep.subr.bf16.mxu0 0
  %1520 = vmatpush1.bf16.msra.mxu0 0
  %1521 = vmatprep.subr.bf16.mxu0 0
  %1522 = vmatpush1.bf16.msra.mxu0 0
  %1523 = vmatprep.subr.bf16.mxu0 0
  %1524 = vmatpush1.bf16.msra.mxu0 0
  %1525 = vmatprep.subr.bf16.mxu0 0
  %1526 = vmatpush1.bf16.msra.mxu0 0
  %1527 = vmatprep.subr.bf16.mxu0 0
  %1528 = vmatpush1.bf16.msra.mxu0 %v1064
  %1529 = vmatprep.subr.bf16.mxu0 0
  %1530 = vmatpush1.bf16.msra.mxu0 %v1063
  %1531 = vmatprep.subr.bf16.mxu0 0
  %1532 = vmatpush2.bf16.msra.mxu0 0
  %1533 = vmatprep.subr.bf16.mxu0 0
  %1534 = vmatpush2.bf16.msra.mxu0 0
  %1535 = vmatprep.subr.bf16.mxu0 0
  %1536 = vmatpush2.bf16.msra.mxu0 0
  %1537 = vmatprep.subr.bf16.mxu0 0
  %1538 = vmatpush2.bf16.msra.mxu0 0
  %1539 = vmatprep.subr.bf16.mxu0 0
  %1540 = vmatpush2.bf16.msra.mxu0 0
  %1541 = vmatprep.subr.bf16.mxu0 0
  %1542 = vmatpush2.bf16.msra.mxu0 0
  %1543 = vmatprep.subr.bf16.mxu0 0
  %1544 = vmatpush2.bf16.msra.mxu0 0
  %1545 = vmatprep.subr.bf16.mxu0 0
  %1546 = vmatpush2.bf16.msra.mxu0 0
  %1547 = vmatprep.mubr.bf16.mxu0 0
  %1548 = vmatmul.mubr.bf16.gmra.mxu0 %v1513
  %v1549 = vpop.f32.mrf.mxu0
  %v1550 = vadd.f32 %v1050, %v1549
  %v1551 = vpop.f32.mrf.mxu0
  %v1552 = vpop.f32.mrf.mxu0
  %v1553 = vadd.f32 %v1050, %v1552
  %v1554 = vpop.f32.mrf.mxu0
  %1555 = vdwg.mxu0
  %1558 = vrot.lane.b32.xlu0 %v1550, 6
  %v1559 = vpop.permute.xlu0 %1558
  %1560 = vrot.lane.b32.xlu0 %v1553, 6
  %v1561 = vpop.permute.xlu0 %1560
  %vm1564 = vcmask 72752
  %1565 = vst.msk [vmem:[%s14] sm:$0xff] %vm1564, %v1559
  %1566 = vst.msk [vmem:[%s14 + $0x8] sm:$0xff] %vm1564, %v1561
  %1567 = vmatprep.subr.bf16.mxu0 0
  %1568 = vmatpush1.bf16.msra.mxu0 0
  %1569 = vmatprep.subr.bf16.mxu0 0
  %1570 = vmatpush1.bf16.msra.mxu0 0
  %1571 = vmatprep.subr.bf16.mxu0 0
  %1572 = vmatpush1.bf16.msra.mxu0 0
  %1573 = vmatprep.subr.bf16.mxu0 0
  %1574 = vmatpush1.bf16.msra.mxu0 0
  %1575 = vmatprep.subr.bf16.mxu0 0
  %1576 = vmatpush1.bf16.msra.mxu0 0
  %1577 = vmatprep.subr.bf16.mxu0 0
  %1578 = vmatpush1.bf16.msra.mxu0 0
  %1579 = vmatprep.subr.bf16.mxu0 0
  %1580 = vmatpush1.bf16.msra.mxu0 %v922
  %1581 = vmatprep.subr.bf16.mxu0 0
  %1582 = vmatpush1.bf16.msra.mxu0 %v921
  %1583 = vmatprep.subr.bf16.mxu0 0
  %1584 = vmatpush2.bf16.msra.mxu0 0
  %1585 = vmatprep.subr.bf16.mxu0 0
  %1586 = vmatpush2.bf16.msra.mxu0 0
  %1587 = vmatprep.subr.bf16.mxu0 0
  %1588 = vmatpush2.bf16.msra.mxu0 0
  %1589 = vmatprep.subr.bf16.mxu0 0
  %1590 = vmatpush2.bf16.msra.mxu0 0
  %1591 = vmatprep.subr.bf16.mxu0 0
  %1592 = vmatpush2.bf16.msra.mxu0 0
  %1593 = vmatprep.subr.bf16.mxu0 0
  %1594 = vmatpush2.bf16.msra.mxu0 0
  %1595 = vmatprep.subr.bf16.mxu0 0
  %1596 = vmatpush2.bf16.msra.mxu0 0
  %1597 = vmatprep.subr.bf16.mxu0 0
  %1598 = vmatpush2.bf16.msra.mxu0 0
  %1599 = vmatprep.mubr.bf16.mxu0 0
  %1600 = vmatmul.mubr.bf16.gmra.mxu0 %v1513
  %v1601 = vpop.f32.mrf.mxu0
  %v1602 = vadd.f32 0.0, %v1601
  %v1603 = vpop.f32.mrf.mxu0
  %v1604 = vpop.f32.mrf.mxu0
  %v1605 = vadd.f32 0.0, %v1604
  %v1606 = vpop.f32.mrf.mxu0
  %1607 = vdwg.mxu0
  %v1608 = vadd.f32 %v1602, %v1158
  %v1609 = vadd.f32 %v1605, %v1158
  %v1610 = vmax.f32 %v1608, 0.0
  %v1611 = vmax.f32 %v1609, 0.0
  %v1612 = vpack.c.bf16 %v1611, %v1610
  %1613 = vmatprep.subr.bf16.mxu0 0
  %1614 = vmatpush1.bf16.msra.mxu0 %v1204
  %1615 = vmatprep.subr.bf16.mxu0 0
  %1616 = vmatpush1.bf16.msra.mxu0 %v1203
  %1617 = vmatprep.subr.bf16.mxu0 0
  %1618 = vmatpush1.bf16.msra.mxu0 %v1202
  %1619 = vmatprep.subr.bf16.mxu0 0
  %1620 = vmatpush1.bf16.msra.mxu0 %v1201
  %1621 = vmatprep.subr.bf16.mxu0 0
  %1622 = vmatpush1.bf16.msra.mxu0 %v1200
  %1623 = vmatprep.subr.bf16.mxu0 0
  %1624 = vmatpush1.bf16.msra.mxu0 %v1199
  %1625 = vmatprep.subr.bf16.mxu0 0
  %1626 = vmatpush1.bf16.msra.mxu0 %v1198
  %1627 = vmatprep.subr.bf16.mxu0 0
  %1628 = vmatpush1.bf16.msra.mxu0 %v1197
  %1629 = vmatprep.subr.bf16.mxu0 0
  %1630 = vmatpush2.bf16.msra.mxu0 0
  %1631 = vmatprep.subr.bf16.mxu0 0
  %1632 = vmatpush2.bf16.msra.mxu0 0
  %1633 = vmatprep.subr.bf16.mxu0 0
  %1634 = vmatpush2.bf16.msra.mxu0 0
  %1635 = vmatprep.subr.bf16.mxu0 0
  %1636 = vmatpush2.bf16.msra.mxu0 0
  %1637 = vmatprep.subr.bf16.mxu0 0
  %1638 = vmatpush2.bf16.msra.mxu0 0
  %1639 = vmatprep.subr.bf16.mxu0 0
  %1640 = vmatpush2.bf16.msra.mxu0 0
  %1641 = vmatprep.subr.bf16.mxu0 0
  %1642 = vmatpush2.bf16.msra.mxu0 0
  %1643 = vmatprep.subr.bf16.mxu0 0
  %1644 = vmatpush2.bf16.msra.mxu0 0
  %1645 = vmatprep.mubr.bf16.mxu0 0
  %1646 = vmatmul.mubr.bf16.gmra.mxu0 %v1612
  %v1647 = vpop.f32.mrf.mxu0
  %v1648 = vadd.f32 %v973, %v1647
  %v1649 = vpop.f32.mrf.mxu0
  %v1650 = vpop.f32.mrf.mxu0
  %v1651 = vadd.f32 %v973, %v1650
  %v1652 = vpop.f32.mrf.mxu0
  %1653 = vdwg.mxu0
  %v1654 = vadd.f32 %v1648, %v1602
  %v1655 = vadd.f32 %v1651, %v1605
  %v1656 = vxor.u32 %v1654, 2147483648
  %v1657 = vxor.u32 %v1655, 2147483648
  %v1658 = vmul.f32 %v1656, 1.442695
  %v1659 = vpow.pop %v1658
  %v1660 = vmul.f32 %v1657, 1.442695
  %v1661 = vpow.pop %v1660
  %v1662 = vadd.f32 %v1659, 1.0
  %v1663 = vadd.f32 %v1661, 1.0
  %v1664 = vrcp.pop %v1662
  %v1665 = vmul.f32 1.0, %v1664
  %v1666 = vrcp.pop %v1663
  %v1667 = vmul.f32 1.0, %v1666
  %v1668 = vadd.f32 %v1602, %v995
  %v1669 = vadd.f32 %v1605, %v995
  %1672 = vrot.lane.b32.xlu0 %v1668, 64
  %v1673 = vpop.permute.xlu0 %1672
  %1674 = vrot.lane.b32.xlu0 %v1669, 64
  %v1675 = vpop.permute.xlu0 %1674
  %v1678 = vmul.f32 %v1665, %v1673
  %v1679 = vmul.f32 %v1667, %v1675
  %1682 = vrot.lane.b32.xlu0 %v1678, 64
  %v1683 = vpop.permute.xlu0 %1682
  %1684 = vrot.lane.b32.xlu0 %v1679, 64
  %v1685 = vpop.permute.xlu0 %1684
  %v1688 = vadd.f32 %v1648, %v1683
  %v1689 = vadd.f32 %v1651, %v1685
  %v1690 = vtanh.pop %v1688
  %v1691 = vtanh.pop %v1689
  %v1692 = vsub.f32 1.0, %v1665
  %v1693 = vsub.f32 1.0, %v1667
  %1696 = vrot.lane.b32.xlu0 %v1690, 96
  %v1697 = vpop.permute.xlu0 %1696
  %1698 = vrot.lane.b32.xlu0 %v1691, 96
  %v1699 = vpop.permute.xlu0 %1698
  %v1702 = vmul.f32 %v1692, %v1697
  %v1703 = vmul.f32 %v1693, %v1699
  %v1704 = vmul.f32 %v1665, %v1506
  %v1705 = vmul.f32 %v1667, %v1507
  %v1706 = vadd.f32 %v1702, %v1704
  %v1707 = vadd.f32 %v1703, %v1705
  %v1708 = vpack.c.bf16 %v1707, %v1706
  %1710 = vrot.lane.b32.xlu0 %v1708, 96
  %v1711 = vpop.permute.xlu0 %1710
  %v1713 = vsel %vm137, %v1711, 0
  %1715 = vmatprep.subr.bf16.mxu0 0
  %1716 = vmatpush1.bf16.msra.mxu0 0
  %1717 = vmatprep.subr.bf16.mxu0 0
  %1718 = vmatpush1.bf16.msra.mxu0 0
  %1719 = vmatprep.subr.bf16.mxu0 0
  %1720 = vmatpush1.bf16.msra.mxu0 0
  %1721 = vmatprep.subr.bf16.mxu0 0
  %1722 = vmatpush1.bf16.msra.mxu0 0
  %1723 = vmatprep.subr.bf16.mxu0 0
  %1724 = vmatpush1.bf16.msra.mxu0 0
  %1725 = vmatprep.subr.bf16.mxu0 0
  %1726 = vmatpush1.bf16.msra.mxu0 0
  %1727 = vmatprep.subr.bf16.mxu0 0
  %1728 = vmatpush1.bf16.msra.mxu0 %v1064
  %1729 = vmatprep.subr.bf16.mxu0 0
  %1730 = vmatpush1.bf16.msra.mxu0 %v1063
  %1731 = vmatprep.subr.bf16.mxu0 0
  %1732 = vmatpush2.bf16.msra.mxu0 0
  %1733 = vmatprep.subr.bf16.mxu0 0
  %1734 = vmatpush2.bf16.msra.mxu0 0
  %1735 = vmatprep.subr.bf16.mxu0 0
  %1736 = vmatpush2.bf16.msra.mxu0 0
  %1737 = vmatprep.subr.bf16.mxu0 0
  %1738 = vmatpush2.bf16.msra.mxu0 0
  %1739 = vmatprep.subr.bf16.mxu0 0
  %1740 = vmatpush2.bf16.msra.mxu0 0
  %1741 = vmatprep.subr.bf16.mxu0 0
  %1742 = vmatpush2.bf16.msra.mxu0 0
  %1743 = vmatprep.subr.bf16.mxu0 0
  %1744 = vmatpush2.bf16.msra.mxu0 0
  %1745 = vmatprep.subr.bf16.mxu0 0
  %1746 = vmatpush2.bf16.msra.mxu0 0
  %1747 = vmatprep.mubr.bf16.mxu0 0
  %1748 = vmatmul.mubr.bf16.gmra.mxu0 %v1713
  %v1749 = vpop.f32.mrf.mxu0
  %v1750 = vadd.f32 %v1050, %v1749
  %v1751 = vpop.f32.mrf.mxu0
  %v1752 = vpop.f32.mrf.mxu0
  %v1753 = vadd.f32 %v1050, %v1752
  %v1754 = vpop.f32.mrf.mxu0
  %1755 = vdwg.mxu0
  %1758 = vrot.lane.b32.xlu0 %v1750, 9
  %v1759 = vpop.permute.xlu0 %1758
  %1760 = vrot.lane.b32.xlu0 %v1753, 9
  %v1761 = vpop.permute.xlu0 %1760
  %vm1764 = vcmask 97352
  %1765 = vst.msk [vmem:[%s14] sm:$0xff] %vm1764, %v1759
  %1766 = vst.msk [vmem:[%s14 + $0x8] sm:$0xff] %vm1764, %v1761
  %1767 = vmatprep.subr.bf16.mxu0 0
  %1768 = vmatpush1.bf16.msra.mxu0 0
  %1769 = vmatprep.subr.bf16.mxu0 0
  %1770 = vmatpush1.bf16.msra.mxu0 0
  %1771 = vmatprep.subr.bf16.mxu0 0
  %1772 = vmatpush1.bf16.msra.mxu0 0
  %1773 = vmatprep.subr.bf16.mxu0 0
  %1774 = vmatpush1.bf16.msra.mxu0 0
  %1775 = vmatprep.subr.bf16.mxu0 0
  %1776 = vmatpush1.bf16.msra.mxu0 0
  %1777 = vmatprep.subr.bf16.mxu0 0
  %1778 = vmatpush1.bf16.msra.mxu0 0
  %1779 = vmatprep.subr.bf16.mxu0 0
  %1780 = vmatpush1.bf16.msra.mxu0 %v922
  %1781 = vmatprep.subr.bf16.mxu0 0
  %1782 = vmatpush1.bf16.msra.mxu0 %v921
  %1783 = vmatprep.subr.bf16.mxu0 0
  %1784 = vmatpush2.bf16.msra.mxu0 0
  %1785 = vmatprep.subr.bf16.mxu0 0
  %1786 = vmatpush2.bf16.msra.mxu0 0
  %1787 = vmatprep.subr.bf16.mxu0 0
  %1788 = vmatpush2.bf16.msra.mxu0 0
  %1789 = vmatprep.subr.bf16.mxu0 0
  %1790 = vmatpush2.bf16.msra.mxu0 0
  %1791 = vmatprep.subr.bf16.mxu0 0
  %1792 = vmatpush2.bf16.msra.mxu0 0
  %1793 = vmatprep.subr.bf16.mxu0 0
  %1794 = vmatpush2.bf16.msra.mxu0 0
  %1795 = vmatprep.subr.bf16.mxu0 0
  %1796 = vmatpush2.bf16.msra.mxu0 0
  %1797 = vmatprep.subr.bf16.mxu0 0
  %1798 = vmatpush2.bf16.msra.mxu0 0
  %1799 = vmatprep.mubr.bf16.mxu0 0
  %1800 = vmatmul.mubr.bf16.gmra.mxu0 %v1713
  %v1801 = vpop.f32.mrf.mxu0
  %v1802 = vadd.f32 0.0, %v1801
  %v1803 = vpop.f32.mrf.mxu0
  %v1804 = vpop.f32.mrf.mxu0
  %v1805 = vadd.f32 0.0, %v1804
  %v1806 = vpop.f32.mrf.mxu0
  %1807 = vdwg.mxu0
  %v1808 = vadd.f32 %v1802, %v1158
  %v1809 = vadd.f32 %v1805, %v1158
  %v1810 = vmax.f32 %v1808, 0.0
  %v1811 = vmax.f32 %v1809, 0.0
  %v1812 = vpack.c.bf16 %v1811, %v1810
  %1813 = vmatprep.subr.bf16.mxu0 0
  %1814 = vmatpush1.bf16.msra.mxu0 %v1204
  %1815 = vmatprep.subr.bf16.mxu0 0
  %1816 = vmatpush1.bf16.msra.mxu0 %v1203
  %1817 = vmatprep.subr.bf16.mxu0 0
  %1818 = vmatpush1.bf16.msra.mxu0 %v1202
  %1819 = vmatprep.subr.bf16.mxu0 0
  %1820 = vmatpush1.bf16.msra.mxu0 %v1201
  %1821 = vmatprep.subr.bf16.mxu0 0
  %1822 = vmatpush1.bf16.msra.mxu0 %v1200
  %1823 = vmatprep.subr.bf16.mxu0 0
  %1824 = vmatpush1.bf16.msra.mxu0 %v1199
  %1825 = vmatprep.subr.bf16.mxu0 0
  %1826 = vmatpush1.bf16.msra.mxu0 %v1198
  %1827 = vmatprep.subr.bf16.mxu0 0
  %1828 = vmatpush1.bf16.msra.mxu0 %v1197
  %1829 = vmatprep.subr.bf16.mxu0 0
  %1830 = vmatpush2.bf16.msra.mxu0 0
  %1831 = vmatprep.subr.bf16.mxu0 0
  %1832 = vmatpush2.bf16.msra.mxu0 0
  %1833 = vmatprep.subr.bf16.mxu0 0
  %1834 = vmatpush2.bf16.msra.mxu0 0
  %1835 = vmatprep.subr.bf16.mxu0 0
  %1836 = vmatpush2.bf16.msra.mxu0 0
  %1837 = vmatprep.subr.bf16.mxu0 0
  %1838 = vmatpush2.bf16.msra.mxu0 0
  %1839 = vmatprep.subr.bf16.mxu0 0
  %1840 = vmatpush2.bf16.msra.mxu0 0
  %1841 = vmatprep.subr.bf16.mxu0 0
  %1842 = vmatpush2.bf16.msra.mxu0 0
  %1843 = vmatprep.subr.bf16.mxu0 0
  %1844 = vmatpush2.bf16.msra.mxu0 0
  %1845 = vmatprep.mubr.bf16.mxu0 0
  %1846 = vmatmul.mubr.bf16.gmra.mxu0 %v1812
  %v1847 = vpop.f32.mrf.mxu0
  %v1848 = vadd.f32 %v973, %v1847
  %v1849 = vpop.f32.mrf.mxu0
  %v1850 = vpop.f32.mrf.mxu0
  %v1851 = vadd.f32 %v973, %v1850
  %v1852 = vpop.f32.mrf.mxu0
  %1853 = vdwg.mxu0
  %v1854 = vadd.f32 %v1848, %v1802
  %v1855 = vadd.f32 %v1851, %v1805
  %v1856 = vxor.u32 %v1854, 2147483648
  %v1857 = vxor.u32 %v1855, 2147483648
  %v1858 = vmul.f32 %v1856, 1.442695
  %v1859 = vpow.pop %v1858
  %v1860 = vmul.f32 %v1857, 1.442695
  %v1861 = vpow.pop %v1860
  %v1862 = vadd.f32 %v1859, 1.0
  %v1863 = vadd.f32 %v1861, 1.0
  %v1864 = vrcp.pop %v1862
  %v1865 = vmul.f32 1.0, %v1864
  %v1866 = vrcp.pop %v1863
  %v1867 = vmul.f32 1.0, %v1866
  %v1868 = vadd.f32 %v1802, %v995
  %v1869 = vadd.f32 %v1805, %v995
  %1872 = vrot.lane.b32.xlu0 %v1868, 64
  %v1873 = vpop.permute.xlu0 %1872
  %1874 = vrot.lane.b32.xlu0 %v1869, 64
  %v1875 = vpop.permute.xlu0 %1874
  %v1878 = vmul.f32 %v1865, %v1873
  %v1879 = vmul.f32 %v1867, %v1875
  %1882 = vrot.lane.b32.xlu0 %v1878, 64
  %v1883 = vpop.permute.xlu0 %1882
  %1884 = vrot.lane.b32.xlu0 %v1879, 64
  %v1885 = vpop.permute.xlu0 %1884
  %v1888 = vadd.f32 %v1848, %v1883
  %v1889 = vadd.f32 %v1851, %v1885
  %v1890 = vtanh.pop %v1888
  %v1891 = vtanh.pop %v1889
  %v1892 = vsub.f32 1.0, %v1865
  %v1893 = vsub.f32 1.0, %v1867
  %1896 = vrot.lane.b32.xlu0 %v1890, 96
  %v1897 = vpop.permute.xlu0 %1896
  %1898 = vrot.lane.b32.xlu0 %v1891, 96
  %v1899 = vpop.permute.xlu0 %1898
  %v1902 = vmul.f32 %v1892, %v1897
  %v1903 = vmul.f32 %v1893, %v1899
  %v1904 = vmul.f32 %v1865, %v1706
  %v1905 = vmul.f32 %v1867, %v1707
  %v1906 = vadd.f32 %v1902, %v1904
  %v1907 = vadd.f32 %v1903, %v1905
  %v1908 = vpack.c.bf16 %v1907, %v1906
  %1910 = vrot.lane.b32.xlu0 %v1908, 96
  %v1911 = vpop.permute.xlu0 %1910
  %v1913 = vsel %vm137, %v1911, 0
  %1915 = vmatprep.subr.bf16.mxu0 0
  %1916 = vmatpush1.bf16.msra.mxu0 0
  %1917 = vmatprep.subr.bf16.mxu0 0
  %1918 = vmatpush1.bf16.msra.mxu0 0
  %1919 = vmatprep.subr.bf16.mxu0 0
  %1920 = vmatpush1.bf16.msra.mxu0 0
  %1921 = vmatprep.subr.bf16.mxu0 0
  %1922 = vmatpush1.bf16.msra.mxu0 0
  %1923 = vmatprep.subr.bf16.mxu0 0
  %1924 = vmatpush1.bf16.msra.mxu0 0
  %1925 = vmatprep.subr.bf16.mxu0 0
  %1926 = vmatpush1.bf16.msra.mxu0 0
  %1927 = vmatprep.subr.bf16.mxu0 0
  %1928 = vmatpush1.bf16.msra.mxu0 %v1064
  %1929 = vmatprep.subr.bf16.mxu0 0
  %1930 = vmatpush1.bf16.msra.mxu0 %v1063
  %1931 = vmatprep.subr.bf16.mxu0 0
  %1932 = vmatpush2.bf16.msra.mxu0 0
  %1933 = vmatprep.subr.bf16.mxu0 0
  %1934 = vmatpush2.bf16.msra.mxu0 0
  %1935 = vmatprep.subr.bf16.mxu0 0
  %1936 = vmatpush2.bf16.msra.mxu0 0
  %1937 = vmatprep.subr.bf16.mxu0 0
  %1938 = vmatpush2.bf16.msra.mxu0 0
  %1939 = vmatprep.subr.bf16.mxu0 0
  %1940 = vmatpush2.bf16.msra.mxu0 0
  %1941 = vmatprep.subr.bf16.mxu0 0
  %1942 = vmatpush2.bf16.msra.mxu0 0
  %1943 = vmatprep.subr.bf16.mxu0 0
  %1944 = vmatpush2.bf16.msra.mxu0 0
  %1945 = vmatprep.subr.bf16.mxu0 0
  %1946 = vmatpush2.bf16.msra.mxu0 0
  %1947 = vmatprep.mubr.bf16.mxu0 0
  %1948 = vmatmul.mubr.bf16.gmra.mxu0 %v1913
  %v1949 = vpop.f32.mrf.mxu0
  %v1950 = vadd.f32 %v1050, %v1949
  %v1951 = vpop.f32.mrf.mxu0
  %v1952 = vpop.f32.mrf.mxu0
  %v1953 = vadd.f32 %v1050, %v1952
  %v1954 = vpop.f32.mrf.mxu0
  %1955 = vdwg.mxu0
  %1958 = vrot.lane.b32.xlu0 %v1950, 12
  %v1959 = vpop.permute.xlu0 %1958
  %1960 = vrot.lane.b32.xlu0 %v1953, 12
  %v1961 = vpop.permute.xlu0 %1960
  %vm1964 = vcmask 121952
  %1965 = vst.msk [vmem:[%s14] sm:$0xff] %vm1964, %v1959
  %1966 = vst.msk [vmem:[%s14 + $0x8] sm:$0xff] %vm1964, %v1961
  %1967 = vmatprep.subr.bf16.mxu0 0
  %1968 = vmatpush1.bf16.msra.mxu0 0
  %1969 = vmatprep.subr.bf16.mxu0 0
  %1970 = vmatpush1.bf16.msra.mxu0 0
  %1971 = vmatprep.subr.bf16.mxu0 0
  %1972 = vmatpush1.bf16.msra.mxu0 0
  %1973 = vmatprep.subr.bf16.mxu0 0
  %1974 = vmatpush1.bf16.msra.mxu0 0
  %1975 = vmatprep.subr.bf16.mxu0 0
  %1976 = vmatpush1.bf16.msra.mxu0 0
  %1977 = vmatprep.subr.bf16.mxu0 0
  %1978 = vmatpush1.bf16.msra.mxu0 0
  %1979 = vmatprep.subr.bf16.mxu0 0
  %1980 = vmatpush1.bf16.msra.mxu0 %v922
  %1981 = vmatprep.subr.bf16.mxu0 0
  %1982 = vmatpush1.bf16.msra.mxu0 %v921
  %1983 = vmatprep.subr.bf16.mxu0 0
  %1984 = vmatpush2.bf16.msra.mxu0 0
  %1985 = vmatprep.subr.bf16.mxu0 0
  %1986 = vmatpush2.bf16.msra.mxu0 0
  %1987 = vmatprep.subr.bf16.mxu0 0
  %1988 = vmatpush2.bf16.msra.mxu0 0
  %1989 = vmatprep.subr.bf16.mxu0 0
  %1990 = vmatpush2.bf16.msra.mxu0 0
  %1991 = vmatprep.subr.bf16.mxu0 0
  %1992 = vmatpush2.bf16.msra.mxu0 0
  %1993 = vmatprep.subr.bf16.mxu0 0
  %1994 = vmatpush2.bf16.msra.mxu0 0
  %1995 = vmatprep.subr.bf16.mxu0 0
  %1996 = vmatpush2.bf16.msra.mxu0 0
  %1997 = vmatprep.subr.bf16.mxu0 0
  %1998 = vmatpush2.bf16.msra.mxu0 0
  %1999 = vmatprep.mubr.bf16.mxu0 0
  %2000 = vmatmul.mubr.bf16.gmra.mxu0 %v1913
  %v2001 = vpop.f32.mrf.mxu0
  %v2002 = vadd.f32 0.0, %v2001
  %v2003 = vpop.f32.mrf.mxu0
  %v2004 = vpop.f32.mrf.mxu0
  %v2005 = vadd.f32 0.0, %v2004
  %v2006 = vpop.f32.mrf.mxu0
  %2007 = vdwg.mxu0
  %v2008 = vadd.f32 %v2002, %v1158
  %v2009 = vadd.f32 %v2005, %v1158
  %v2010 = vmax.f32 %v2008, 0.0
  %v2011 = vmax.f32 %v2009, 0.0
  %v2012 = vpack.c.bf16 %v2011, %v2010
  %2013 = vmatprep.subr.bf16.mxu0 0
  %2014 = vmatpush1.bf16.msra.mxu0 %v1204
  %2015 = vmatprep.subr.bf16.mxu0 0
  %2016 = vmatpush1.bf16.msra.mxu0 %v1203
  %2017 = vmatprep.subr.bf16.mxu0 0
  %2018 = vmatpush1.bf16.msra.mxu0 %v1202
  %2019 = vmatprep.subr.bf16.mxu0 0
  %2020 = vmatpush1.bf16.msra.mxu0 %v1201
  %2021 = vmatprep.subr.bf16.mxu0 0
  %2022 = vmatpush1.bf16.msra.mxu0 %v1200
  %2023 = vmatprep.subr.bf16.mxu0 0
  %2024 = vmatpush1.bf16.msra.mxu0 %v1199
  %2025 = vmatprep.subr.bf16.mxu0 0
  %2026 = vmatpush1.bf16.msra.mxu0 %v1198
  %2027 = vmatprep.subr.bf16.mxu0 0
  %2028 = vmatpush1.bf16.msra.mxu0 %v1197
  %2029 = vmatprep.subr.bf16.mxu0 0
  %2030 = vmatpush2.bf16.msra.mxu0 0
  %2031 = vmatprep.subr.bf16.mxu0 0
  %2032 = vmatpush2.bf16.msra.mxu0 0
  %2033 = vmatprep.subr.bf16.mxu0 0
  %2034 = vmatpush2.bf16.msra.mxu0 0
  %2035 = vmatprep.subr.bf16.mxu0 0
  %2036 = vmatpush2.bf16.msra.mxu0 0
  %2037 = vmatprep.subr.bf16.mxu0 0
  %2038 = vmatpush2.bf16.msra.mxu0 0
  %2039 = vmatprep.subr.bf16.mxu0 0
  %2040 = vmatpush2.bf16.msra.mxu0 0
  %2041 = vmatprep.subr.bf16.mxu0 0
  %2042 = vmatpush2.bf16.msra.mxu0 0
  %2043 = vmatprep.subr.bf16.mxu0 0
  %2044 = vmatpush2.bf16.msra.mxu0 0
  %2045 = vmatprep.mubr.bf16.mxu0 0
  %2046 = vmatmul.mubr.bf16.gmra.mxu0 %v2012
  %v2047 = vpop.f32.mrf.mxu0
  %v2048 = vadd.f32 %v973, %v2047
  %v2049 = vpop.f32.mrf.mxu0
  %v2050 = vpop.f32.mrf.mxu0
  %v2051 = vadd.f32 %v973, %v2050
  %v2052 = vpop.f32.mrf.mxu0
  %2053 = vdwg.mxu0
  %v2054 = vadd.f32 %v2048, %v2002
  %v2055 = vadd.f32 %v2051, %v2005
  %v2056 = vxor.u32 %v2054, 2147483648
  %v2057 = vxor.u32 %v2055, 2147483648
  %v2058 = vmul.f32 %v2056, 1.442695
  %v2059 = vpow.pop %v2058
  %v2060 = vmul.f32 %v2057, 1.442695
  %v2061 = vpow.pop %v2060
  %v2062 = vadd.f32 %v2059, 1.0
  %v2063 = vadd.f32 %v2061, 1.0
  %v2064 = vrcp.pop %v2062
  %v2065 = vmul.f32 1.0, %v2064
  %v2066 = vrcp.pop %v2063
  %v2067 = vmul.f32 1.0, %v2066
  %v2068 = vadd.f32 %v2002, %v995
  %v2069 = vadd.f32 %v2005, %v995
  %2072 = vrot.lane.b32.xlu0 %v2068, 64
  %v2073 = vpop.permute.xlu0 %2072
  %2074 = vrot.lane.b32.xlu0 %v2069, 64
  %v2075 = vpop.permute.xlu0 %2074
  %v2078 = vmul.f32 %v2065, %v2073
  %v2079 = vmul.f32 %v2067, %v2075
  %2082 = vrot.lane.b32.xlu0 %v2078, 64
  %v2083 = vpop.permute.xlu0 %2082
  %2084 = vrot.lane.b32.xlu0 %v2079, 64
  %v2085 = vpop.permute.xlu0 %2084
  %v2088 = vadd.f32 %v2048, %v2083
  %v2089 = vadd.f32 %v2051, %v2085
  %v2090 = vtanh.pop %v2088
  %v2091 = vtanh.pop %v2089
  %v2092 = vsub.f32 1.0, %v2065
  %v2093 = vsub.f32 1.0, %v2067
  %2096 = vrot.lane.b32.xlu0 %v2090, 96
  %v2097 = vpop.permute.xlu0 %2096
  %2098 = vrot.lane.b32.xlu0 %v2091, 96
  %v2099 = vpop.permute.xlu0 %2098
  %v2102 = vmul.f32 %v2092, %v2097
  %v2103 = vmul.f32 %v2093, %v2099
  %v2104 = vmul.f32 %v2065, %v1906
  %v2105 = vmul.f32 %v2067, %v1907
  %v2106 = vadd.f32 %v2102, %v2104
  %v2107 = vadd.f32 %v2103, %v2105
  %v2108 = vpack.c.bf16 %v2107, %v2106
  %2110 = vrot.lane.b32.xlu0 %v2108, 96
  %v2111 = vpop.permute.xlu0 %2110
  %v2113 = vsel %vm137, %v2111, 0
  %2115 = vmatprep.subr.bf16.mxu0 0
  %2116 = vmatpush1.bf16.msra.mxu0 0
  %2117 = vmatprep.subr.bf16.mxu0 0
  %2118 = vmatpush1.bf16.msra.mxu0 0
  %2119 = vmatprep.subr.bf16.mxu0 0
  %2120 = vmatpush1.bf16.msra.mxu0 0
  %2121 = vmatprep.subr.bf16.mxu0 0
  %2122 = vmatpush1.bf16.msra.mxu0 0
  %2123 = vmatprep.subr.bf16.mxu0 0
  %2124 = vmatpush1.bf16.msra.mxu0 0
  %2125 = vmatprep.subr.bf16.mxu0 0
  %2126 = vmatpush1.bf16.msra.mxu0 0
  %2127 = vmatprep.subr.bf16.mxu0 0
  %2128 = vmatpush1.bf16.msra.mxu0 %v1064
  %2129 = vmatprep.subr.bf16.mxu0 0
  %2130 = vmatpush1.bf16.msra.mxu0 %v1063
  %2131 = vmatprep.subr.bf16.mxu0 0
  %2132 = vmatpush2.bf16.msra.mxu0 0
  %2133 = vmatprep.subr.bf16.mxu0 0
  %2134 = vmatpush2.bf16.msra.mxu0 0
  %2135 = vmatprep.subr.bf16.mxu0 0
  %2136 = vmatpush2.bf16.msra.mxu0 0
  %2137 = vmatprep.subr.bf16.mxu0 0
  %2138 = vmatpush2.bf16.msra.mxu0 0
  %2139 = vmatprep.subr.bf16.mxu0 0
  %2140 = vmatpush2.bf16.msra.mxu0 0
  %2141 = vmatprep.subr.bf16.mxu0 0
  %2142 = vmatpush2.bf16.msra.mxu0 0
  %2143 = vmatprep.subr.bf16.mxu0 0
  %2144 = vmatpush2.bf16.msra.mxu0 0
  %2145 = vmatprep.subr.bf16.mxu0 0
  %2146 = vmatpush2.bf16.msra.mxu0 0
  %2147 = vmatprep.mubr.bf16.mxu0 0
  %2148 = vmatmul.mubr.bf16.gmra.mxu0 %v2113
  %v2149 = vpop.f32.mrf.mxu0
  %v2150 = vadd.f32 %v1050, %v2149
  %v2151 = vpop.f32.mrf.mxu0
  %v2152 = vpop.f32.mrf.mxu0
  %v2153 = vadd.f32 %v1050, %v2152
  %v2154 = vpop.f32.mrf.mxu0
  %2155 = vdwg.mxu0
  %2158 = vrot.lane.b32.xlu0 %v2150, 15
  %v2159 = vpop.permute.xlu0 %2158
  %2160 = vrot.lane.b32.xlu0 %v2153, 15
  %v2161 = vpop.permute.xlu0 %2160
  %vm2164 = vcmask 146552
  %2165 = vst.msk [vmem:[%s14] sm:$0xff] %vm2164, %v2159
  %2166 = vst.msk [vmem:[%s14 + $0x8] sm:$0xff] %vm2164, %v2161
  %2167 = vmatprep.subr.bf16.mxu0 0
  %2168 = vmatpush1.bf16.msra.mxu0 0
  %2169 = vmatprep.subr.bf16.mxu0 0
  %2170 = vmatpush1.bf16.msra.mxu0 0
  %2171 = vmatprep.subr.bf16.mxu0 0
  %2172 = vmatpush1.bf16.msra.mxu0 0
  %2173 = vmatprep.subr.bf16.mxu0 0
  %2174 = vmatpush1.bf16.msra.mxu0 0
  %2175 = vmatprep.subr.bf16.mxu0 0
  %2176 = vmatpush1.bf16.msra.mxu0 0
  %2177 = vmatprep.subr.bf16.mxu0 0
  %2178 = vmatpush1.bf16.msra.mxu0 0
  %2179 = vmatprep.subr.bf16.mxu0 0
  %2180 = vmatpush1.bf16.msra.mxu0 %v922
  %2181 = vmatprep.subr.bf16.mxu0 0
  %2182 = vmatpush1.bf16.msra.mxu0 %v921
  %2183 = vmatprep.subr.bf16.mxu0 0
  %2184 = vmatpush2.bf16.msra.mxu0 0
  %2185 = vmatprep.subr.bf16.mxu0 0
  %2186 = vmatpush2.bf16.msra.mxu0 0
  %2187 = vmatprep.subr.bf16.mxu0 0
  %2188 = vmatpush2.bf16.msra.mxu0 0
  %2189 = vmatprep.subr.bf16.mxu0 0
  %2190 = vmatpush2.bf16.msra.mxu0 0
  %2191 = vmatprep.subr.bf16.mxu0 0
  %2192 = vmatpush2.bf16.msra.mxu0 0
  %2193 = vmatprep.subr.bf16.mxu0 0
  %2194 = vmatpush2.bf16.msra.mxu0 0
  %2195 = vmatprep.subr.bf16.mxu0 0
  %2196 = vmatpush2.bf16.msra.mxu0 0
  %2197 = vmatprep.subr.bf16.mxu0 0
  %2198 = vmatpush2.bf16.msra.mxu0 0
  %2199 = vmatprep.mubr.bf16.mxu0 0
  %2200 = vmatmul.mubr.bf16.gmra.mxu0 %v2113
  %v2201 = vpop.f32.mrf.mxu0
  %v2202 = vadd.f32 0.0, %v2201
  %v2203 = vpop.f32.mrf.mxu0
  %v2204 = vpop.f32.mrf.mxu0
  %v2205 = vadd.f32 0.0, %v2204
  %v2206 = vpop.f32.mrf.mxu0
  %2207 = vdwg.mxu0
  %v2208 = vadd.f32 %v2202, %v1158
  %v2209 = vadd.f32 %v2205, %v1158
  %v2210 = vmax.f32 %v2208, 0.0
  %v2211 = vmax.f32 %v2209, 0.0
  %v2212 = vpack.c.bf16 %v2211, %v2210
  %2213 = vmatprep.subr.bf16.mxu0 0
  %2214 = vmatpush1.bf16.msra.mxu0 %v1204
  %2215 = vmatprep.subr.bf16.mxu0 0
  %2216 = vmatpush1.bf16.msra.mxu0 %v1203
  %2217 = vmatprep.subr.bf16.mxu0 0
  %2218 = vmatpush1.bf16.msra.mxu0 %v1202
  %2219 = vmatprep.subr.bf16.mxu0 0
  %2220 = vmatpush1.bf16.msra.mxu0 %v1201
  %2221 = vmatprep.subr.bf16.mxu0 0
  %2222 = vmatpush1.bf16.msra.mxu0 %v1200
  %2223 = vmatprep.subr.bf16.mxu0 0
  %2224 = vmatpush1.bf16.msra.mxu0 %v1199
  %2225 = vmatprep.subr.bf16.mxu0 0
  %2226 = vmatpush1.bf16.msra.mxu0 %v1198
  %2227 = vmatprep.subr.bf16.mxu0 0
  %2228 = vmatpush1.bf16.msra.mxu0 %v1197
  %2229 = vmatprep.subr.bf16.mxu0 0
  %2230 = vmatpush2.bf16.msra.mxu0 0
  %2231 = vmatprep.subr.bf16.mxu0 0
  %2232 = vmatpush2.bf16.msra.mxu0 0
  %2233 = vmatprep.subr.bf16.mxu0 0
  %2234 = vmatpush2.bf16.msra.mxu0 0
  %2235 = vmatprep.subr.bf16.mxu0 0
  %2236 = vmatpush2.bf16.msra.mxu0 0
  %2237 = vmatprep.subr.bf16.mxu0 0
  %2238 = vmatpush2.bf16.msra.mxu0 0
  %2239 = vmatprep.subr.bf16.mxu0 0
  %2240 = vmatpush2.bf16.msra.mxu0 0
  %2241 = vmatprep.subr.bf16.mxu0 0
  %2242 = vmatpush2.bf16.msra.mxu0 0
  %2243 = vmatprep.subr.bf16.mxu0 0
  %2244 = vmatpush2.bf16.msra.mxu0 0
  %2245 = vmatprep.mubr.bf16.mxu0 0
  %2246 = vmatmul.mubr.bf16.gmra.mxu0 %v2212
  %v2247 = vpop.f32.mrf.mxu0
  %v2248 = vadd.f32 %v973, %v2247
  %v2249 = vpop.f32.mrf.mxu0
  %v2250 = vpop.f32.mrf.mxu0
  %v2251 = vadd.f32 %v973, %v2250
  %v2252 = vpop.f32.mrf.mxu0
  %2253 = vdwg.mxu0
  %v2254 = vadd.f32 %v2248, %v2202
  %v2255 = vadd.f32 %v2251, %v2205
  %v2256 = vxor.u32 %v2254, 2147483648
  %v2257 = vxor.u32 %v2255, 2147483648
  %v2258 = vmul.f32 %v2256, 1.442695
  %v2259 = vpow.pop %v2258
  %v2260 = vmul.f32 %v2257, 1.442695
  %v2261 = vpow.pop %v2260
  %v2262 = vadd.f32 %v2259, 1.0
  %v2263 = vadd.f32 %v2261, 1.0
  %v2264 = vrcp.pop %v2262
  %v2265 = vmul.f32 1.0, %v2264
  %v2266 = vrcp.pop %v2263
  %v2267 = vmul.f32 1.0, %v2266
  %v2268 = vadd.f32 %v2202, %v995
  %v2269 = vadd.f32 %v2205, %v995
  %2272 = vrot.lane.b32.xlu0 %v2268, 64
  %v2273 = vpop.permute.xlu0 %2272
  %2274 = vrot.lane.b32.xlu0 %v2269, 64
  %v2275 = vpop.permute.xlu0 %2274
  %v2278 = vmul.f32 %v2265, %v2273
  %v2279 = vmul.f32 %v2267, %v2275
  %2282 = vrot.lane.b32.xlu0 %v2278, 64
  %v2283 = vpop.permute.xlu0 %2282
  %2284 = vrot.lane.b32.xlu0 %v2279, 64
  %v2285 = vpop.permute.xlu0 %2284
  %v2288 = vadd.f32 %v2248, %v2283
  %v2289 = vadd.f32 %v2251, %v2285
  %v2290 = vtanh.pop %v2288
  %v2291 = vtanh.pop %v2289
  %v2292 = vsub.f32 1.0, %v2265
  %v2293 = vsub.f32 1.0, %v2267
  %2296 = vrot.lane.b32.xlu0 %v2290, 96
  %v2297 = vpop.permute.xlu0 %2296
  %2298 = vrot.lane.b32.xlu0 %v2291, 96
  %v2299 = vpop.permute.xlu0 %2298
  %v2302 = vmul.f32 %v2292, %v2297
  %v2303 = vmul.f32 %v2293, %v2299
  %v2304 = vmul.f32 %v2265, %v2106
  %v2305 = vmul.f32 %v2267, %v2107
  %v2306 = vadd.f32 %v2302, %v2304
  %v2307 = vadd.f32 %v2303, %v2305
  %v2308 = vpack.c.bf16 %v2307, %v2306
  %2310 = vrot.lane.b32.xlu0 %v2308, 96
  %v2311 = vpop.permute.xlu0 %2310
  %v2313 = vsel %vm137, %v2311, 0
  %2315 = vmatprep.subr.bf16.mxu0 0
  %2316 = vmatpush1.bf16.msra.mxu0 0
  %2317 = vmatprep.subr.bf16.mxu0 0
  %2318 = vmatpush1.bf16.msra.mxu0 0
  %2319 = vmatprep.subr.bf16.mxu0 0
  %2320 = vmatpush1.bf16.msra.mxu0 0
  %2321 = vmatprep.subr.bf16.mxu0 0
  %2322 = vmatpush1.bf16.msra.mxu0 0
  %2323 = vmatprep.subr.bf16.mxu0 0
  %2324 = vmatpush1.bf16.msra.mxu0 0
  %2325 = vmatprep.subr.bf16.mxu0 0
  %2326 = vmatpush1.bf16.msra.mxu0 0
  %2327 = vmatprep.subr.bf16.mxu0 0
  %2328 = vmatpush1.bf16.msra.mxu0 %v1064
  %2329 = vmatprep.subr.bf16.mxu0 0
  %2330 = vmatpush1.bf16.msra.mxu0 %v1063
  %2331 = vmatprep.subr.bf16.mxu0 0
  %2332 = vmatpush2.bf16.msra.mxu0 0
  %2333 = vmatprep.subr.bf16.mxu0 0
  %2334 = vmatpush2.bf16.msra.mxu0 0
  %2335 = vmatprep.subr.bf16.mxu0 0
  %2336 = vmatpush2.bf16.msra.mxu0 0
  %2337 = vmatprep.subr.bf16.mxu0 0
  %2338 = vmatpush2.bf16.msra.mxu0 0
  %2339 = vmatprep.subr.bf16.mxu0 0
  %2340 = vmatpush2.bf16.msra.mxu0 0
  %2341 = vmatprep.subr.bf16.mxu0 0
  %2342 = vmatpush2.bf16.msra.mxu0 0
  %2343 = vmatprep.subr.bf16.mxu0 0
  %2344 = vmatpush2.bf16.msra.mxu0 0
  %2345 = vmatprep.subr.bf16.mxu0 0
  %2346 = vmatpush2.bf16.msra.mxu0 0
  %2347 = vmatprep.mubr.bf16.mxu0 0
  %2348 = vmatmul.mubr.bf16.gmra.mxu0 %v2313
  %v2349 = vpop.f32.mrf.mxu0
  %v2350 = vadd.f32 %v1050, %v2349
  %v2351 = vpop.f32.mrf.mxu0
  %v2352 = vpop.f32.mrf.mxu0
  %v2353 = vadd.f32 %v1050, %v2352
  %v2354 = vpop.f32.mrf.mxu0
  %2355 = vdwg.mxu0
  %2358 = vrot.lane.b32.xlu0 %v2350, 18
  %v2359 = vpop.permute.xlu0 %2358
  %2360 = vrot.lane.b32.xlu0 %v2353, 18
  %v2361 = vpop.permute.xlu0 %2360
  %vm2364 = vcmask 171152
  %2365 = vst.msk [vmem:[%s14] sm:$0xff] %vm2364, %v2359
  %2366 = vst.msk [vmem:[%s14 + $0x8] sm:$0xff] %vm2364, %v2361
  %2367 = vmatprep.subr.bf16.mxu0 0
  %2368 = vmatpush1.bf16.msra.mxu0 0
  %2369 = vmatprep.subr.bf16.mxu0 0
  %2370 = vmatpush1.bf16.msra.mxu0 0
  %2371 = vmatprep.subr.bf16.mxu0 0
  %2372 = vmatpush1.bf16.msra.mxu0 0
  %2373 = vmatprep.subr.bf16.mxu0 0
  %2374 = vmatpush1.bf16.msra.mxu0 0
  %2375 = vmatprep.subr.bf16.mxu0 0
  %2376 = vmatpush1.bf16.msra.mxu0 0
  %2377 = vmatprep.subr.bf16.mxu0 0
  %2378 = vmatpush1.bf16.msra.mxu0 0
  %2379 = vmatprep.subr.bf16.mxu0 0
  %2380 = vmatpush1.bf16.msra.mxu0 %v922
  %2381 = vmatprep.subr.bf16.mxu0 0
  %2382 = vmatpush1.bf16.msra.mxu0 %v921
  %2383 = vmatprep.subr.bf16.mxu0 0
  %2384 = vmatpush2.bf16.msra.mxu0 0
  %2385 = vmatprep.subr.bf16.mxu0 0
  %2386 = vmatpush2.bf16.msra.mxu0 0
  %2387 = vmatprep.subr.bf16.mxu0 0
  %2388 = vmatpush2.bf16.msra.mxu0 0
  %2389 = vmatprep.subr.bf16.mxu0 0
  %2390 = vmatpush2.bf16.msra.mxu0 0
  %2391 = vmatprep.subr.bf16.mxu0 0
  %2392 = vmatpush2.bf16.msra.mxu0 0
  %2393 = vmatprep.subr.bf16.mxu0 0
  %2394 = vmatpush2.bf16.msra.mxu0 0
  %2395 = vmatprep.subr.bf16.mxu0 0
  %2396 = vmatpush2.bf16.msra.mxu0 0
  %2397 = vmatprep.subr.bf16.mxu0 0
  %2398 = vmatpush2.bf16.msra.mxu0 0
  %2399 = vmatprep.mubr.bf16.mxu0 0
  %2400 = vmatmul.mubr.bf16.gmra.mxu0 %v2313
  %v2401 = vpop.f32.mrf.mxu0
  %v2402 = vadd.f32 0.0, %v2401
  %v2403 = vpop.f32.mrf.mxu0
  %v2404 = vpop.f32.mrf.mxu0
  %v2405 = vadd.f32 0.0, %v2404
  %v2406 = vpop.f32.mrf.mxu0
  %2407 = vdwg.mxu0
  %v2408 = vadd.f32 %v2402, %v1158
  %v2409 = vadd.f32 %v2405, %v1158
  %v2410 = vmax.f32 %v2408, 0.0
  %v2411 = vmax.f32 %v2409, 0.0
  %v2412 = vpack.c.bf16 %v2411, %v2410
  %2413 = vmatprep.subr.bf16.mxu0 0
  %2414 = vmatpush1.bf16.msra.mxu0 %v1204
  %2415 = vmatprep.subr.bf16.mxu0 0
  %2416 = vmatpush1.bf16.msra.mxu0 %v1203
  %2417 = vmatprep.subr.bf16.mxu0 0
  %2418 = vmatpush1.bf16.msra.mxu0 %v1202
  %2419 = vmatprep.subr.bf16.mxu0 0
  %2420 = vmatpush1.bf16.msra.mxu0 %v1201
  %2421 = vmatprep.subr.bf16.mxu0 0
  %2422 = vmatpush1.bf16.msra.mxu0 %v1200
  %2423 = vmatprep.subr.bf16.mxu0 0
  %2424 = vmatpush1.bf16.msra.mxu0 %v1199
  %2425 = vmatprep.subr.bf16.mxu0 0
  %2426 = vmatpush1.bf16.msra.mxu0 %v1198
  %2427 = vmatprep.subr.bf16.mxu0 0
  %2428 = vmatpush1.bf16.msra.mxu0 %v1197
  %2429 = vmatprep.subr.bf16.mxu0 0
  %2430 = vmatpush2.bf16.msra.mxu0 0
  %2431 = vmatprep.subr.bf16.mxu0 0
  %2432 = vmatpush2.bf16.msra.mxu0 0
  %2433 = vmatprep.subr.bf16.mxu0 0
  %2434 = vmatpush2.bf16.msra.mxu0 0
  %2435 = vmatprep.subr.bf16.mxu0 0
  %2436 = vmatpush2.bf16.msra.mxu0 0
  %2437 = vmatprep.subr.bf16.mxu0 0
  %2438 = vmatpush2.bf16.msra.mxu0 0
  %2439 = vmatprep.subr.bf16.mxu0 0
  %2440 = vmatpush2.bf16.msra.mxu0 0
  %2441 = vmatprep.subr.bf16.mxu0 0
  %2442 = vmatpush2.bf16.msra.mxu0 0
  %2443 = vmatprep.subr.bf16.mxu0 0
  %2444 = vmatpush2.bf16.msra.mxu0 0
  %2445 = vmatprep.mubr.bf16.mxu0 0
  %2446 = vmatmul.mubr.bf16.gmra.mxu0 %v2412
  %v2447 = vpop.f32.mrf.mxu0
  %v2448 = vadd.f32 %v973, %v2447
  %v2449 = vpop.f32.mrf.mxu0
  %v2450 = vpop.f32.mrf.mxu0
  %v2451 = vadd.f32 %v973, %v2450
  %v2452 = vpop.f32.mrf.mxu0
  %2453 = vdwg.mxu0
  %v2454 = vadd.f32 %v2448, %v2402
  %v2455 = vadd.f32 %v2451, %v2405
  %v2456 = vxor.u32 %v2454, 2147483648
  %v2457 = vxor.u32 %v2455, 2147483648
  %v2458 = vmul.f32 %v2456, 1.442695
  %v2459 = vpow.pop %v2458
  %v2460 = vmul.f32 %v2457, 1.442695
  %v2461 = vpow.pop %v2460
  %v2462 = vadd.f32 %v2459, 1.0
  %v2463 = vadd.f32 %v2461, 1.0
  %v2464 = vrcp.pop %v2462
  %v2465 = vmul.f32 1.0, %v2464
  %v2466 = vrcp.pop %v2463
  %v2467 = vmul.f32 1.0, %v2466
  %v2468 = vadd.f32 %v2402, %v995
  %v2469 = vadd.f32 %v2405, %v995
  %2472 = vrot.lane.b32.xlu0 %v2468, 64
  %v2473 = vpop.permute.xlu0 %2472
  %2474 = vrot.lane.b32.xlu0 %v2469, 64
  %v2475 = vpop.permute.xlu0 %2474
  %v2478 = vmul.f32 %v2465, %v2473
  %v2479 = vmul.f32 %v2467, %v2475
  %2482 = vrot.lane.b32.xlu0 %v2478, 64
  %v2483 = vpop.permute.xlu0 %2482
  %2484 = vrot.lane.b32.xlu0 %v2479, 64
  %v2485 = vpop.permute.xlu0 %2484
  %v2488 = vadd.f32 %v2448, %v2483
  %v2489 = vadd.f32 %v2451, %v2485
  %v2490 = vtanh.pop %v2488
  %v2491 = vtanh.pop %v2489
  %v2492 = vsub.f32 1.0, %v2465
  %v2493 = vsub.f32 1.0, %v2467
  %2496 = vrot.lane.b32.xlu0 %v2490, 96
  %v2497 = vpop.permute.xlu0 %2496
  %2498 = vrot.lane.b32.xlu0 %v2491, 96
  %v2499 = vpop.permute.xlu0 %2498
  %v2502 = vmul.f32 %v2492, %v2497
  %v2503 = vmul.f32 %v2493, %v2499
  %v2504 = vmul.f32 %v2465, %v2306
  %v2505 = vmul.f32 %v2467, %v2307
  %v2506 = vadd.f32 %v2502, %v2504
  %v2507 = vadd.f32 %v2503, %v2505
  %v2508 = vpack.c.bf16 %v2507, %v2506
  %2510 = vrot.lane.b32.xlu0 %v2508, 96
  %v2511 = vpop.permute.xlu0 %2510
  %v2513 = vsel %vm137, %v2511, 0
  %2515 = vmatprep.subr.bf16.mxu0 0
  %2516 = vmatpush1.bf16.msra.mxu0 0
  %2517 = vmatprep.subr.bf16.mxu0 0
  %2518 = vmatpush1.bf16.msra.mxu0 0
  %2519 = vmatprep.subr.bf16.mxu0 0
  %2520 = vmatpush1.bf16.msra.mxu0 0
  %2521 = vmatprep.subr.bf16.mxu0 0
  %2522 = vmatpush1.bf16.msra.mxu0 0
  %2523 = vmatprep.subr.bf16.mxu0 0
  %2524 = vmatpush1.bf16.msra.mxu0 0
  %2525 = vmatprep.subr.bf16.mxu0 0
  %2526 = vmatpush1.bf16.msra.mxu0 0
  %2527 = vmatprep.subr.bf16.mxu0 0
  %2528 = vmatpush1.bf16.msra.mxu0 %v1064
  %2529 = vmatprep.subr.bf16.mxu0 0
  %2530 = vmatpush1.bf16.msra.mxu0 %v1063
  %2531 = vmatprep.subr.bf16.mxu0 0
  %2532 = vmatpush2.bf16.msra.mxu0 0
  %2533 = vmatprep.subr.bf16.mxu0 0
  %2534 = vmatpush2.bf16.msra.mxu0 0
  %2535 = vmatprep.subr.bf16.mxu0 0
  %2536 = vmatpush2.bf16.msra.mxu0 0
  %2537 = vmatprep.subr.bf16.mxu0 0
  %2538 = vmatpush2.bf16.msra.mxu0 0
  %2539 = vmatprep.subr.bf16.mxu0 0
  %2540 = vmatpush2.bf16.msra.mxu0 0
  %2541 = vmatprep.subr.bf16.mxu0 0
  %2542 = vmatpush2.bf16.msra.mxu0 0
  %2543 = vmatprep.subr.bf16.mxu0 0
  %2544 = vmatpush2.bf16.msra.mxu0 0
  %2545 = vmatprep.subr.bf16.mxu0 0
  %2546 = vmatpush2.bf16.msra.mxu0 0
  %2547 = vmatprep.mubr.bf16.mxu0 0
  %2548 = vmatmul.mubr.bf16.gmra.mxu0 %v2513
  %v2549 = vpop.f32.mrf.mxu0
  %v2550 = vadd.f32 %v1050, %v2549
  %v2551 = vpop.f32.mrf.mxu0
  %v2552 = vpop.f32.mrf.mxu0
  %v2553 = vadd.f32 %v1050, %v2552
  %v2554 = vpop.f32.mrf.mxu0
  %2555 = vdwg.mxu0
  %2558 = vrot.lane.b32.xlu0 %v2550, 21
  %v2559 = vpop.permute.xlu0 %2558
  %2560 = vrot.lane.b32.xlu0 %v2553, 21
  %v2561 = vpop.permute.xlu0 %2560
  %vm2564 = vcmask 195752
  %2565 = vst.msk [vmem:[%s14] sm:$0xff] %vm2564, %v2559
  %2566 = vst.msk [vmem:[%s14 + $0x8] sm:$0xff] %vm2564, %v2561
  // Predicated region
  $region58: #{ego_rnn_ed_forward.1} parent=0 // pred_check
    _
  $region59: #{ego_rnn_ed_forward.1} parent=0 // pred_check_branch
    %2568 = sbr.rel (0) target = $region61
  $region60: #{ego_rnn_ed_forward.1} parent=0 // pred_region
    _
  $region61: #{ego_rnn_ed_forward.1} parent=0 // pred_fallthru
    _
  // Predicated region
  $region62: #{ego_rnn_ed_forward.1} parent=0 // pred_check
    _
  $region63: #{ego_rnn_ed_forward.1} parent=0 // pred_check_branch
    %2570 = sbr.rel (0) target = $region65
  $region64: #{ego_rnn_ed_forward.1} parent=0 // pred_region
    _
  $region65: #{ego_rnn_ed_forward.1} parent=0 // pred_fallthru
    _

</llo_original>
